<compile_context>
chip_gen: v5e
topology: v5e:2x2
jax: 0.10.0
libtpu: 0.0.40
codegen_flags: <defaults>
</compile_context>

<pallas_src>
import functools
import math

import jax
import jax.numpy as jnp
from jax.experimental import pallas as pl
from jax.experimental.pallas import tpu as pltpu


def _center_prior_kernel(gp_ref, pp_ref, mask_ref, out_ref, *, soft_prior):
    # gp_ref  : (8, G)   per-gt params, resident across the grid.
    #           rows: 0 gt_cx, 1 gt_cy, 2 mean_x, 3 mean_y,
    #                 4 -1/(2*sigma_x^2), 5 -1/(2*sigma_y^2), 6..7 unused (0).
    # pp_ref  : (TP, 3)  per-point params, cols: x, y, 1/stride.
    # mask_ref: (TP, G)  int8 inside_gt_bbox_mask (natural layout, no transform).
    # out_ref : (TP, G)  f32 center-prior weights (module's native layout).
    px = pp_ref[:, 0:1]            # (TP, 1)
    py = pp_ref[:, 1:2]
    inv_st = pp_ref[:, 2:3]

    gcx = gp_ref[0:1, :]           # (1, G)
    gcy = gp_ref[1:2, :]
    mx = gp_ref[2:3, :]
    my = gp_ref[3:4, :]
    nisx = gp_ref[4:5, :]          # -1/(2*sigma_x^2)
    nisy = gp_ref[5:6, :]          # -1/(2*sigma_y^2)

    # ((point - gt_center) / stride - class_mean); divide replaced by multiply.
    dx = (px - gcx) * inv_st - mx                      # (TP, G)
    dy = (py - gcy) * inv_st - my

    # exponent of exp(-dx^2/(2sx^2)) * exp(-dy^2/(2sy^2)) fused into one term
    expo = dx * dx * nisx + dy * dy * nisy             # (TP, G)

    if soft_prior:
        prior = jnp.exp(expo)
    else:
        # exp is monotonic: exp(expo) > 0.3  <=>  expo > log(0.3); skip the exp.
        prior = jnp.where(expo > math.log(0.3), 1.0, 0.0)

    # zero-out points not inside the gt bbox (compare+select, no convert+mul)
    out_ref[...] = jnp.where(mask_ref[...] != 0, prior, 0.0)


def _round_up(x, m):
    return ((x + m - 1) // m) * m


def center_prior_forward(anchor_points_list, gt_bboxes, labels,
                         inside_gt_bbox_mask, mean, sigma,
                         strides=(8, 16, 32, 64, 128), soft_prior=True,
                         tile_p=4096):
    """Pallas implementation of CenterPrior.forward.

    anchor_points_list: list of (N_l, 2) float32 arrays
    gt_bboxes:          (G, 4) float32
    labels:             (G,)   int32
    inside_gt_bbox_mask:(P, G) bool (P = sum of N_l)
    mean, sigma:        (num_classes, 2) float32
    Returns (center_prior_weights (P, G) float32, inside_gt_bbox_mask)
    """
    num_points = sum(int(p.shape[0]) for p in anchor_points_list)
    num_gts = int(gt_bboxes.shape[0])
    P, G = num_points, num_gts

    if num_gts == 0:
        return jnp.zeros((P, 0), jnp.float32), inside_gt_bbox_mask

    # ---- flatten levels into one point axis with a per-point 1/stride -------
    pts = jnp.concatenate(anchor_points_list, axis=0).astype(jnp.float32)  # (P,2)
    inv_stride = jnp.concatenate([
        jnp.full((int(p.shape[0]), 1), 1.0 / float(s), jnp.float32)
        for p, s in zip(anchor_points_list, strides)], axis=0)             # (P,1)
    pparams = jnp.concatenate([pts, inv_stride], axis=1)                   # (P,3)

    # ---- tiny per-gt parameter block (8, G) ---------------------------------
    gt_cx = (gt_bboxes[:, 0] + gt_bboxes[:, 2]) * 0.5
    gt_cy = (gt_bboxes[:, 1] + gt_bboxes[:, 3]) * 0.5
    inst_mean = mean[labels].astype(jnp.float32)                           # (G,2)
    inst_sigma = sigma[labels].astype(jnp.float32)                         # (G,2)
    nisx = -1.0 / (2.0 * inst_sigma[:, 0] * inst_sigma[:, 0])
    nisy = -1.0 / (2.0 * inst_sigma[:, 1] * inst_sigma[:, 1])
    gparams = jnp.zeros((8, G), jnp.float32)
    gparams = gparams.at[0].set(gt_cx).at[1].set(gt_cy)
    gparams = gparams.at[2].set(inst_mean[:, 0]).at[3].set(inst_mean[:, 1])
    gparams = gparams.at[4].set(nisx).at[5].set(nisy)

    # external mask kept in its natural (P, G) layout; int8 for a safe 1B load
    mask_i8 = inside_gt_bbox_mask.astype(jnp.int8)                         # (P,G)

    # ---- tile selection: big tiles, >=2 grid steps when enough work,
    #      clamped so double-buffered blocks stay well under v7x scoped VMEM --
    tile_p = _round_up(max(int(tile_p), 32), 32)
    tile_p = min(tile_p, _round_up(P, 32))
    if P >= 2048:   # keep at least 2 steps so v7x's 2 TCs both get work
        tile_p = min(tile_p, _round_up(pl.cdiv(P, 2), 32))
    while tile_p > 256 and 2 * tile_p * (5 * G + 16) > 12 * 1024 * 1024:
        tile_p = max(256, _round_up(tile_p // 2, 32))

    grid = (pl.cdiv(P, tile_p),)   # ragged tail handled by Pallas block masking
    kernel = functools.partial(_center_prior_kernel, soft_prior=soft_prior)

    weights = pl.pallas_call(
        kernel,
        out_shape=jax.ShapeDtypeStruct((P, G), jnp.float32),
        grid_spec=pltpu.PrefetchScalarGridSpec(
            num_scalar_prefetch=0,
            grid=grid,
            in_specs=[
                pl.BlockSpec((8, G), lambda i: (0, 0)),         # per-gt params (resident)
                pl.BlockSpec((tile_p, 3), lambda i: (i, 0)),    # per-point params
                pl.BlockSpec((tile_p, G), lambda i: (i, 0)),    # mask, natural layout
            ],
            out_specs=pl.BlockSpec((tile_p, G), lambda i: (i, 0)),
        ),
        compiler_params=pltpu.CompilerParams(
            dimension_semantics=("parallel",)),
    )(gparams, pparams, mask_i8)

    return weights, inside_gt_bbox_mask


def _reference_jnp(anchor_points_list, gt_bboxes, labels, inside_gt_bbox_mask,
                   mean, sigma, strides, soft_prior=True):
    """Pure-jnp reference mirroring the PyTorch code (for sanity check)."""
    outs = []
    for slvl_points, stride in zip(anchor_points_list, strides):
        gt_cx = (gt_bboxes[:, 0] + gt_bboxes[:, 2]) / 2
        gt_cy = (gt_bboxes[:, 1] + gt_bboxes[:, 3]) / 2
        gt_center = jnp.stack((gt_cx, gt_cy), axis=1)[None]                 # (1,G,2)
        inst_c = mean[labels][None]
        inst_s = sigma[labels][None]
        p = slvl_points[:, None, :]                                         # (N,1,2)
        dist = ((p - gt_center) / float(stride) - inst_c) ** 2
        outs.append(jnp.prod(jnp.exp(-dist / (2 * inst_s ** 2)), axis=-1))
    w = jnp.concatenate(outs, axis=0)
    if not soft_prior:
        w = jnp.where(w > 0.3, 1.0, 0.0)
    w = jnp.where(inside_gt_bbox_mask, w, 0.0)
    return w


if __name__ == "__main__":
    key = jax.random.PRNGKey(0)
    num_classes = 80
    strides = (8, 16, 32, 64, 128)

    # CenterPrior parameters (deterministic, matching __init__)
    mean = jnp.zeros((num_classes, 2), jnp.float32)
    sigma = jnp.ones((num_classes, 2), jnp.float32) + 0.11

    # Per-level anchor points: 2048 + 512 + 128 + 32 + 8 = 2728 points
    # -> 2-step parallel grid with a ragged last block (exercises edge masking).
    level_counts = (2048, 512, 128, 32, 8)
    keys = jax.random.split(key, 8)
    anchor_points_list = []
    for li, n in enumerate(level_counts):
        pts = jax.random.uniform(keys[li], (n, 2), jnp.float32,
                                 minval=0.0, maxval=256.0)
        anchor_points_list.append(pts)

    num_gts = 6
    xy1 = jax.random.uniform(keys[5], (num_gts, 2), jnp.float32, 0.0, 128.0)
    wh = jax.random.uniform(keys[6], (num_gts, 2), jnp.float32, 32.0, 128.0)
    gt_bboxes = jnp.concatenate([xy1, xy1 + wh], axis=1)                    # (G,4)
    labels = jax.random.randint(keys[7], (num_gts,), 0, num_classes, jnp.int32)

    # inside_gt_bbox_mask computed geometrically (points strictly inside box)
    all_pts = jnp.concatenate(anchor_points_list, axis=0)                   # (P,2)
    inside_gt_bbox_mask = (
        (all_pts[:, 0:1] > gt_bboxes[:, 0][None, :]) &
        (all_pts[:, 0:1] < gt_bboxes[:, 2][None, :]) &
        (all_pts[:, 1:2] > gt_bboxes[:, 1][None, :]) &
        (all_pts[:, 1:2] < gt_bboxes[:, 3][None, :]))                       # (P,G) bool

    P = sum(level_counts)
    for sp in (True, False):
        weights, mask_out = center_prior_forward(
            anchor_points_list, gt_bboxes, labels, inside_gt_bbox_mask,
            mean, sigma, strides=strides, soft_prior=sp, tile_p=4096)
        weights = jax.block_until_ready(weights)

        ref = _reference_jnp(anchor_points_list, gt_bboxes, labels,
                             inside_gt_bbox_mask, mean, sigma, strides,
                             soft_prior=sp)
        assert weights.shape == (P, num_gts)
        assert mask_out.shape == inside_gt_bbox_mask.shape
        assert jnp.allclose(weights, ref, atol=1e-5, rtol=1e-5), \
            float(jnp.max(jnp.abs(weights - ref)))

    print("KERNEL_OK")
</pallas_src>

<mosaic_0001>
module attributes {stable_mosaic.version = 11 : i64} {
  func.func @_center_prior_kernel(%arg0: i32, %arg1: memref<8x6xf32, #tpu.memory_space<vmem>>, %arg2: memref<1376x3xf32, #tpu.memory_space<vmem>>, %arg3: memref<1376x6xi8, #tpu.memory_space<vmem>>, %arg4: memref<1376x6xf32, #tpu.memory_space<vmem>>) attributes {dimension_semantics = [#tpu.dimension_semantics<parallel>], iteration_bounds = array<i64: 2>, scalar_prefetch = 0 : i64, scratch_operands = 0 : i64, tpu.core_type = #tpu.core_type<tc>, window_params = [{pipeline_mode = #tpu.pipeline_mode<synchronous>, transform_indices = @transform_0, window_bounds = array<i64: 8, 6>}, {transform_indices = @transform_1, window_bounds = array<i64: 1376, 3>}, {transform_indices = @transform_2, window_bounds = array<i64: 1376, 6>}, {transform_indices = @transform_3, window_bounds = array<i64: 1376, 6>}]} {
    %c0 = arith.constant 0 : index
    %c0_0 = arith.constant 0 : index
    %0 = vector.load %arg2[%c0, %c0_0] : memref<1376x3xf32, #tpu.memory_space<vmem>>, vector<1376x1xf32>
    %c0_1 = arith.constant 0 : index
    %c1 = arith.constant 1 : index
    %1 = vector.load %arg2[%c0_1, %c1] : memref<1376x3xf32, #tpu.memory_space<vmem>>, vector<1376x1xf32>
    %c0_2 = arith.constant 0 : index
    %c2 = arith.constant 2 : index
    %2 = vector.load %arg2[%c0_2, %c2] : memref<1376x3xf32, #tpu.memory_space<vmem>>, vector<1376x1xf32>
    %c0_3 = arith.constant 0 : index
    %c0_4 = arith.constant 0 : index
    %3 = vector.load %arg1[%c0_3, %c0_4] : memref<8x6xf32, #tpu.memory_space<vmem>>, vector<1x6xf32>
    %c1_5 = arith.constant 1 : index
    %c0_6 = arith.constant 0 : index
    %4 = vector.load %arg1[%c1_5, %c0_6] : memref<8x6xf32, #tpu.memory_space<vmem>>, vector<1x6xf32>
    %c2_7 = arith.constant 2 : index
    %c0_8 = arith.constant 0 : index
    %5 = vector.load %arg1[%c2_7, %c0_8] : memref<8x6xf32, #tpu.memory_space<vmem>>, vector<1x6xf32>
    %c3 = arith.constant 3 : index
    %c0_9 = arith.constant 0 : index
    %6 = vector.load %arg1[%c3, %c0_9] : memref<8x6xf32, #tpu.memory_space<vmem>>, vector<1x6xf32>
    %c4 = arith.constant 4 : index
    %c0_10 = arith.constant 0 : index
    %7 = vector.load %arg1[%c4, %c0_10] : memref<8x6xf32, #tpu.memory_space<vmem>>, vector<1x6xf32>
    %c5 = arith.constant 5 : index
    %c0_11 = arith.constant 0 : index
    %8 = vector.load %arg1[%c5, %c0_11] : memref<8x6xf32, #tpu.memory_space<vmem>>, vector<1x6xf32>
    %9 = vector.broadcast %0 : vector<1376x1xf32> to vector<1376x6xf32>
    %10 = vector.broadcast %3 : vector<1x6xf32> to vector<1376x6xf32>
    %11 = arith.subf %9, %10 : vector<1376x6xf32>
    %12 = vector.broadcast %2 : vector<1376x1xf32> to vector<1376x6xf32>
    %13 = arith.mulf %11, %12 : vector<1376x6xf32>
    %14 = vector.broadcast %5 : vector<1x6xf32> to vector<1376x6xf32>
    %15 = arith.subf %13, %14 : vector<1376x6xf32>
    %16 = vector.broadcast %1 : vector<1376x1xf32> to vector<1376x6xf32>
    %17 = vector.broadcast %4 : vector<1x6xf32> to vector<1376x6xf32>
    %18 = arith.subf %16, %17 : vector<1376x6xf32>
    %19 = vector.broadcast %2 : vector<1376x1xf32> to vector<1376x6xf32>
    %20 = arith.mulf %18, %19 : vector<1376x6xf32>
    %21 = vector.broadcast %6 : vector<1x6xf32> to vector<1376x6xf32>
    %22 = arith.subf %20, %21 : vector<1376x6xf32>
    %23 = arith.mulf %15, %15 : vector<1376x6xf32>
    %24 = vector.broadcast %7 : vector<1x6xf32> to vector<1376x6xf32>
    %25 = arith.mulf %23, %24 : vector<1376x6xf32>
    %26 = arith.mulf %22, %22 : vector<1376x6xf32>
    %27 = vector.broadcast %8 : vector<1x6xf32> to vector<1376x6xf32>
    %28 = arith.mulf %26, %27 : vector<1376x6xf32>
    %29 = arith.addf %25, %28 : vector<1376x6xf32>
    %30 = math.exp %29 : vector<1376x6xf32>
    %c0_12 = arith.constant 0 : index
    %c0_13 = arith.constant 0 : index
    %31 = vector.load %arg3[%c0_12, %c0_13] : memref<1376x6xi8, #tpu.memory_space<vmem>>, vector<1376x6xi8>
    %c0_i8 = arith.constant 0 : i8
    %32 = vector.broadcast %c0_i8 : i8 to vector<1376x6xi8>
    %33 = arith.cmpi ne, %31, %32 : vector<1376x6xi8>
    %cst = arith.constant 0.000000e+00 : f32
    %34 = vector.broadcast %cst : f32 to vector<1376x6xf32>
    %35 = arith.select %33, %30, %34 : vector<1376x6xi1>, vector<1376x6xf32>
    %c0_14 = arith.constant 0 : index
    %c0_15 = arith.constant 0 : index
    %36 = vector.load %arg4[%c0_14, %c0_15] : memref<1376x6xf32, #tpu.memory_space<vmem>>, vector<1376x6xf32>
    tpu.vector_store %arg4[%c0_14, %c0_15], %35 {strides = array<i32>} : memref<1376x6xf32, #tpu.memory_space<vmem>>, vector<1376x6xf32>,
    return
  }
  func.func @transform_0(%arg0: i32) -> (i32, i32) {
    %c0_i32 = arith.constant 0 : i32
    %c0_i32_0 = arith.constant 0 : i32
    %c0_i32_1 = arith.constant 0 : i32
    return %c0_i32, %c0_i32_0 : i32, i32
  }
  func.func @transform_1(%arg0: i32) -> (i32, i32) {
    %c0_i32 = arith.constant 0 : i32
    %c0_i32_0 = arith.constant 0 : i32
    return %arg0, %c0_i32 : i32, i32
  }
  func.func @transform_2(%arg0: i32) -> (i32, i32) {
    %c0_i32 = arith.constant 0 : i32
    %c0_i32_0 = arith.constant 0 : i32
    return %arg0, %c0_i32 : i32, i32
  }
  func.func @transform_3(%arg0: i32) -> (i32, i32) {
    %c0_i32 = arith.constant 0 : i32
    %c0_i32_0 = arith.constant 0 : i32
    return %arg0, %c0_i32 : i32, i32
  }
}

</mosaic_0001>

<llo_original>
// kernel: tpu_custom_call.1
$region0: #{tpu_custom_call.1}
  #allocation0 [shape = 'u32[]', space=smem, size = 0x4, offset = 0x4, fixed_abs, tag = 'smem constant byte address 0x4 - core index']
  #allocation1 [shape = 'u32[72,128]{1,0:T(1,128)}', space=vmem, size = 0x9000, scoped, tag = 'internal scratch']
  %s0 = inlined_call_operand.vmem [shape: f32[8,6], index: 0, kind: input, shape index: {}]
  %s1 = inlined_call_operand.vmem [shape: f32[2728,3], index: 1, kind: input, shape index: {}]
  %s2 = inlined_call_operand.vmem [shape: s8[2728,6], index: 2, kind: input, shape index: {}]
  %s3 = inlined_call_operand.vmem [shape: f32[2728,6], index: 3, kind: output, shape index: {}]
  %s4 = sld [smem:[#allocation0]]
  $region93: #{tpu_custom_call.1} parent=0
    _
  %s6 = ssub.s32 1, %s4
  %s7 = scalar_select 0, %s6, %s4
  $region1: #{tpu_custom_call.1} parent=0
    #allocation2 [shape = 'u8[1409024]{0}', space=vmem, size = 0x158000, scoped, tag = 'output window, operand 0']
    loop: start=0, step=1, limit=4
    $region2: #{tpu_custom_call.1} parent=1 // loop_pre_header
      _
    $region3: #{tpu_custom_call.1} parent=1 // loop_header
      %s9 = sphi 0, %s13
      %p10 = scmp.ge.s32.totalorder %s9, 4
      %s17 = sphi 0, %s17
      %s19 = sphi 0, %s17
      %s20 = sphi 0, %s19
      %s34 = sphi 0, %s20
      %s40 = sphi 0, %s42
      %s43 = sphi 0, %s40
      %s44 = sphi 0, %s43
      %s60 = sphi 0, %s44
      %s66 = sphi 0, %s68
      %s69 = sphi 0, %s66
      %s70 = sphi 0, %s69
      %s86 = sphi 0, %s70
      %s92 = sphi 0, %s94
      %s95 = sphi 0, %s92
      %s96 = sphi 0, %s95
      %s112 = sphi 0, %s96
    $region4: #{tpu_custom_call.1} parent=1 // loop_header_branch
      %12 = sbr.rel (%p10) target = $region8
    $region5: #{tpu_custom_call.1} parent=1 // loop_body
      %s14 = ssub.s32 %s9, 1
      %s15 = ssub.s32 %s9, 2
      %s16 = sadd.s32 %s9, 1
      %s18 = sadd.s32 %s17, 1
      %p21 = scmp.eq.s32.totalorder %s9, 1
      %p22 = scmp.ne.s32.totalorder %s17, %s19
      %p23 = scmp.eq.s32.totalorder %s9, 0
      %p24 = por %p22, %p23
      %p25 = scmp.ne.s32.totalorder %s17, %s19
      %p26 = scmp.eq.s32.totalorder %s14, 1
      %p27 = por %p25, %p26
      %p28 = scmp.ne.s32.totalorder %s19, %s20
      %p29 = scmp.eq.s32.totalorder %s14, 0
      %p30 = por %p28, %p29
      %p31 = scmp.ne.s32.totalorder %s19, %s20
      %p32 = scmp.eq.s32.totalorder %s15, 1
      %p33 = por %p31, %p32
      %p35 = scmp.ne.s32.totalorder %s20, %s34
      %p36 = scmp.eq.s32.totalorder %s15, 0
      %p37 = por %p35, %p36
      %s38 = ssub.s32 %s9, %s16
      %p39 = scmp.eq.s32.totalorder %s38, 0
      %s41 = sadd.s32 %s40, 1
      %s42 = scalar_select %p39, %s40, %s41
      %p45 = pneg %p39
      %p46 = scmp.eq.s32.totalorder %s9, 1
      %p47 = por %p45, %p46
      %p48 = scmp.ne.s32.totalorder %s40, %s43
      %p49 = scmp.eq.s32.totalorder %s9, 0
      %p50 = por %p48, %p49
      %p51 = scmp.ne.s32.totalorder %s40, %s43
      %p52 = scmp.eq.s32.totalorder %s14, 1
      %p53 = por %p51, %p52
      %p54 = scmp.ne.s32.totalorder %s43, %s44
      %p55 = scmp.eq.s32.totalorder %s14, 0
      %p56 = por %p54, %p55
      %p57 = scmp.ne.s32.totalorder %s43, %s44
      %p58 = scmp.eq.s32.totalorder %s15, 1
      %p59 = por %p57, %p58
      %p61 = scmp.ne.s32.totalorder %s44, %s60
      %p62 = scmp.eq.s32.totalorder %s15, 0
      %p63 = por %p61, %p62
      %s64 = ssub.s32 %s9, %s16
      %p65 = scmp.eq.s32.totalorder %s64, 0
      %s67 = sadd.s32 %s66, 1
      %s68 = scalar_select %p65, %s66, %s67
      %p71 = pneg %p65
      %p72 = scmp.eq.s32.totalorder %s9, 1
      %p73 = por %p71, %p72
      %p74 = scmp.ne.s32.totalorder %s66, %s69
      %p75 = scmp.eq.s32.totalorder %s9, 0
      %p76 = por %p74, %p75
      %p77 = scmp.ne.s32.totalorder %s66, %s69
      %p78 = scmp.eq.s32.totalorder %s14, 1
      %p79 = por %p77, %p78
      %p80 = scmp.ne.s32.totalorder %s69, %s70
      %p81 = scmp.eq.s32.totalorder %s14, 0
      %p82 = por %p80, %p81
      %p83 = scmp.ne.s32.totalorder %s69, %s70
      %p84 = scmp.eq.s32.totalorder %s15, 1
      %p85 = por %p83, %p84
      %p87 = scmp.ne.s32.totalorder %s70, %s86
      %p88 = scmp.eq.s32.totalorder %s15, 0
      %p89 = por %p87, %p88
      %s90 = ssub.s32 %s9, %s16
      %p91 = scmp.eq.s32.totalorder %s90, 0
      %s93 = sadd.s32 %s92, 1
      %s94 = scalar_select %p91, %s92, %s93
      %p97 = pneg %p91
      %p98 = scmp.eq.s32.totalorder %s9, 1
      %p99 = por %p97, %p98
      %p100 = scmp.ne.s32.totalorder %s92, %s95
      %p101 = scmp.eq.s32.totalorder %s9, 0
      %p102 = por %p100, %p101
      %p103 = scmp.ne.s32.totalorder %s92, %s95
      %p104 = scmp.eq.s32.totalorder %s14, 1
      %p105 = por %p103, %p104
      %p106 = scmp.ne.s32.totalorder %s95, %s96
      %p107 = scmp.eq.s32.totalorder %s14, 0
      %p108 = por %p106, %p107
      %p109 = scmp.ne.s32.totalorder %s95, %s96
      %p110 = scmp.eq.s32.totalorder %s15, 1
      %p111 = por %p109, %p110
      %p113 = scmp.ne.s32.totalorder %s96, %s112
      %p114 = scmp.eq.s32.totalorder %s15, 0
      %p115 = por %p113, %p114
      %p116 = scmp.le.s32.totalorder 1, %s9
      %p117 = scmp.lt.s32.totalorder %s9, 3
      %p118 = pnand %p116, %p117
      %p119 = pneg %p118
      // Predicated region
      $region9: #{tpu_custom_call.1} parent=5 // pred_check
        _
      $region10: #{tpu_custom_call.1} parent=5 // pred_check_branch
        %121 = sbr.rel (%p118) target = $region12
      $region11: #{tpu_custom_call.1} parent=5 // pred_region
        %s122 = ssub.s32 %s9, 1
        // Predicated region
        $region13: #{tpu_custom_call.1} parent=11 // pred_check
          %p123 = pneg %p30
        $region14: #{tpu_custom_call.1} parent=11 // pred_check_branch
          %125 = sbr.rel (%p123) target = $region16
        $region15: #{tpu_custom_call.1} parent=11 // pred_region
          _
        $region16: #{tpu_custom_call.1} parent=11 // pred_fallthru
          _
      $region12: #{tpu_custom_call.1} parent=5 // pred_fallthru
        _
      %p126 = scmp.lt.s32.totalorder %s9, 2
      // Predicated region
      $region17: #{tpu_custom_call.1} parent=5 // pred_check
        %p127 = pneg %p126
      $region18: #{tpu_custom_call.1} parent=5 // pred_check_branch
        %129 = sbr.rel (%p127) target = $region20
      $region19: #{tpu_custom_call.1} parent=5 // pred_region
        // Predicated region
        $region21: #{tpu_custom_call.1} parent=19 // pred_check
          %p130 = pneg %p50
        $region22: #{tpu_custom_call.1} parent=19 // pred_check_branch
          %132 = sbr.rel (%p130) target = $region24
        $region23: #{tpu_custom_call.1} parent=19 // pred_region
          %s133 = smul.u32 172, %s9
          %s134 = ssub.s32 341, %s133
          %p135 = scmp.lt.s32.totalorder %s134, 172
          %s136 = scalar_select %p135, %s134, 172
          %s137 = smul.u32 8, %s136
          %p138 = scmp.lt.s32.totalorder %s133, 340
          %s139 = scalar_select %p138, %s133, 340
          %s140 = smul.addr %s139, 8
          %s141 = scalar_lea.vmem %s1, %s140
          %s142 = smul.u32 172, %s9
          %s143 = ssub.s32 341, %s142
          %p144 = scmp.lt.s32.totalorder %s143, 172
          %s145 = scalar_select %p144, %s143, 172
          %s146 = smul.u32 8, %s145
        $region24: #{tpu_custom_call.1} parent=19 // pred_fallthru
          _
        // Predicated region
        $region25: #{tpu_custom_call.1} parent=19 // pred_check
          %p147 = pneg %p76
        $region26: #{tpu_custom_call.1} parent=19 // pred_check_branch
          %149 = sbr.rel (%p147) target = $region28
        $region27: #{tpu_custom_call.1} parent=19 // pred_region
          %s150 = smul.u32 172, %s9
          %s151 = ssub.s32 341, %s150
          %p152 = scmp.lt.s32.totalorder %s151, 172
          %s153 = scalar_select %p152, %s151, 172
          %s154 = smul.u32 2, %s153
          %p155 = scmp.lt.s32.totalorder %s150, 340
          %s156 = scalar_select %p155, %s150, 340
          %s157 = smul.addr %s156, 2
          %s158 = scalar_lea.vmem %s2, %s157
          %s159 = smul.u32 172, %s9
          %s160 = ssub.s32 341, %s159
          %p161 = scmp.lt.s32.totalorder %s160, 172
          %s162 = scalar_select %p161, %s160, 172
          %s163 = smul.u32 2, %s162
        $region28: #{tpu_custom_call.1} parent=19 // pred_fallthru
          _
      $region20: #{tpu_custom_call.1} parent=5 // pred_fallthru
        _
      %p164 = scmp.le.s32.totalorder 1, %s9
      %p165 = scmp.lt.s32.totalorder %s9, 3
      %p166 = pnand %p164, %p165
      %p167 = pneg %p166
      // Predicated region
      $region29: #{tpu_custom_call.1} parent=5 // pred_check
        _
      $region30: #{tpu_custom_call.1} parent=5 // pred_check_branch
        %169 = sbr.rel (%p166) target = $region32
      $region31: #{tpu_custom_call.1} parent=5 // pred_region
        %s170 = ssub.s32 %s9, 1
        %p171 = pneg %p30
        %p172 = pneg %p27
        %s173 = smul.u32 172, %s14
        %s174 = ssub.s32 341, %s173
        %p175 = scmp.lt.s32.totalorder %s174, 172
        %s176 = scalar_select %p175, %s174, 172
        %s177 = smul.u32 8, %s176
        %p178 = scmp.lt.s32.totalorder %s173, 340
        %s179 = scalar_select %p178, %s173, 340
        %s180 = smul.addr %s179, 8
        %s181 = scalar_lea.vmem %s1, %s180
        %p182 = pneg %p56
        %p183 = pneg %p53
        %s184 = smul.u32 172, %s14
        %s185 = ssub.s32 341, %s184
        %p186 = scmp.lt.s32.totalorder %s185, 172
        %s187 = scalar_select %p186, %s185, 172
        %s188 = smul.u32 2, %s187
        %p189 = scmp.lt.s32.totalorder %s184, 340
        %s190 = scalar_select %p189, %s184, 340
        %s191 = smul.addr %s190, 2
        %s192 = scalar_lea.vmem %s2, %s191
        %p193 = pneg %p82
        %p194 = pneg %p79
        %p195 = pneg %p108
        %p196 = pneg %p105
        %s197 = sand.u32 %s95, 1
        %s198 = sand.u32 %s95, 1
        %s199 = smul.addr %s198, 1376
        %s200 = scalar_lea.vmem [#allocation2], %s199
        %s201 = smul.u32 172, %s14
        %s202 = ssub.s32 341, %s201
        %p203 = scmp.lt.s32.totalorder %s202, 172
        %s204 = scalar_select %p203, %s202, 172
        %s205 = smul.u32 8, %s204
        %p206 = scmp.lt.s32.totalorder %s201, 340
        %s207 = scalar_select %p206, %s201, 340
        %s208 = smul.addr %s207, 8
        %s209 = scalar_lea.vmem %s1, %s208
        %s210 = smul.u32 172, %s14
        %s211 = ssub.s32 341, %s210
        %p212 = scmp.lt.s32.totalorder %s211, 172
        %s213 = scalar_select %p212, %s211, 172
        %s214 = smul.u32 8, %s213
        %s215 = smul.u32 172, %s14
        %s216 = ssub.s32 341, %s215
        %p217 = scmp.lt.s32.totalorder %s216, 172
        %s218 = scalar_select %p217, %s216, 172
        %s219 = smul.u32 2, %s218
        %p220 = scmp.lt.s32.totalorder %s215, 340
        %s221 = scalar_select %p220, %s215, 340
        %s222 = smul.addr %s221, 2
        %s223 = scalar_lea.vmem %s2, %s222
        %s224 = smul.u32 172, %s14
        %s225 = ssub.s32 341, %s224
        %p226 = scmp.lt.s32.totalorder %s225, 172
        %s227 = scalar_select %p226, %s225, 172
        %s228 = smul.u32 2, %s227
        %s229 = smul.u32 172, %s14
        %s230 = ssub.s32 341, %s229
        %p231 = scmp.lt.s32.totalorder %s230, 172
        %s232 = scalar_select %p231, %s230, 172
        %s233 = smul.u32 8, %s232
        %v236 = vld [vmem:[%s209] sm:$0xff]
        %v237 = vld [vmem:[%s209 + $0x8] sm:$0xff]
        %v238 = vld [vmem:[%s209 + $0x10] sm:$0xff]
        %v239 = vld [vmem:[%s209 + $0x18] sm:$0xff]
        %v240 = vld [vmem:[%s209 + $0x20] sm:$0xff]
        %v241 = vld [vmem:[%s209 + $0x28] sm:$0xff]
        %v242 = vld [vmem:[%s209 + $0x30] sm:$0xff]
        %v243 = vld [vmem:[%s209 + $0x38] sm:$0xff]
        %v244 = vld [vmem:[%s209 + $0x40] sm:$0xff]
        %v245 = vld [vmem:[%s209 + $0x48] sm:$0xff]
        %v246 = vld [vmem:[%s209 + $0x50] sm:$0xff]
        %v247 = vld [vmem:[%s209 + $0x58] sm:$0xff]
        %v248 = vld [vmem:[%s209 + $0x60] sm:$0xff]
        %v249 = vld [vmem:[%s209 + $0x68] sm:$0xff]
        %v250 = vld [vmem:[%s209 + $0x70] sm:$0xff]
        %v251 = vld [vmem:[%s209 + $0x78] sm:$0xff]
        %v252 = vld [vmem:[%s209 + $0x80] sm:$0xff]
        %v253 = vld [vmem:[%s209 + $0x88] sm:$0xff]
        %v254 = vld [vmem:[%s209 + $0x90] sm:$0xff]
        %v255 = vld [vmem:[%s209 + $0x98] sm:$0xff]
        %v256 = vld [vmem:[%s209 + $0xa0] sm:$0xff]
        %v257 = vld [vmem:[%s209 + $0xa8] sm:$0xff]
        %v258 = vld [vmem:[%s209 + $0xb0] sm:$0xff]
        %v259 = vld [vmem:[%s209 + $0xb8] sm:$0xff]
        %v260 = vld [vmem:[%s209 + $0xc0] sm:$0xff]
        %v261 = vld [vmem:[%s209 + $0xc8] sm:$0xff]
        %v262 = vld [vmem:[%s209 + $0xd0] sm:$0xff]
        %v263 = vld [vmem:[%s209 + $0xd8] sm:$0xff]
        %v264 = vld [vmem:[%s209 + $0xe0] sm:$0xff]
        %v265 = vld [vmem:[%s209 + $0xe8] sm:$0xff]
        %v266 = vld [vmem:[%s209 + $0xf0] sm:$0xff]
        %v267 = vld [vmem:[%s209 + $0xf8] sm:$0xff]
        %v268 = vld [vmem:[%s209 + $0x100] sm:$0xff]
        %v269 = vld [vmem:[%s209 + $0x108] sm:$0xff]
        %v270 = vld [vmem:[%s209 + $0x110] sm:$0xff]
        %v271 = vld [vmem:[%s209 + $0x118] sm:$0xff]
        %v272 = vld [vmem:[%s209 + $0x120] sm:$0xff]
        %v273 = vld [vmem:[%s209 + $0x128] sm:$0xff]
        %v274 = vld [vmem:[%s209 + $0x130] sm:$0xff]
        %v275 = vld [vmem:[%s209 + $0x138] sm:$0xff]
        %v276 = vld [vmem:[%s209 + $0x140] sm:$0xff]
        %v277 = vld [vmem:[%s209 + $0x148] sm:$0xff]
        %v278 = vld [vmem:[%s209 + $0x150] sm:$0xff]
        %v279 = vld [vmem:[%s209 + $0x158] sm:$0xff]
        %v280 = vld [vmem:[%s209 + $0x160] sm:$0xff]
        %v281 = vld [vmem:[%s209 + $0x168] sm:$0xff]
        %v282 = vld [vmem:[%s209 + $0x170] sm:$0xff]
        %v283 = vld [vmem:[%s209 + $0x178] sm:$0xff]
        %v284 = vld [vmem:[%s209 + $0x180] sm:$0xff]
        %v285 = vld [vmem:[%s209 + $0x188] sm:$0xff]
        %v286 = vld [vmem:[%s209 + $0x190] sm:$0xff]
        %v287 = vld [vmem:[%s209 + $0x198] sm:$0xff]
        %v288 = vld [vmem:[%s209 + $0x1a0] sm:$0xff]
        %v289 = vld [vmem:[%s209 + $0x1a8] sm:$0xff]
        %v290 = vld [vmem:[%s209 + $0x1b0] sm:$0xff]
        %v291 = vld [vmem:[%s209 + $0x1b8] sm:$0xff]
        %v292 = vld [vmem:[%s209 + $0x1c0] sm:$0xff]
        %v293 = vld [vmem:[%s209 + $0x1c8] sm:$0xff]
        %v294 = vld [vmem:[%s209 + $0x1d0] sm:$0xff]
        %v295 = vld [vmem:[%s209 + $0x1d8] sm:$0xff]
        %v296 = vld [vmem:[%s209 + $0x1e0] sm:$0xff]
        %v297 = vld [vmem:[%s209 + $0x1e8] sm:$0xff]
        %v298 = vld [vmem:[%s209 + $0x1f0] sm:$0xff]
        %v299 = vld [vmem:[%s209 + $0x1f8] sm:$0xff]
        %v300 = vld [vmem:[%s209 + $0x200] sm:$0xff]
        %v301 = vld [vmem:[%s209 + $0x208] sm:$0xff]
        %v302 = vld [vmem:[%s209 + $0x210] sm:$0xff]
        %v303 = vld [vmem:[%s209 + $0x218] sm:$0xff]
        %v304 = vld [vmem:[%s209 + $0x220] sm:$0xff]
        %v305 = vld [vmem:[%s209 + $0x228] sm:$0xff]
        %v306 = vld [vmem:[%s209 + $0x230] sm:$0xff]
        %v307 = vld [vmem:[%s209 + $0x238] sm:$0xff]
        %v308 = vld [vmem:[%s209 + $0x240] sm:$0xff]
        %v309 = vld [vmem:[%s209 + $0x248] sm:$0xff]
        %v310 = vld [vmem:[%s209 + $0x250] sm:$0xff]
        %v311 = vld [vmem:[%s209 + $0x258] sm:$0xff]
        %v312 = vld [vmem:[%s209 + $0x260] sm:$0xff]
        %v313 = vld [vmem:[%s209 + $0x268] sm:$0xff]
        %v314 = vld [vmem:[%s209 + $0x270] sm:$0xff]
        %v315 = vld [vmem:[%s209 + $0x278] sm:$0xff]
        %v316 = vld [vmem:[%s209 + $0x280] sm:$0xff]
        %v317 = vld [vmem:[%s209 + $0x288] sm:$0xff]
        %v318 = vld [vmem:[%s209 + $0x290] sm:$0xff]
        %v319 = vld [vmem:[%s209 + $0x298] sm:$0xff]
        %v320 = vld [vmem:[%s209 + $0x2a0] sm:$0xff]
        %v321 = vld [vmem:[%s209 + $0x2a8] sm:$0xff]
        %v322 = vld [vmem:[%s209 + $0x2b0] sm:$0xff]
        %v323 = vld [vmem:[%s209 + $0x2b8] sm:$0xff]
        %v324 = vld [vmem:[%s209 + $0x2c0] sm:$0xff]
        %v325 = vld [vmem:[%s209 + $0x2c8] sm:$0xff]
        %v326 = vld [vmem:[%s209 + $0x2d0] sm:$0xff]
        %v327 = vld [vmem:[%s209 + $0x2d8] sm:$0xff]
        %v328 = vld [vmem:[%s209 + $0x2e0] sm:$0xff]
        %v329 = vld [vmem:[%s209 + $0x2e8] sm:$0xff]
        %v330 = vld [vmem:[%s209 + $0x2f0] sm:$0xff]
        %v331 = vld [vmem:[%s209 + $0x2f8] sm:$0xff]
        %v332 = vld [vmem:[%s209 + $0x300] sm:$0xff]
        %v333 = vld [vmem:[%s209 + $0x308] sm:$0xff]
        %v334 = vld [vmem:[%s209 + $0x310] sm:$0xff]
        %v335 = vld [vmem:[%s209 + $0x318] sm:$0xff]
        %v336 = vld [vmem:[%s209 + $0x320] sm:$0xff]
        %v337 = vld [vmem:[%s209 + $0x328] sm:$0xff]
        %v338 = vld [vmem:[%s209 + $0x330] sm:$0xff]
        %v339 = vld [vmem:[%s209 + $0x338] sm:$0xff]
        %v340 = vld [vmem:[%s209 + $0x340] sm:$0xff]
        %v341 = vld [vmem:[%s209 + $0x348] sm:$0xff]
        %v342 = vld [vmem:[%s209 + $0x350] sm:$0xff]
        %v343 = vld [vmem:[%s209 + $0x358] sm:$0xff]
        %v344 = vld [vmem:[%s209 + $0x360] sm:$0xff]
        %v345 = vld [vmem:[%s209 + $0x368] sm:$0xff]
        %v346 = vld [vmem:[%s209 + $0x370] sm:$0xff]
        %v347 = vld [vmem:[%s209 + $0x378] sm:$0xff]
        %v348 = vld [vmem:[%s209 + $0x380] sm:$0xff]
        %v349 = vld [vmem:[%s209 + $0x388] sm:$0xff]
        %v350 = vld [vmem:[%s209 + $0x390] sm:$0xff]
        %v351 = vld [vmem:[%s209 + $0x398] sm:$0xff]
        %v352 = vld [vmem:[%s209 + $0x3a0] sm:$0xff]
        %v353 = vld [vmem:[%s209 + $0x3a8] sm:$0xff]
        %v354 = vld [vmem:[%s209 + $0x3b0] sm:$0xff]
        %v355 = vld [vmem:[%s209 + $0x3b8] sm:$0xff]
        %v356 = vld [vmem:[%s209 + $0x3c0] sm:$0xff]
        %v357 = vld [vmem:[%s209 + $0x3c8] sm:$0xff]
        %v358 = vld [vmem:[%s209 + $0x3d0] sm:$0xff]
        %v359 = vld [vmem:[%s209 + $0x3d8] sm:$0xff]
        %v360 = vld [vmem:[%s209 + $0x3e0] sm:$0xff]
        %v361 = vld [vmem:[%s209 + $0x3e8] sm:$0xff]
        %v362 = vld [vmem:[%s209 + $0x3f0] sm:$0xff]
        %v363 = vld [vmem:[%s209 + $0x3f8] sm:$0xff]
        %v364 = vld [vmem:[%s209 + $0x400] sm:$0xff]
        %v365 = vld [vmem:[%s209 + $0x408] sm:$0xff]
        %v366 = vld [vmem:[%s209 + $0x410] sm:$0xff]
        %v367 = vld [vmem:[%s209 + $0x418] sm:$0xff]
        %v368 = vld [vmem:[%s209 + $0x420] sm:$0xff]
        %v369 = vld [vmem:[%s209 + $0x428] sm:$0xff]
        %v370 = vld [vmem:[%s209 + $0x430] sm:$0xff]
        %v371 = vld [vmem:[%s209 + $0x438] sm:$0xff]
        %v372 = vld [vmem:[%s209 + $0x440] sm:$0xff]
        %v373 = vld [vmem:[%s209 + $0x448] sm:$0xff]
        %v374 = vld [vmem:[%s209 + $0x450] sm:$0xff]
        %v375 = vld [vmem:[%s209 + $0x458] sm:$0xff]
        %v376 = vld [vmem:[%s209 + $0x460] sm:$0xff]
        %v377 = vld [vmem:[%s209 + $0x468] sm:$0xff]
        %v378 = vld [vmem:[%s209 + $0x470] sm:$0xff]
        %v379 = vld [vmem:[%s209 + $0x478] sm:$0xff]
        %v380 = vld [vmem:[%s209 + $0x480] sm:$0xff]
        %v381 = vld [vmem:[%s209 + $0x488] sm:$0xff]
        %v382 = vld [vmem:[%s209 + $0x490] sm:$0xff]
        %v383 = vld [vmem:[%s209 + $0x498] sm:$0xff]
        %v384 = vld [vmem:[%s209 + $0x4a0] sm:$0xff]
        %v385 = vld [vmem:[%s209 + $0x4a8] sm:$0xff]
        %v386 = vld [vmem:[%s209 + $0x4b0] sm:$0xff]
        %v387 = vld [vmem:[%s209 + $0x4b8] sm:$0xff]
        %v388 = vld [vmem:[%s209 + $0x4c0] sm:$0xff]
        %v389 = vld [vmem:[%s209 + $0x4c8] sm:$0xff]
        %v390 = vld [vmem:[%s209 + $0x4d0] sm:$0xff]
        %v391 = vld [vmem:[%s209 + $0x4d8] sm:$0xff]
        %v392 = vld [vmem:[%s209 + $0x4e0] sm:$0xff]
        %v393 = vld [vmem:[%s209 + $0x4e8] sm:$0xff]
        %v394 = vld [vmem:[%s209 + $0x4f0] sm:$0xff]
        %v395 = vld [vmem:[%s209 + $0x4f8] sm:$0xff]
        %v396 = vld [vmem:[%s209 + $0x500] sm:$0xff]
        %v397 = vld [vmem:[%s209 + $0x508] sm:$0xff]
        %v398 = vld [vmem:[%s209 + $0x510] sm:$0xff]
        %v399 = vld [vmem:[%s209 + $0x518] sm:$0xff]
        %v400 = vld [vmem:[%s209 + $0x520] sm:$0xff]
        %v401 = vld [vmem:[%s209 + $0x528] sm:$0xff]
        %v402 = vld [vmem:[%s209 + $0x530] sm:$0xff]
        %v403 = vld [vmem:[%s209 + $0x538] sm:$0xff]
        %v404 = vld [vmem:[%s209 + $0x540] sm:$0xff]
        %v405 = vld [vmem:[%s209 + $0x548] sm:$0xff]
        %v406 = vld [vmem:[%s209 + $0x550] sm:$0xff]
        %v407 = vld [vmem:[%s209 + $0x558] sm:$0xff]
        %v408 = vld [vmem:[%s0] sm:$0x1]
        %v409 = vld [vmem:[%s0 + $0x1] sm:$0x1]
        %v410 = vld [vmem:[%s0 + $0x2] sm:$0x1]
        %v411 = vld [vmem:[%s0 + $0x3] sm:$0x1]
        %v412 = vld [vmem:[%s0 + $0x4] sm:$0x1]
        %v413 = vld [vmem:[%s0 + $0x5] sm:$0x1]
        %415 = vset.pattern.permute.xlu0 0
        %416 = vperm.xlu0 %415, %v236
        %v417 = vpop.permute.xlu0 %416
        %420 = vset.pattern.permute.xlu0 0
        %421 = vperm.xlu0 %420, %v237
        %v422 = vpop.permute.xlu0 %421
        %425 = vset.pattern.permute.xlu0 0
        %426 = vperm.xlu0 %425, %v238
        %v427 = vpop.permute.xlu0 %426
        %430 = vset.pattern.permute.xlu0 0
        %431 = vperm.xlu0 %430, %v239
        %v432 = vpop.permute.xlu0 %431
        %435 = vset.pattern.permute.xlu0 0
        %436 = vperm.xlu0 %435, %v240
        %v437 = vpop.permute.xlu0 %436
        %440 = vset.pattern.permute.xlu0 0
        %441 = vperm.xlu0 %440, %v241
        %v442 = vpop.permute.xlu0 %441
        %445 = vset.pattern.permute.xlu0 0
        %446 = vperm.xlu0 %445, %v242
        %v447 = vpop.permute.xlu0 %446
        %450 = vset.pattern.permute.xlu0 0
        %451 = vperm.xlu0 %450, %v243
        %v452 = vpop.permute.xlu0 %451
        %455 = vset.pattern.permute.xlu0 0
        %456 = vperm.xlu0 %455, %v244
        %v457 = vpop.permute.xlu0 %456
        %460 = vset.pattern.permute.xlu0 0
        %461 = vperm.xlu0 %460, %v245
        %v462 = vpop.permute.xlu0 %461
        %465 = vset.pattern.permute.xlu0 0
        %466 = vperm.xlu0 %465, %v246
        %v467 = vpop.permute.xlu0 %466
        %470 = vset.pattern.permute.xlu0 0
        %471 = vperm.xlu0 %470, %v247
        %v472 = vpop.permute.xlu0 %471
        %475 = vset.pattern.permute.xlu0 0
        %476 = vperm.xlu0 %475, %v248
        %v477 = vpop.permute.xlu0 %476
        %480 = vset.pattern.permute.xlu0 0
        %481 = vperm.xlu0 %480, %v249
        %v482 = vpop.permute.xlu0 %481
        %485 = vset.pattern.permute.xlu0 0
        %486 = vperm.xlu0 %485, %v250
        %v487 = vpop.permute.xlu0 %486
        %490 = vset.pattern.permute.xlu0 0
        %491 = vperm.xlu0 %490, %v251
        %v492 = vpop.permute.xlu0 %491
        %495 = vset.pattern.permute.xlu0 0
        %496 = vperm.xlu0 %495, %v252
        %v497 = vpop.permute.xlu0 %496
        %500 = vset.pattern.permute.xlu0 0
        %501 = vperm.xlu0 %500, %v253
        %v502 = vpop.permute.xlu0 %501
        %505 = vset.pattern.permute.xlu0 0
        %506 = vperm.xlu0 %505, %v254
        %v507 = vpop.permute.xlu0 %506
        %510 = vset.pattern.permute.xlu0 0
        %511 = vperm.xlu0 %510, %v255
        %v512 = vpop.permute.xlu0 %511
        %515 = vset.pattern.permute.xlu0 0
        %516 = vperm.xlu0 %515, %v256
        %v517 = vpop.permute.xlu0 %516
        %520 = vset.pattern.permute.xlu0 0
        %521 = vperm.xlu0 %520, %v257
        %v522 = vpop.permute.xlu0 %521
        %525 = vset.pattern.permute.xlu0 0
        %526 = vperm.xlu0 %525, %v258
        %v527 = vpop.permute.xlu0 %526
        %530 = vset.pattern.permute.xlu0 0
        %531 = vperm.xlu0 %530, %v259
        %v532 = vpop.permute.xlu0 %531
        %535 = vset.pattern.permute.xlu0 0
        %536 = vperm.xlu0 %535, %v260
        %v537 = vpop.permute.xlu0 %536
        %540 = vset.pattern.permute.xlu0 0
        %541 = vperm.xlu0 %540, %v261
        %v542 = vpop.permute.xlu0 %541
        %545 = vset.pattern.permute.xlu0 0
        %546 = vperm.xlu0 %545, %v262
        %v547 = vpop.permute.xlu0 %546
        %550 = vset.pattern.permute.xlu0 0
        %551 = vperm.xlu0 %550, %v263
        %v552 = vpop.permute.xlu0 %551
        %555 = vset.pattern.permute.xlu0 0
        %556 = vperm.xlu0 %555, %v264
        %v557 = vpop.permute.xlu0 %556
        %560 = vset.pattern.permute.xlu0 0
        %561 = vperm.xlu0 %560, %v265
        %v562 = vpop.permute.xlu0 %561
        %565 = vset.pattern.permute.xlu0 0
        %566 = vperm.xlu0 %565, %v266
        %v567 = vpop.permute.xlu0 %566
        %570 = vset.pattern.permute.xlu0 0
        %571 = vperm.xlu0 %570, %v267
        %v572 = vpop.permute.xlu0 %571
        %575 = vset.pattern.permute.xlu0 0
        %576 = vperm.xlu0 %575, %v268
        %v577 = vpop.permute.xlu0 %576
        %580 = vset.pattern.permute.xlu0 0
        %581 = vperm.xlu0 %580, %v269
        %v582 = vpop.permute.xlu0 %581
        %585 = vset.pattern.permute.xlu0 0
        %586 = vperm.xlu0 %585, %v270
        %v587 = vpop.permute.xlu0 %586
        %590 = vset.pattern.permute.xlu0 0
        %591 = vperm.xlu0 %590, %v271
        %v592 = vpop.permute.xlu0 %591
        %595 = vset.pattern.permute.xlu0 0
        %596 = vperm.xlu0 %595, %v272
        %v597 = vpop.permute.xlu0 %596
        %600 = vset.pattern.permute.xlu0 0
        %601 = vperm.xlu0 %600, %v273
        %v602 = vpop.permute.xlu0 %601
        %605 = vset.pattern.permute.xlu0 0
        %606 = vperm.xlu0 %605, %v274
        %v607 = vpop.permute.xlu0 %606
        %610 = vset.pattern.permute.xlu0 0
        %611 = vperm.xlu0 %610, %v275
        %v612 = vpop.permute.xlu0 %611
        %615 = vset.pattern.permute.xlu0 0
        %616 = vperm.xlu0 %615, %v276
        %v617 = vpop.permute.xlu0 %616
        %620 = vset.pattern.permute.xlu0 0
        %621 = vperm.xlu0 %620, %v277
        %v622 = vpop.permute.xlu0 %621
        %625 = vset.pattern.permute.xlu0 0
        %626 = vperm.xlu0 %625, %v278
        %v627 = vpop.permute.xlu0 %626
        %630 = vset.pattern.permute.xlu0 0
        %631 = vperm.xlu0 %630, %v279
        %v632 = vpop.permute.xlu0 %631
        %635 = vset.pattern.permute.xlu0 0
        %636 = vperm.xlu0 %635, %v280
        %v637 = vpop.permute.xlu0 %636
        %640 = vset.pattern.permute.xlu0 0
        %641 = vperm.xlu0 %640, %v281
        %v642 = vpop.permute.xlu0 %641
        %645 = vset.pattern.permute.xlu0 0
        %646 = vperm.xlu0 %645, %v282
        %v647 = vpop.permute.xlu0 %646
        %650 = vset.pattern.permute.xlu0 0
        %651 = vperm.xlu0 %650, %v283
        %v652 = vpop.permute.xlu0 %651
        %655 = vset.pattern.permute.xlu0 0
        %656 = vperm.xlu0 %655, %v284
        %v657 = vpop.permute.xlu0 %656
        %660 = vset.pattern.permute.xlu0 0
        %661 = vperm.xlu0 %660, %v285
        %v662 = vpop.permute.xlu0 %661
        %665 = vset.pattern.permute.xlu0 0
        %666 = vperm.xlu0 %665, %v286
        %v667 = vpop.permute.xlu0 %666
        %670 = vset.pattern.permute.xlu0 0
        %671 = vperm.xlu0 %670, %v287
        %v672 = vpop.permute.xlu0 %671
        %675 = vset.pattern.permute.xlu0 0
        %676 = vperm.xlu0 %675, %v288
        %v677 = vpop.permute.xlu0 %676
        %680 = vset.pattern.permute.xlu0 0
        %681 = vperm.xlu0 %680, %v289
        %v682 = vpop.permute.xlu0 %681
        %685 = vset.pattern.permute.xlu0 0
        %686 = vperm.xlu0 %685, %v290
        %v687 = vpop.permute.xlu0 %686
        %690 = vset.pattern.permute.xlu0 0
        %691 = vperm.xlu0 %690, %v291
        %v692 = vpop.permute.xlu0 %691
        %695 = vset.pattern.permute.xlu0 0
        %696 = vperm.xlu0 %695, %v292
        %v697 = vpop.permute.xlu0 %696
        %700 = vset.pattern.permute.xlu0 0
        %701 = vperm.xlu0 %700, %v293
        %v702 = vpop.permute.xlu0 %701
        %705 = vset.pattern.permute.xlu0 0
        %706 = vperm.xlu0 %705, %v294
        %v707 = vpop.permute.xlu0 %706
        %710 = vset.pattern.permute.xlu0 0
        %711 = vperm.xlu0 %710, %v295
        %v712 = vpop.permute.xlu0 %711
        %715 = vset.pattern.permute.xlu0 0
        %716 = vperm.xlu0 %715, %v296
        %v717 = vpop.permute.xlu0 %716
        %720 = vset.pattern.permute.xlu0 0
        %721 = vperm.xlu0 %720, %v297
        %v722 = vpop.permute.xlu0 %721
        %725 = vset.pattern.permute.xlu0 0
        %726 = vperm.xlu0 %725, %v298
        %v727 = vpop.permute.xlu0 %726
        %730 = vset.pattern.permute.xlu0 0
        %731 = vperm.xlu0 %730, %v299
        %v732 = vpop.permute.xlu0 %731
        %735 = vset.pattern.permute.xlu0 0
        %736 = vperm.xlu0 %735, %v300
        %v737 = vpop.permute.xlu0 %736
        %740 = vset.pattern.permute.xlu0 0
        %741 = vperm.xlu0 %740, %v301
        %v742 = vpop.permute.xlu0 %741
        %745 = vset.pattern.permute.xlu0 0
        %746 = vperm.xlu0 %745, %v302
        %v747 = vpop.permute.xlu0 %746
        %750 = vset.pattern.permute.xlu0 0
        %751 = vperm.xlu0 %750, %v303
        %v752 = vpop.permute.xlu0 %751
        %755 = vset.pattern.permute.xlu0 0
        %756 = vperm.xlu0 %755, %v304
        %v757 = vpop.permute.xlu0 %756
        %760 = vset.pattern.permute.xlu0 0
        %761 = vperm.xlu0 %760, %v305
        %v762 = vpop.permute.xlu0 %761
        %765 = vset.pattern.permute.xlu0 0
        %766 = vperm.xlu0 %765, %v306
        %v767 = vpop.permute.xlu0 %766
        %770 = vset.pattern.permute.xlu0 0
        %771 = vperm.xlu0 %770, %v307
        %v772 = vpop.permute.xlu0 %771
        %775 = vset.pattern.permute.xlu0 0
        %776 = vperm.xlu0 %775, %v308
        %v777 = vpop.permute.xlu0 %776
        %780 = vset.pattern.permute.xlu0 0
        %781 = vperm.xlu0 %780, %v309
        %v782 = vpop.permute.xlu0 %781
        %785 = vset.pattern.permute.xlu0 0
        %786 = vperm.xlu0 %785, %v310
        %v787 = vpop.permute.xlu0 %786
        %790 = vset.pattern.permute.xlu0 0
        %791 = vperm.xlu0 %790, %v311
        %v792 = vpop.permute.xlu0 %791
        %795 = vset.pattern.permute.xlu0 0
        %796 = vperm.xlu0 %795, %v312
        %v797 = vpop.permute.xlu0 %796
        %800 = vset.pattern.permute.xlu0 0
        %801 = vperm.xlu0 %800, %v313
        %v802 = vpop.permute.xlu0 %801
        %805 = vset.pattern.permute.xlu0 0
        %806 = vperm.xlu0 %805, %v314
        %v807 = vpop.permute.xlu0 %806
        %810 = vset.pattern.permute.xlu0 0
        %811 = vperm.xlu0 %810, %v315
        %v812 = vpop.permute.xlu0 %811
        %815 = vset.pattern.permute.xlu0 0
        %816 = vperm.xlu0 %815, %v316
        %v817 = vpop.permute.xlu0 %816
        %820 = vset.pattern.permute.xlu0 0
        %821 = vperm.xlu0 %820, %v317
        %v822 = vpop.permute.xlu0 %821
        %825 = vset.pattern.permute.xlu0 0
        %826 = vperm.xlu0 %825, %v318
        %v827 = vpop.permute.xlu0 %826
        %830 = vset.pattern.permute.xlu0 0
        %831 = vperm.xlu0 %830, %v319
        %v832 = vpop.permute.xlu0 %831
        %835 = vset.pattern.permute.xlu0 0
        %836 = vperm.xlu0 %835, %v320
        %v837 = vpop.permute.xlu0 %836
        %840 = vset.pattern.permute.xlu0 0
        %841 = vperm.xlu0 %840, %v321
        %v842 = vpop.permute.xlu0 %841
        %845 = vset.pattern.permute.xlu0 0
        %846 = vperm.xlu0 %845, %v322
        %v847 = vpop.permute.xlu0 %846
        %850 = vset.pattern.permute.xlu0 0
        %851 = vperm.xlu0 %850, %v323
        %v852 = vpop.permute.xlu0 %851
        %855 = vset.pattern.permute.xlu0 0
        %856 = vperm.xlu0 %855, %v324
        %v857 = vpop.permute.xlu0 %856
        %860 = vset.pattern.permute.xlu0 0
        %861 = vperm.xlu0 %860, %v325
        %v862 = vpop.permute.xlu0 %861
        %865 = vset.pattern.permute.xlu0 0
        %866 = vperm.xlu0 %865, %v326
        %v867 = vpop.permute.xlu0 %866
        %870 = vset.pattern.permute.xlu0 0
        %871 = vperm.xlu0 %870, %v327
        %v872 = vpop.permute.xlu0 %871
        %875 = vset.pattern.permute.xlu0 0
        %876 = vperm.xlu0 %875, %v328
        %v877 = vpop.permute.xlu0 %876
        %880 = vset.pattern.permute.xlu0 0
        %881 = vperm.xlu0 %880, %v329
        %v882 = vpop.permute.xlu0 %881
        %885 = vset.pattern.permute.xlu0 0
        %886 = vperm.xlu0 %885, %v330
        %v887 = vpop.permute.xlu0 %886
        %890 = vset.pattern.permute.xlu0 0
        %891 = vperm.xlu0 %890, %v331
        %v892 = vpop.permute.xlu0 %891
        %895 = vset.pattern.permute.xlu0 0
        %896 = vperm.xlu0 %895, %v332
        %v897 = vpop.permute.xlu0 %896
        %900 = vset.pattern.permute.xlu0 0
        %901 = vperm.xlu0 %900, %v333
        %v902 = vpop.permute.xlu0 %901
        %905 = vset.pattern.permute.xlu0 0
        %906 = vperm.xlu0 %905, %v334
        %v907 = vpop.permute.xlu0 %906
        %910 = vset.pattern.permute.xlu0 0
        %911 = vperm.xlu0 %910, %v335
        %v912 = vpop.permute.xlu0 %911
        %915 = vset.pattern.permute.xlu0 0
        %916 = vperm.xlu0 %915, %v336
        %v917 = vpop.permute.xlu0 %916
        %920 = vset.pattern.permute.xlu0 0
        %921 = vperm.xlu0 %920, %v337
        %v922 = vpop.permute.xlu0 %921
        %925 = vset.pattern.permute.xlu0 0
        %926 = vperm.xlu0 %925, %v338
        %v927 = vpop.permute.xlu0 %926
        %930 = vset.pattern.permute.xlu0 0
        %931 = vperm.xlu0 %930, %v339
        %v932 = vpop.permute.xlu0 %931
        %935 = vset.pattern.permute.xlu0 0
        %936 = vperm.xlu0 %935, %v340
        %v937 = vpop.permute.xlu0 %936
        %940 = vset.pattern.permute.xlu0 0
        %941 = vperm.xlu0 %940, %v341
        %v942 = vpop.permute.xlu0 %941
        %945 = vset.pattern.permute.xlu0 0
        %946 = vperm.xlu0 %945, %v342
        %v947 = vpop.permute.xlu0 %946
        %950 = vset.pattern.permute.xlu0 0
        %951 = vperm.xlu0 %950, %v343
        %v952 = vpop.permute.xlu0 %951
        %955 = vset.pattern.permute.xlu0 0
        %956 = vperm.xlu0 %955, %v344
        %v957 = vpop.permute.xlu0 %956
        %960 = vset.pattern.permute.xlu0 0
        %961 = vperm.xlu0 %960, %v345
        %v962 = vpop.permute.xlu0 %961
        %965 = vset.pattern.permute.xlu0 0
        %966 = vperm.xlu0 %965, %v346
        %v967 = vpop.permute.xlu0 %966
        %970 = vset.pattern.permute.xlu0 0
        %971 = vperm.xlu0 %970, %v347
        %v972 = vpop.permute.xlu0 %971
        %975 = vset.pattern.permute.xlu0 0
        %976 = vperm.xlu0 %975, %v348
        %v977 = vpop.permute.xlu0 %976
        %980 = vset.pattern.permute.xlu0 0
        %981 = vperm.xlu0 %980, %v349
        %v982 = vpop.permute.xlu0 %981
        %985 = vset.pattern.permute.xlu0 0
        %986 = vperm.xlu0 %985, %v350
        %v987 = vpop.permute.xlu0 %986
        %990 = vset.pattern.permute.xlu0 0
        %991 = vperm.xlu0 %990, %v351
        %v992 = vpop.permute.xlu0 %991
        %995 = vset.pattern.permute.xlu0 0
        %996 = vperm.xlu0 %995, %v352
        %v997 = vpop.permute.xlu0 %996
        %1000 = vset.pattern.permute.xlu0 0
        %1001 = vperm.xlu0 %1000, %v353
        %v1002 = vpop.permute.xlu0 %1001
        %1005 = vset.pattern.permute.xlu0 0
        %1006 = vperm.xlu0 %1005, %v354
        %v1007 = vpop.permute.xlu0 %1006
        %1010 = vset.pattern.permute.xlu0 0
        %1011 = vperm.xlu0 %1010, %v355
        %v1012 = vpop.permute.xlu0 %1011
        %1015 = vset.pattern.permute.xlu0 0
        %1016 = vperm.xlu0 %1015, %v356
        %v1017 = vpop.permute.xlu0 %1016
        %1020 = vset.pattern.permute.xlu0 0
        %1021 = vperm.xlu0 %1020, %v357
        %v1022 = vpop.permute.xlu0 %1021
        %1025 = vset.pattern.permute.xlu0 0
        %1026 = vperm.xlu0 %1025, %v358
        %v1027 = vpop.permute.xlu0 %1026
        %1030 = vset.pattern.permute.xlu0 0
        %1031 = vperm.xlu0 %1030, %v359
        %v1032 = vpop.permute.xlu0 %1031
        %1035 = vset.pattern.permute.xlu0 0
        %1036 = vperm.xlu0 %1035, %v360
        %v1037 = vpop.permute.xlu0 %1036
        %1040 = vset.pattern.permute.xlu0 0
        %1041 = vperm.xlu0 %1040, %v361
        %v1042 = vpop.permute.xlu0 %1041
        %1045 = vset.pattern.permute.xlu0 0
        %1046 = vperm.xlu0 %1045, %v362
        %v1047 = vpop.permute.xlu0 %1046
        %1050 = vset.pattern.permute.xlu0 0
        %1051 = vperm.xlu0 %1050, %v363
        %v1052 = vpop.permute.xlu0 %1051
        %1055 = vset.pattern.permute.xlu0 0
        %1056 = vperm.xlu0 %1055, %v364
        %v1057 = vpop.permute.xlu0 %1056
        %1060 = vset.pattern.permute.xlu0 0
        %1061 = vperm.xlu0 %1060, %v365
        %v1062 = vpop.permute.xlu0 %1061
        %1065 = vset.pattern.permute.xlu0 0
        %1066 = vperm.xlu0 %1065, %v366
        %v1067 = vpop.permute.xlu0 %1066
        %1070 = vset.pattern.permute.xlu0 0
        %1071 = vperm.xlu0 %1070, %v367
        %v1072 = vpop.permute.xlu0 %1071
        %1075 = vset.pattern.permute.xlu0 0
        %1076 = vperm.xlu0 %1075, %v368
        %v1077 = vpop.permute.xlu0 %1076
        %1080 = vset.pattern.permute.xlu0 0
        %1081 = vperm.xlu0 %1080, %v369
        %v1082 = vpop.permute.xlu0 %1081
        %1085 = vset.pattern.permute.xlu0 0
        %1086 = vperm.xlu0 %1085, %v370
        %v1087 = vpop.permute.xlu0 %1086
        %1090 = vset.pattern.permute.xlu0 0
        %1091 = vperm.xlu0 %1090, %v371
        %v1092 = vpop.permute.xlu0 %1091
        %1095 = vset.pattern.permute.xlu0 0
        %1096 = vperm.xlu0 %1095, %v372
        %v1097 = vpop.permute.xlu0 %1096
        %1100 = vset.pattern.permute.xlu0 0
        %1101 = vperm.xlu0 %1100, %v373
        %v1102 = vpop.permute.xlu0 %1101
        %1105 = vset.pattern.permute.xlu0 0
        %1106 = vperm.xlu0 %1105, %v374
        %v1107 = vpop.permute.xlu0 %1106
        %1110 = vset.pattern.permute.xlu0 0
        %1111 = vperm.xlu0 %1110, %v375
        %v1112 = vpop.permute.xlu0 %1111
        %1115 = vset.pattern.permute.xlu0 0
        %1116 = vperm.xlu0 %1115, %v376
        %v1117 = vpop.permute.xlu0 %1116
        %1120 = vset.pattern.permute.xlu0 0
        %1121 = vperm.xlu0 %1120, %v377
        %v1122 = vpop.permute.xlu0 %1121
        %1125 = vset.pattern.permute.xlu0 0
        %1126 = vperm.xlu0 %1125, %v378
        %v1127 = vpop.permute.xlu0 %1126
        %1130 = vset.pattern.permute.xlu0 0
        %1131 = vperm.xlu0 %1130, %v379
        %v1132 = vpop.permute.xlu0 %1131
        %1135 = vset.pattern.permute.xlu0 0
        %1136 = vperm.xlu0 %1135, %v380
        %v1137 = vpop.permute.xlu0 %1136
        %1140 = vset.pattern.permute.xlu0 0
        %1141 = vperm.xlu0 %1140, %v381
        %v1142 = vpop.permute.xlu0 %1141
        %1145 = vset.pattern.permute.xlu0 0
        %1146 = vperm.xlu0 %1145, %v382
        %v1147 = vpop.permute.xlu0 %1146
        %1150 = vset.pattern.permute.xlu0 0
        %1151 = vperm.xlu0 %1150, %v383
        %v1152 = vpop.permute.xlu0 %1151
        %1155 = vset.pattern.permute.xlu0 0
        %1156 = vperm.xlu0 %1155, %v384
        %v1157 = vpop.permute.xlu0 %1156
        %1160 = vset.pattern.permute.xlu0 0
        %1161 = vperm.xlu0 %1160, %v385
        %v1162 = vpop.permute.xlu0 %1161
        %1165 = vset.pattern.permute.xlu0 0
        %1166 = vperm.xlu0 %1165, %v386
        %v1167 = vpop.permute.xlu0 %1166
        %1170 = vset.pattern.permute.xlu0 0
        %1171 = vperm.xlu0 %1170, %v387
        %v1172 = vpop.permute.xlu0 %1171
        %1175 = vset.pattern.permute.xlu0 0
        %1176 = vperm.xlu0 %1175, %v388
        %v1177 = vpop.permute.xlu0 %1176
        %1180 = vset.pattern.permute.xlu0 0
        %1181 = vperm.xlu0 %1180, %v389
        %v1182 = vpop.permute.xlu0 %1181
        %1185 = vset.pattern.permute.xlu0 0
        %1186 = vperm.xlu0 %1185, %v390
        %v1187 = vpop.permute.xlu0 %1186
        %1190 = vset.pattern.permute.xlu0 0
        %1191 = vperm.xlu0 %1190, %v391
        %v1192 = vpop.permute.xlu0 %1191
        %1195 = vset.pattern.permute.xlu0 0
        %1196 = vperm.xlu0 %1195, %v392
        %v1197 = vpop.permute.xlu0 %1196
        %1200 = vset.pattern.permute.xlu0 0
        %1201 = vperm.xlu0 %1200, %v393
        %v1202 = vpop.permute.xlu0 %1201
        %1205 = vset.pattern.permute.xlu0 0
        %1206 = vperm.xlu0 %1205, %v394
        %v1207 = vpop.permute.xlu0 %1206
        %1210 = vset.pattern.permute.xlu0 0
        %1211 = vperm.xlu0 %1210, %v395
        %v1212 = vpop.permute.xlu0 %1211
        %1215 = vset.pattern.permute.xlu0 0
        %1216 = vperm.xlu0 %1215, %v396
        %v1217 = vpop.permute.xlu0 %1216
        %1220 = vset.pattern.permute.xlu0 0
        %1221 = vperm.xlu0 %1220, %v397
        %v1222 = vpop.permute.xlu0 %1221
        %1225 = vset.pattern.permute.xlu0 0
        %1226 = vperm.xlu0 %1225, %v398
        %v1227 = vpop.permute.xlu0 %1226
        %1230 = vset.pattern.permute.xlu0 0
        %1231 = vperm.xlu0 %1230, %v399
        %v1232 = vpop.permute.xlu0 %1231
        %1235 = vset.pattern.permute.xlu0 0
        %1236 = vperm.xlu0 %1235, %v400
        %v1237 = vpop.permute.xlu0 %1236
        %1240 = vset.pattern.permute.xlu0 0
        %1241 = vperm.xlu0 %1240, %v401
        %v1242 = vpop.permute.xlu0 %1241
        %1245 = vset.pattern.permute.xlu0 0
        %1246 = vperm.xlu0 %1245, %v402
        %v1247 = vpop.permute.xlu0 %1246
        %1250 = vset.pattern.permute.xlu0 0
        %1251 = vperm.xlu0 %1250, %v403
        %v1252 = vpop.permute.xlu0 %1251
        %1255 = vset.pattern.permute.xlu0 0
        %1256 = vperm.xlu0 %1255, %v404
        %v1257 = vpop.permute.xlu0 %1256
        %1260 = vset.pattern.permute.xlu0 0
        %1261 = vperm.xlu0 %1260, %v405
        %v1262 = vpop.permute.xlu0 %1261
        %1265 = vset.pattern.permute.xlu0 0
        %1266 = vperm.xlu0 %1265, %v406
        %v1267 = vpop.permute.xlu0 %1266
        %1270 = vset.pattern.permute.xlu0 0
        %1271 = vperm.xlu0 %1270, %v407
        %v1272 = vpop.permute.xlu0 %1271
        %v1274 = vperm.slane %v408, 0
        %v1275 = vsub.f32 %v417, %v1274
        %v1276 = vsub.f32 %v422, %v1274
        %v1277 = vsub.f32 %v427, %v1274
        %v1278 = vsub.f32 %v432, %v1274
        %v1279 = vsub.f32 %v437, %v1274
        %v1280 = vsub.f32 %v442, %v1274
        %v1281 = vsub.f32 %v447, %v1274
        %v1282 = vsub.f32 %v452, %v1274
        %v1283 = vsub.f32 %v457, %v1274
        %v1284 = vsub.f32 %v462, %v1274
        %v1285 = vsub.f32 %v467, %v1274
        %v1286 = vsub.f32 %v472, %v1274
        %v1287 = vsub.f32 %v477, %v1274
        %v1288 = vsub.f32 %v482, %v1274
        %v1289 = vsub.f32 %v487, %v1274
        %v1290 = vsub.f32 %v492, %v1274
        %v1291 = vsub.f32 %v497, %v1274
        %v1292 = vsub.f32 %v502, %v1274
        %v1293 = vsub.f32 %v507, %v1274
        %v1294 = vsub.f32 %v512, %v1274
        %v1295 = vsub.f32 %v517, %v1274
        %v1296 = vsub.f32 %v522, %v1274
        %v1297 = vsub.f32 %v527, %v1274
        %v1298 = vsub.f32 %v532, %v1274
        %v1299 = vsub.f32 %v537, %v1274
        %v1300 = vsub.f32 %v542, %v1274
        %v1301 = vsub.f32 %v547, %v1274
        %v1302 = vsub.f32 %v552, %v1274
        %v1303 = vsub.f32 %v557, %v1274
        %v1304 = vsub.f32 %v562, %v1274
        %v1305 = vsub.f32 %v567, %v1274
        %v1306 = vsub.f32 %v572, %v1274
        %v1307 = vsub.f32 %v577, %v1274
        %v1308 = vsub.f32 %v582, %v1274
        %v1309 = vsub.f32 %v587, %v1274
        %v1310 = vsub.f32 %v592, %v1274
        %v1311 = vsub.f32 %v597, %v1274
        %v1312 = vsub.f32 %v602, %v1274
        %v1313 = vsub.f32 %v607, %v1274
        %v1314 = vsub.f32 %v612, %v1274
        %v1315 = vsub.f32 %v617, %v1274
        %v1316 = vsub.f32 %v622, %v1274
        %v1317 = vsub.f32 %v627, %v1274
        %v1318 = vsub.f32 %v632, %v1274
        %v1319 = vsub.f32 %v637, %v1274
        %v1320 = vsub.f32 %v642, %v1274
        %v1321 = vsub.f32 %v647, %v1274
        %v1322 = vsub.f32 %v652, %v1274
        %v1323 = vsub.f32 %v657, %v1274
        %v1324 = vsub.f32 %v662, %v1274
        %v1325 = vsub.f32 %v667, %v1274
        %v1326 = vsub.f32 %v672, %v1274
        %v1327 = vsub.f32 %v677, %v1274
        %v1328 = vsub.f32 %v682, %v1274
        %v1329 = vsub.f32 %v687, %v1274
        %v1330 = vsub.f32 %v692, %v1274
        %v1331 = vsub.f32 %v697, %v1274
        %v1332 = vsub.f32 %v702, %v1274
        %v1333 = vsub.f32 %v707, %v1274
        %v1334 = vsub.f32 %v712, %v1274
        %v1335 = vsub.f32 %v717, %v1274
        %v1336 = vsub.f32 %v722, %v1274
        %v1337 = vsub.f32 %v727, %v1274
        %v1338 = vsub.f32 %v732, %v1274
        %v1339 = vsub.f32 %v737, %v1274
        %v1340 = vsub.f32 %v742, %v1274
        %v1341 = vsub.f32 %v747, %v1274
        %v1342 = vsub.f32 %v752, %v1274
        %v1343 = vsub.f32 %v757, %v1274
        %v1344 = vsub.f32 %v762, %v1274
        %v1345 = vsub.f32 %v767, %v1274
        %v1346 = vsub.f32 %v772, %v1274
        %v1347 = vsub.f32 %v777, %v1274
        %v1348 = vsub.f32 %v782, %v1274
        %v1349 = vsub.f32 %v787, %v1274
        %v1350 = vsub.f32 %v792, %v1274
        %v1351 = vsub.f32 %v797, %v1274
        %v1352 = vsub.f32 %v802, %v1274
        %v1353 = vsub.f32 %v807, %v1274
        %v1354 = vsub.f32 %v812, %v1274
        %v1355 = vsub.f32 %v817, %v1274
        %v1356 = vsub.f32 %v822, %v1274
        %v1357 = vsub.f32 %v827, %v1274
        %v1358 = vsub.f32 %v832, %v1274
        %v1359 = vsub.f32 %v837, %v1274
        %v1360 = vsub.f32 %v842, %v1274
        %v1361 = vsub.f32 %v847, %v1274
        %v1362 = vsub.f32 %v852, %v1274
        %v1363 = vsub.f32 %v857, %v1274
        %v1364 = vsub.f32 %v862, %v1274
        %v1365 = vsub.f32 %v867, %v1274
        %v1366 = vsub.f32 %v872, %v1274
        %v1367 = vsub.f32 %v877, %v1274
        %v1368 = vsub.f32 %v882, %v1274
        %v1369 = vsub.f32 %v887, %v1274
        %v1370 = vsub.f32 %v892, %v1274
        %v1371 = vsub.f32 %v897, %v1274
        %v1372 = vsub.f32 %v902, %v1274
        %v1373 = vsub.f32 %v907, %v1274
        %v1374 = vsub.f32 %v912, %v1274
        %v1375 = vsub.f32 %v917, %v1274
        %v1376 = vsub.f32 %v922, %v1274
        %v1377 = vsub.f32 %v927, %v1274
        %v1378 = vsub.f32 %v932, %v1274
        %v1379 = vsub.f32 %v937, %v1274
        %v1380 = vsub.f32 %v942, %v1274
        %v1381 = vsub.f32 %v947, %v1274
        %v1382 = vsub.f32 %v952, %v1274
        %v1383 = vsub.f32 %v957, %v1274
        %v1384 = vsub.f32 %v962, %v1274
        %v1385 = vsub.f32 %v967, %v1274
        %v1386 = vsub.f32 %v972, %v1274
        %v1387 = vsub.f32 %v977, %v1274
        %v1388 = vsub.f32 %v982, %v1274
        %v1389 = vsub.f32 %v987, %v1274
        %v1390 = vsub.f32 %v992, %v1274
        %v1391 = vsub.f32 %v997, %v1274
        %v1392 = vsub.f32 %v1002, %v1274
        %v1393 = vsub.f32 %v1007, %v1274
        %v1394 = vsub.f32 %v1012, %v1274
        %v1395 = vsub.f32 %v1017, %v1274
        %v1396 = vsub.f32 %v1022, %v1274
        %v1397 = vsub.f32 %v1027, %v1274
        %v1398 = vsub.f32 %v1032, %v1274
        %v1399 = vsub.f32 %v1037, %v1274
        %v1400 = vsub.f32 %v1042, %v1274
        %v1401 = vsub.f32 %v1047, %v1274
        %v1402 = vsub.f32 %v1052, %v1274
        %v1403 = vsub.f32 %v1057, %v1274
        %v1404 = vsub.f32 %v1062, %v1274
        %v1405 = vsub.f32 %v1067, %v1274
        %v1406 = vsub.f32 %v1072, %v1274
        %v1407 = vsub.f32 %v1077, %v1274
        %v1408 = vsub.f32 %v1082, %v1274
        %v1409 = vsub.f32 %v1087, %v1274
        %v1410 = vsub.f32 %v1092, %v1274
        %v1411 = vsub.f32 %v1097, %v1274
        %v1412 = vsub.f32 %v1102, %v1274
        %v1413 = vsub.f32 %v1107, %v1274
        %v1414 = vsub.f32 %v1112, %v1274
        %v1415 = vsub.f32 %v1117, %v1274
        %v1416 = vsub.f32 %v1122, %v1274
        %v1417 = vsub.f32 %v1127, %v1274
        %v1418 = vsub.f32 %v1132, %v1274
        %v1419 = vsub.f32 %v1137, %v1274
        %v1420 = vsub.f32 %v1142, %v1274
        %v1421 = vsub.f32 %v1147, %v1274
        %v1422 = vsub.f32 %v1152, %v1274
        %v1423 = vsub.f32 %v1157, %v1274
        %v1424 = vsub.f32 %v1162, %v1274
        %v1425 = vsub.f32 %v1167, %v1274
        %v1426 = vsub.f32 %v1172, %v1274
        %v1427 = vsub.f32 %v1177, %v1274
        %v1428 = vsub.f32 %v1182, %v1274
        %v1429 = vsub.f32 %v1187, %v1274
        %v1430 = vsub.f32 %v1192, %v1274
        %v1431 = vsub.f32 %v1197, %v1274
        %v1432 = vsub.f32 %v1202, %v1274
        %v1433 = vsub.f32 %v1207, %v1274
        %v1434 = vsub.f32 %v1212, %v1274
        %v1435 = vsub.f32 %v1217, %v1274
        %v1436 = vsub.f32 %v1222, %v1274
        %v1437 = vsub.f32 %v1227, %v1274
        %v1438 = vsub.f32 %v1232, %v1274
        %v1439 = vsub.f32 %v1237, %v1274
        %v1440 = vsub.f32 %v1242, %v1274
        %v1441 = vsub.f32 %v1247, %v1274
        %v1442 = vsub.f32 %v1252, %v1274
        %v1443 = vsub.f32 %v1257, %v1274
        %v1444 = vsub.f32 %v1262, %v1274
        %v1445 = vsub.f32 %v1267, %v1274
        %v1446 = vsub.f32 %v1272, %v1274
        %1447 = vset.pattern.permute.xlu0 2
        %1448 = vperm.xlu0 %1447, %v236
        %v1449 = vpop.permute.xlu0 %1448
        %1451 = vset.pattern.permute.xlu0 2
        %1452 = vperm.xlu0 %1451, %v237
        %v1453 = vpop.permute.xlu0 %1452
        %1455 = vset.pattern.permute.xlu0 2
        %1456 = vperm.xlu0 %1455, %v238
        %v1457 = vpop.permute.xlu0 %1456
        %1459 = vset.pattern.permute.xlu0 2
        %1460 = vperm.xlu0 %1459, %v239
        %v1461 = vpop.permute.xlu0 %1460
        %1463 = vset.pattern.permute.xlu0 2
        %1464 = vperm.xlu0 %1463, %v240
        %v1465 = vpop.permute.xlu0 %1464
        %1467 = vset.pattern.permute.xlu0 2
        %1468 = vperm.xlu0 %1467, %v241
        %v1469 = vpop.permute.xlu0 %1468
        %1471 = vset.pattern.permute.xlu0 2
        %1472 = vperm.xlu0 %1471, %v242
        %v1473 = vpop.permute.xlu0 %1472
        %1475 = vset.pattern.permute.xlu0 2
        %1476 = vperm.xlu0 %1475, %v243
        %v1477 = vpop.permute.xlu0 %1476
        %1479 = vset.pattern.permute.xlu0 2
        %1480 = vperm.xlu0 %1479, %v244
        %v1481 = vpop.permute.xlu0 %1480
        %1483 = vset.pattern.permute.xlu0 2
        %1484 = vperm.xlu0 %1483, %v245
        %v1485 = vpop.permute.xlu0 %1484
        %1487 = vset.pattern.permute.xlu0 2
        %1488 = vperm.xlu0 %1487, %v246
        %v1489 = vpop.permute.xlu0 %1488
        %1491 = vset.pattern.permute.xlu0 2
        %1492 = vperm.xlu0 %1491, %v247
        %v1493 = vpop.permute.xlu0 %1492
        %1495 = vset.pattern.permute.xlu0 2
        %1496 = vperm.xlu0 %1495, %v248
        %v1497 = vpop.permute.xlu0 %1496
        %1499 = vset.pattern.permute.xlu0 2
        %1500 = vperm.xlu0 %1499, %v249
        %v1501 = vpop.permute.xlu0 %1500
        %1503 = vset.pattern.permute.xlu0 2
        %1504 = vperm.xlu0 %1503, %v250
        %v1505 = vpop.permute.xlu0 %1504
        %1507 = vset.pattern.permute.xlu0 2
        %1508 = vperm.xlu0 %1507, %v251
        %v1509 = vpop.permute.xlu0 %1508
        %1511 = vset.pattern.permute.xlu0 2
        %1512 = vperm.xlu0 %1511, %v252
        %v1513 = vpop.permute.xlu0 %1512
        %1515 = vset.pattern.permute.xlu0 2
        %1516 = vperm.xlu0 %1515, %v253
        %v1517 = vpop.permute.xlu0 %1516
        %1519 = vset.pattern.permute.xlu0 2
        %1520 = vperm.xlu0 %1519, %v254
        %v1521 = vpop.permute.xlu0 %1520
        %1523 = vset.pattern.permute.xlu0 2
        %1524 = vperm.xlu0 %1523, %v255
        %v1525 = vpop.permute.xlu0 %1524
        %1527 = vset.pattern.permute.xlu0 2
        %1528 = vperm.xlu0 %1527, %v256
        %v1529 = vpop.permute.xlu0 %1528
        %1531 = vset.pattern.permute.xlu0 2
        %1532 = vperm.xlu0 %1531, %v257
        %v1533 = vpop.permute.xlu0 %1532
        %1535 = vset.pattern.permute.xlu0 2
        %1536 = vperm.xlu0 %1535, %v258
        %v1537 = vpop.permute.xlu0 %1536
        %1539 = vset.pattern.permute.xlu0 2
        %1540 = vperm.xlu0 %1539, %v259
        %v1541 = vpop.permute.xlu0 %1540
        %1543 = vset.pattern.permute.xlu0 2
        %1544 = vperm.xlu0 %1543, %v260
        %v1545 = vpop.permute.xlu0 %1544
        %1547 = vset.pattern.permute.xlu0 2
        %1548 = vperm.xlu0 %1547, %v261
        %v1549 = vpop.permute.xlu0 %1548
        %1551 = vset.pattern.permute.xlu0 2
        %1552 = vperm.xlu0 %1551, %v262
        %v1553 = vpop.permute.xlu0 %1552
        %1555 = vset.pattern.permute.xlu0 2
        %1556 = vperm.xlu0 %1555, %v263
        %v1557 = vpop.permute.xlu0 %1556
        %1559 = vset.pattern.permute.xlu0 2
        %1560 = vperm.xlu0 %1559, %v264
        %v1561 = vpop.permute.xlu0 %1560
        %1563 = vset.pattern.permute.xlu0 2
        %1564 = vperm.xlu0 %1563, %v265
        %v1565 = vpop.permute.xlu0 %1564
        %1567 = vset.pattern.permute.xlu0 2
        %1568 = vperm.xlu0 %1567, %v266
        %v1569 = vpop.permute.xlu0 %1568
        %1571 = vset.pattern.permute.xlu0 2
        %1572 = vperm.xlu0 %1571, %v267
        %v1573 = vpop.permute.xlu0 %1572
        %1575 = vset.pattern.permute.xlu0 2
        %1576 = vperm.xlu0 %1575, %v268
        %v1577 = vpop.permute.xlu0 %1576
        %1579 = vset.pattern.permute.xlu0 2
        %1580 = vperm.xlu0 %1579, %v269
        %v1581 = vpop.permute.xlu0 %1580
        %1583 = vset.pattern.permute.xlu0 2
        %1584 = vperm.xlu0 %1583, %v270
        %v1585 = vpop.permute.xlu0 %1584
        %1587 = vset.pattern.permute.xlu0 2
        %1588 = vperm.xlu0 %1587, %v271
        %v1589 = vpop.permute.xlu0 %1588
        %1591 = vset.pattern.permute.xlu0 2
        %1592 = vperm.xlu0 %1591, %v272
        %v1593 = vpop.permute.xlu0 %1592
        %1595 = vset.pattern.permute.xlu0 2
        %1596 = vperm.xlu0 %1595, %v273
        %v1597 = vpop.permute.xlu0 %1596
        %1599 = vset.pattern.permute.xlu0 2
        %1600 = vperm.xlu0 %1599, %v274
        %v1601 = vpop.permute.xlu0 %1600
        %1603 = vset.pattern.permute.xlu0 2
        %1604 = vperm.xlu0 %1603, %v275
        %v1605 = vpop.permute.xlu0 %1604
        %1607 = vset.pattern.permute.xlu0 2
        %1608 = vperm.xlu0 %1607, %v276
        %v1609 = vpop.permute.xlu0 %1608
        %1611 = vset.pattern.permute.xlu0 2
        %1612 = vperm.xlu0 %1611, %v277
        %v1613 = vpop.permute.xlu0 %1612
        %1615 = vset.pattern.permute.xlu0 2
        %1616 = vperm.xlu0 %1615, %v278
        %v1617 = vpop.permute.xlu0 %1616
        %1619 = vset.pattern.permute.xlu0 2
        %1620 = vperm.xlu0 %1619, %v279
        %v1621 = vpop.permute.xlu0 %1620
        %1623 = vset.pattern.permute.xlu0 2
        %1624 = vperm.xlu0 %1623, %v280
        %v1625 = vpop.permute.xlu0 %1624
        %1627 = vset.pattern.permute.xlu0 2
        %1628 = vperm.xlu0 %1627, %v281
        %v1629 = vpop.permute.xlu0 %1628
        %1631 = vset.pattern.permute.xlu0 2
        %1632 = vperm.xlu0 %1631, %v282
        %v1633 = vpop.permute.xlu0 %1632
        %1635 = vset.pattern.permute.xlu0 2
        %1636 = vperm.xlu0 %1635, %v283
        %v1637 = vpop.permute.xlu0 %1636
        %1639 = vset.pattern.permute.xlu0 2
        %1640 = vperm.xlu0 %1639, %v284
        %v1641 = vpop.permute.xlu0 %1640
        %1643 = vset.pattern.permute.xlu0 2
        %1644 = vperm.xlu0 %1643, %v285
        %v1645 = vpop.permute.xlu0 %1644
        %1647 = vset.pattern.permute.xlu0 2
        %1648 = vperm.xlu0 %1647, %v286
        %v1649 = vpop.permute.xlu0 %1648
        %1651 = vset.pattern.permute.xlu0 2
        %1652 = vperm.xlu0 %1651, %v287
        %v1653 = vpop.permute.xlu0 %1652
        %1655 = vset.pattern.permute.xlu0 2
        %1656 = vperm.xlu0 %1655, %v288
        %v1657 = vpop.permute.xlu0 %1656
        %1659 = vset.pattern.permute.xlu0 2
        %1660 = vperm.xlu0 %1659, %v289
        %v1661 = vpop.permute.xlu0 %1660
        %1663 = vset.pattern.permute.xlu0 2
        %1664 = vperm.xlu0 %1663, %v290
        %v1665 = vpop.permute.xlu0 %1664
        %1667 = vset.pattern.permute.xlu0 2
        %1668 = vperm.xlu0 %1667, %v291
        %v1669 = vpop.permute.xlu0 %1668
        %1671 = vset.pattern.permute.xlu0 2
        %1672 = vperm.xlu0 %1671, %v292
        %v1673 = vpop.permute.xlu0 %1672
        %1675 = vset.pattern.permute.xlu0 2
        %1676 = vperm.xlu0 %1675, %v293
        %v1677 = vpop.permute.xlu0 %1676
        %1679 = vset.pattern.permute.xlu0 2
        %1680 = vperm.xlu0 %1679, %v294
        %v1681 = vpop.permute.xlu0 %1680
        %1683 = vset.pattern.permute.xlu0 2
        %1684 = vperm.xlu0 %1683, %v295
        %v1685 = vpop.permute.xlu0 %1684
        %1687 = vset.pattern.permute.xlu0 2
        %1688 = vperm.xlu0 %1687, %v296
        %v1689 = vpop.permute.xlu0 %1688
        %1691 = vset.pattern.permute.xlu0 2
        %1692 = vperm.xlu0 %1691, %v297
        %v1693 = vpop.permute.xlu0 %1692
        %1695 = vset.pattern.permute.xlu0 2
        %1696 = vperm.xlu0 %1695, %v298
        %v1697 = vpop.permute.xlu0 %1696
        %1699 = vset.pattern.permute.xlu0 2
        %1700 = vperm.xlu0 %1699, %v299
        %v1701 = vpop.permute.xlu0 %1700
        %1703 = vset.pattern.permute.xlu0 2
        %1704 = vperm.xlu0 %1703, %v300
        %v1705 = vpop.permute.xlu0 %1704
        %1707 = vset.pattern.permute.xlu0 2
        %1708 = vperm.xlu0 %1707, %v301
        %v1709 = vpop.permute.xlu0 %1708
        %1711 = vset.pattern.permute.xlu0 2
        %1712 = vperm.xlu0 %1711, %v302
        %v1713 = vpop.permute.xlu0 %1712
        %1715 = vset.pattern.permute.xlu0 2
        %1716 = vperm.xlu0 %1715, %v303
        %v1717 = vpop.permute.xlu0 %1716
        %1719 = vset.pattern.permute.xlu0 2
        %1720 = vperm.xlu0 %1719, %v304
        %v1721 = vpop.permute.xlu0 %1720
        %1723 = vset.pattern.permute.xlu0 2
        %1724 = vperm.xlu0 %1723, %v305
        %v1725 = vpop.permute.xlu0 %1724
        %1727 = vset.pattern.permute.xlu0 2
        %1728 = vperm.xlu0 %1727, %v306
        %v1729 = vpop.permute.xlu0 %1728
        %1731 = vset.pattern.permute.xlu0 2
        %1732 = vperm.xlu0 %1731, %v307
        %v1733 = vpop.permute.xlu0 %1732
        %1735 = vset.pattern.permute.xlu0 2
        %1736 = vperm.xlu0 %1735, %v308
        %v1737 = vpop.permute.xlu0 %1736
        %1739 = vset.pattern.permute.xlu0 2
        %1740 = vperm.xlu0 %1739, %v309
        %v1741 = vpop.permute.xlu0 %1740
        %1743 = vset.pattern.permute.xlu0 2
        %1744 = vperm.xlu0 %1743, %v310
        %v1745 = vpop.permute.xlu0 %1744
        %1747 = vset.pattern.permute.xlu0 2
        %1748 = vperm.xlu0 %1747, %v311
        %v1749 = vpop.permute.xlu0 %1748
        %1751 = vset.pattern.permute.xlu0 2
        %1752 = vperm.xlu0 %1751, %v312
        %v1753 = vpop.permute.xlu0 %1752
        %1755 = vset.pattern.permute.xlu0 2
        %1756 = vperm.xlu0 %1755, %v313
        %v1757 = vpop.permute.xlu0 %1756
        %1759 = vset.pattern.permute.xlu0 2
        %1760 = vperm.xlu0 %1759, %v314
        %v1761 = vpop.permute.xlu0 %1760
        %1763 = vset.pattern.permute.xlu0 2
        %1764 = vperm.xlu0 %1763, %v315
        %v1765 = vpop.permute.xlu0 %1764
        %1767 = vset.pattern.permute.xlu0 2
        %1768 = vperm.xlu0 %1767, %v316
        %v1769 = vpop.permute.xlu0 %1768
        %1771 = vset.pattern.permute.xlu0 2
        %1772 = vperm.xlu0 %1771, %v317
        %v1773 = vpop.permute.xlu0 %1772
        %1775 = vset.pattern.permute.xlu0 2
        %1776 = vperm.xlu0 %1775, %v318
        %v1777 = vpop.permute.xlu0 %1776
        %1779 = vset.pattern.permute.xlu0 2
        %1780 = vperm.xlu0 %1779, %v319
        %v1781 = vpop.permute.xlu0 %1780
        %1783 = vset.pattern.permute.xlu0 2
        %1784 = vperm.xlu0 %1783, %v320
        %v1785 = vpop.permute.xlu0 %1784
        %1787 = vset.pattern.permute.xlu0 2
        %1788 = vperm.xlu0 %1787, %v321
        %v1789 = vpop.permute.xlu0 %1788
        %1791 = vset.pattern.permute.xlu0 2
        %1792 = vperm.xlu0 %1791, %v322
        %v1793 = vpop.permute.xlu0 %1792
        %1795 = vset.pattern.permute.xlu0 2
        %1796 = vperm.xlu0 %1795, %v323
        %v1797 = vpop.permute.xlu0 %1796
        %1799 = vset.pattern.permute.xlu0 2
        %1800 = vperm.xlu0 %1799, %v324
        %v1801 = vpop.permute.xlu0 %1800
        %1803 = vset.pattern.permute.xlu0 2
        %1804 = vperm.xlu0 %1803, %v325
        %v1805 = vpop.permute.xlu0 %1804
        %1807 = vset.pattern.permute.xlu0 2
        %1808 = vperm.xlu0 %1807, %v326
        %v1809 = vpop.permute.xlu0 %1808
        %1811 = vset.pattern.permute.xlu0 2
        %1812 = vperm.xlu0 %1811, %v327
        %v1813 = vpop.permute.xlu0 %1812
        %1815 = vset.pattern.permute.xlu0 2
        %1816 = vperm.xlu0 %1815, %v328
        %v1817 = vpop.permute.xlu0 %1816
        %1819 = vset.pattern.permute.xlu0 2
        %1820 = vperm.xlu0 %1819, %v329
        %v1821 = vpop.permute.xlu0 %1820
        %1823 = vset.pattern.permute.xlu0 2
        %1824 = vperm.xlu0 %1823, %v330
        %v1825 = vpop.permute.xlu0 %1824
        %1827 = vset.pattern.permute.xlu0 2
        %1828 = vperm.xlu0 %1827, %v331
        %v1829 = vpop.permute.xlu0 %1828
        %1831 = vset.pattern.permute.xlu0 2
        %1832 = vperm.xlu0 %1831, %v332
        %v1833 = vpop.permute.xlu0 %1832
        %1835 = vset.pattern.permute.xlu0 2
        %1836 = vperm.xlu0 %1835, %v333
        %v1837 = vpop.permute.xlu0 %1836
        %1839 = vset.pattern.permute.xlu0 2
        %1840 = vperm.xlu0 %1839, %v334
        %v1841 = vpop.permute.xlu0 %1840
        %1843 = vset.pattern.permute.xlu0 2
        %1844 = vperm.xlu0 %1843, %v335
        %v1845 = vpop.permute.xlu0 %1844
        %1847 = vset.pattern.permute.xlu0 2
        %1848 = vperm.xlu0 %1847, %v336
        %v1849 = vpop.permute.xlu0 %1848
        %1851 = vset.pattern.permute.xlu0 2
        %1852 = vperm.xlu0 %1851, %v337
        %v1853 = vpop.permute.xlu0 %1852
        %1855 = vset.pattern.permute.xlu0 2
        %1856 = vperm.xlu0 %1855, %v338
        %v1857 = vpop.permute.xlu0 %1856
        %1859 = vset.pattern.permute.xlu0 2
        %1860 = vperm.xlu0 %1859, %v339
        %v1861 = vpop.permute.xlu0 %1860
        %1863 = vset.pattern.permute.xlu0 2
        %1864 = vperm.xlu0 %1863, %v340
        %v1865 = vpop.permute.xlu0 %1864
        %1867 = vset.pattern.permute.xlu0 2
        %1868 = vperm.xlu0 %1867, %v341
        %v1869 = vpop.permute.xlu0 %1868
        %1871 = vset.pattern.permute.xlu0 2
        %1872 = vperm.xlu0 %1871, %v342
        %v1873 = vpop.permute.xlu0 %1872
        %1875 = vset.pattern.permute.xlu0 2
        %1876 = vperm.xlu0 %1875, %v343
        %v1877 = vpop.permute.xlu0 %1876
        %1879 = vset.pattern.permute.xlu0 2
        %1880 = vperm.xlu0 %1879, %v344
        %v1881 = vpop.permute.xlu0 %1880
        %1883 = vset.pattern.permute.xlu0 2
        %1884 = vperm.xlu0 %1883, %v345
        %v1885 = vpop.permute.xlu0 %1884
        %1887 = vset.pattern.permute.xlu0 2
        %1888 = vperm.xlu0 %1887, %v346
        %v1889 = vpop.permute.xlu0 %1888
        %1891 = vset.pattern.permute.xlu0 2
        %1892 = vperm.xlu0 %1891, %v347
        %v1893 = vpop.permute.xlu0 %1892
        %1895 = vset.pattern.permute.xlu0 2
        %1896 = vperm.xlu0 %1895, %v348
        %v1897 = vpop.permute.xlu0 %1896
        %1899 = vset.pattern.permute.xlu0 2
        %1900 = vperm.xlu0 %1899, %v349
        %v1901 = vpop.permute.xlu0 %1900
        %1903 = vset.pattern.permute.xlu0 2
        %1904 = vperm.xlu0 %1903, %v350
        %v1905 = vpop.permute.xlu0 %1904
        %1907 = vset.pattern.permute.xlu0 2
        %1908 = vperm.xlu0 %1907, %v351
        %v1909 = vpop.permute.xlu0 %1908
        %1911 = vset.pattern.permute.xlu0 2
        %1912 = vperm.xlu0 %1911, %v352
        %v1913 = vpop.permute.xlu0 %1912
        %1915 = vset.pattern.permute.xlu0 2
        %1916 = vperm.xlu0 %1915, %v353
        %v1917 = vpop.permute.xlu0 %1916
        %1919 = vset.pattern.permute.xlu0 2
        %1920 = vperm.xlu0 %1919, %v354
        %v1921 = vpop.permute.xlu0 %1920
        %1923 = vset.pattern.permute.xlu0 2
        %1924 = vperm.xlu0 %1923, %v355
        %v1925 = vpop.permute.xlu0 %1924
        %1927 = vset.pattern.permute.xlu0 2
        %1928 = vperm.xlu0 %1927, %v356
        %v1929 = vpop.permute.xlu0 %1928
        %1931 = vset.pattern.permute.xlu0 2
        %1932 = vperm.xlu0 %1931, %v357
        %v1933 = vpop.permute.xlu0 %1932
        %1935 = vset.pattern.permute.xlu0 2
        %1936 = vperm.xlu0 %1935, %v358
        %v1937 = vpop.permute.xlu0 %1936
        %1939 = vset.pattern.permute.xlu0 2
        %1940 = vperm.xlu0 %1939, %v359
        %v1941 = vpop.permute.xlu0 %1940
        %1943 = vset.pattern.permute.xlu0 2
        %1944 = vperm.xlu0 %1943, %v360
        %v1945 = vpop.permute.xlu0 %1944
        %1947 = vset.pattern.permute.xlu0 2
        %1948 = vperm.xlu0 %1947, %v361
        %v1949 = vpop.permute.xlu0 %1948
        %1951 = vset.pattern.permute.xlu0 2
        %1952 = vperm.xlu0 %1951, %v362
        %v1953 = vpop.permute.xlu0 %1952
        %1955 = vset.pattern.permute.xlu0 2
        %1956 = vperm.xlu0 %1955, %v363
        %v1957 = vpop.permute.xlu0 %1956
        %1959 = vset.pattern.permute.xlu0 2
        %1960 = vperm.xlu0 %1959, %v364
        %v1961 = vpop.permute.xlu0 %1960
        %1963 = vset.pattern.permute.xlu0 2
        %1964 = vperm.xlu0 %1963, %v365
        %v1965 = vpop.permute.xlu0 %1964
        %1967 = vset.pattern.permute.xlu0 2
        %1968 = vperm.xlu0 %1967, %v366
        %v1969 = vpop.permute.xlu0 %1968
        %1971 = vset.pattern.permute.xlu0 2
        %1972 = vperm.xlu0 %1971, %v367
        %v1973 = vpop.permute.xlu0 %1972
        %1975 = vset.pattern.permute.xlu0 2
        %1976 = vperm.xlu0 %1975, %v368
        %v1977 = vpop.permute.xlu0 %1976
        %1979 = vset.pattern.permute.xlu0 2
        %1980 = vperm.xlu0 %1979, %v369
        %v1981 = vpop.permute.xlu0 %1980
        %1983 = vset.pattern.permute.xlu0 2
        %1984 = vperm.xlu0 %1983, %v370
        %v1985 = vpop.permute.xlu0 %1984
        %1987 = vset.pattern.permute.xlu0 2
        %1988 = vperm.xlu0 %1987, %v371
        %v1989 = vpop.permute.xlu0 %1988
        %1991 = vset.pattern.permute.xlu0 2
        %1992 = vperm.xlu0 %1991, %v372
        %v1993 = vpop.permute.xlu0 %1992
        %1995 = vset.pattern.permute.xlu0 2
        %1996 = vperm.xlu0 %1995, %v373
        %v1997 = vpop.permute.xlu0 %1996
        %1999 = vset.pattern.permute.xlu0 2
        %2000 = vperm.xlu0 %1999, %v374
        %v2001 = vpop.permute.xlu0 %2000
        %2003 = vset.pattern.permute.xlu0 2
        %2004 = vperm.xlu0 %2003, %v375
        %v2005 = vpop.permute.xlu0 %2004
        %2007 = vset.pattern.permute.xlu0 2
        %2008 = vperm.xlu0 %2007, %v376
        %v2009 = vpop.permute.xlu0 %2008
        %2011 = vset.pattern.permute.xlu0 2
        %2012 = vperm.xlu0 %2011, %v377
        %v2013 = vpop.permute.xlu0 %2012
        %2015 = vset.pattern.permute.xlu0 2
        %2016 = vperm.xlu0 %2015, %v378
        %v2017 = vpop.permute.xlu0 %2016
        %2019 = vset.pattern.permute.xlu0 2
        %2020 = vperm.xlu0 %2019, %v379
        %v2021 = vpop.permute.xlu0 %2020
        %2023 = vset.pattern.permute.xlu0 2
        %2024 = vperm.xlu0 %2023, %v380
        %v2025 = vpop.permute.xlu0 %2024
        %2027 = vset.pattern.permute.xlu0 2
        %2028 = vperm.xlu0 %2027, %v381
        %v2029 = vpop.permute.xlu0 %2028
        %2031 = vset.pattern.permute.xlu0 2
        %2032 = vperm.xlu0 %2031, %v382
        %v2033 = vpop.permute.xlu0 %2032
        %2035 = vset.pattern.permute.xlu0 2
        %2036 = vperm.xlu0 %2035, %v383
        %v2037 = vpop.permute.xlu0 %2036
        %2039 = vset.pattern.permute.xlu0 2
        %2040 = vperm.xlu0 %2039, %v384
        %v2041 = vpop.permute.xlu0 %2040
        %2043 = vset.pattern.permute.xlu0 2
        %2044 = vperm.xlu0 %2043, %v385
        %v2045 = vpop.permute.xlu0 %2044
        %2047 = vset.pattern.permute.xlu0 2
        %2048 = vperm.xlu0 %2047, %v386
        %v2049 = vpop.permute.xlu0 %2048
        %2051 = vset.pattern.permute.xlu0 2
        %2052 = vperm.xlu0 %2051, %v387
        %v2053 = vpop.permute.xlu0 %2052
        %2055 = vset.pattern.permute.xlu0 2
        %2056 = vperm.xlu0 %2055, %v388
        %v2057 = vpop.permute.xlu0 %2056
        %2059 = vset.pattern.permute.xlu0 2
        %2060 = vperm.xlu0 %2059, %v389
        %v2061 = vpop.permute.xlu0 %2060
        %2063 = vset.pattern.permute.xlu0 2
        %2064 = vperm.xlu0 %2063, %v390
        %v2065 = vpop.permute.xlu0 %2064
        %2067 = vset.pattern.permute.xlu0 2
        %2068 = vperm.xlu0 %2067, %v391
        %v2069 = vpop.permute.xlu0 %2068
        %2071 = vset.pattern.permute.xlu0 2
        %2072 = vperm.xlu0 %2071, %v392
        %v2073 = vpop.permute.xlu0 %2072
        %2075 = vset.pattern.permute.xlu0 2
        %2076 = vperm.xlu0 %2075, %v393
        %v2077 = vpop.permute.xlu0 %2076
        %2079 = vset.pattern.permute.xlu0 2
        %2080 = vperm.xlu0 %2079, %v394
        %v2081 = vpop.permute.xlu0 %2080
        %2083 = vset.pattern.permute.xlu0 2
        %2084 = vperm.xlu0 %2083, %v395
        %v2085 = vpop.permute.xlu0 %2084
        %2087 = vset.pattern.permute.xlu0 2
        %2088 = vperm.xlu0 %2087, %v396
        %v2089 = vpop.permute.xlu0 %2088
        %2091 = vset.pattern.permute.xlu0 2
        %2092 = vperm.xlu0 %2091, %v397
        %v2093 = vpop.permute.xlu0 %2092
        %2095 = vset.pattern.permute.xlu0 2
        %2096 = vperm.xlu0 %2095, %v398
        %v2097 = vpop.permute.xlu0 %2096
        %2099 = vset.pattern.permute.xlu0 2
        %2100 = vperm.xlu0 %2099, %v399
        %v2101 = vpop.permute.xlu0 %2100
        %2103 = vset.pattern.permute.xlu0 2
        %2104 = vperm.xlu0 %2103, %v400
        %v2105 = vpop.permute.xlu0 %2104
        %2107 = vset.pattern.permute.xlu0 2
        %2108 = vperm.xlu0 %2107, %v401
        %v2109 = vpop.permute.xlu0 %2108
        %2111 = vset.pattern.permute.xlu0 2
        %2112 = vperm.xlu0 %2111, %v402
        %v2113 = vpop.permute.xlu0 %2112
        %2115 = vset.pattern.permute.xlu0 2
        %2116 = vperm.xlu0 %2115, %v403
        %v2117 = vpop.permute.xlu0 %2116
        %2119 = vset.pattern.permute.xlu0 2
        %2120 = vperm.xlu0 %2119, %v404
        %v2121 = vpop.permute.xlu0 %2120
        %2123 = vset.pattern.permute.xlu0 2
        %2124 = vperm.xlu0 %2123, %v405
        %v2125 = vpop.permute.xlu0 %2124
        %2127 = vset.pattern.permute.xlu0 2
        %2128 = vperm.xlu0 %2127, %v406
        %v2129 = vpop.permute.xlu0 %2128
        %2131 = vset.pattern.permute.xlu0 2
        %2132 = vperm.xlu0 %2131, %v407
        %v2133 = vpop.permute.xlu0 %2132
        %v2135 = vmul.f32 %v1275, %v1449
        %v2136 = vmul.f32 %v1276, %v1453
        %v2137 = vmul.f32 %v1277, %v1457
        %v2138 = vmul.f32 %v1278, %v1461
        %v2139 = vmul.f32 %v1279, %v1465
        %v2140 = vmul.f32 %v1280, %v1469
        %v2141 = vmul.f32 %v1281, %v1473
        %v2142 = vmul.f32 %v1282, %v1477
        %v2143 = vmul.f32 %v1283, %v1481
        %v2144 = vmul.f32 %v1284, %v1485
        %v2145 = vmul.f32 %v1285, %v1489
        %v2146 = vmul.f32 %v1286, %v1493
        %v2147 = vmul.f32 %v1287, %v1497
        %v2148 = vmul.f32 %v1288, %v1501
        %v2149 = vmul.f32 %v1289, %v1505
        %v2150 = vmul.f32 %v1290, %v1509
        %v2151 = vmul.f32 %v1291, %v1513
        %v2152 = vmul.f32 %v1292, %v1517
        %v2153 = vmul.f32 %v1293, %v1521
        %v2154 = vmul.f32 %v1294, %v1525
        %v2155 = vmul.f32 %v1295, %v1529
        %v2156 = vmul.f32 %v1296, %v1533
        %v2157 = vmul.f32 %v1297, %v1537
        %v2158 = vmul.f32 %v1298, %v1541
        %v2159 = vmul.f32 %v1299, %v1545
        %v2160 = vmul.f32 %v1300, %v1549
        %v2161 = vmul.f32 %v1301, %v1553
        %v2162 = vmul.f32 %v1302, %v1557
        %v2163 = vmul.f32 %v1303, %v1561
        %v2164 = vmul.f32 %v1304, %v1565
        %v2165 = vmul.f32 %v1305, %v1569
        %v2166 = vmul.f32 %v1306, %v1573
        %v2167 = vmul.f32 %v1307, %v1577
        %v2168 = vmul.f32 %v1308, %v1581
        %v2169 = vmul.f32 %v1309, %v1585
        %v2170 = vmul.f32 %v1310, %v1589
        %v2171 = vmul.f32 %v1311, %v1593
        %v2172 = vmul.f32 %v1312, %v1597
        %v2173 = vmul.f32 %v1313, %v1601
        %v2174 = vmul.f32 %v1314, %v1605
        %v2175 = vmul.f32 %v1315, %v1609
        %v2176 = vmul.f32 %v1316, %v1613
        %v2177 = vmul.f32 %v1317, %v1617
        %v2178 = vmul.f32 %v1318, %v1621
        %v2179 = vmul.f32 %v1319, %v1625
        %v2180 = vmul.f32 %v1320, %v1629
        %v2181 = vmul.f32 %v1321, %v1633
        %v2182 = vmul.f32 %v1322, %v1637
        %v2183 = vmul.f32 %v1323, %v1641
        %v2184 = vmul.f32 %v1324, %v1645
        %v2185 = vmul.f32 %v1325, %v1649
        %v2186 = vmul.f32 %v1326, %v1653
        %v2187 = vmul.f32 %v1327, %v1657
        %v2188 = vmul.f32 %v1328, %v1661
        %v2189 = vmul.f32 %v1329, %v1665
        %v2190 = vmul.f32 %v1330, %v1669
        %v2191 = vmul.f32 %v1331, %v1673
        %v2192 = vmul.f32 %v1332, %v1677
        %v2193 = vmul.f32 %v1333, %v1681
        %v2194 = vmul.f32 %v1334, %v1685
        %v2195 = vmul.f32 %v1335, %v1689
        %v2196 = vmul.f32 %v1336, %v1693
        %v2197 = vmul.f32 %v1337, %v1697
        %v2198 = vmul.f32 %v1338, %v1701
        %v2199 = vmul.f32 %v1339, %v1705
        %v2200 = vmul.f32 %v1340, %v1709
        %v2201 = vmul.f32 %v1341, %v1713
        %v2202 = vmul.f32 %v1342, %v1717
        %v2203 = vmul.f32 %v1343, %v1721
        %v2204 = vmul.f32 %v1344, %v1725
        %v2205 = vmul.f32 %v1345, %v1729
        %v2206 = vmul.f32 %v1346, %v1733
        %v2207 = vmul.f32 %v1347, %v1737
        %v2208 = vmul.f32 %v1348, %v1741
        %v2209 = vmul.f32 %v1349, %v1745
        %v2210 = vmul.f32 %v1350, %v1749
        %v2211 = vmul.f32 %v1351, %v1753
        %v2212 = vmul.f32 %v1352, %v1757
        %v2213 = vmul.f32 %v1353, %v1761
        %v2214 = vmul.f32 %v1354, %v1765
        %v2215 = vmul.f32 %v1355, %v1769
        %v2216 = vmul.f32 %v1356, %v1773
        %v2217 = vmul.f32 %v1357, %v1777
        %v2218 = vmul.f32 %v1358, %v1781
        %v2219 = vmul.f32 %v1359, %v1785
        %v2220 = vmul.f32 %v1360, %v1789
        %v2221 = vmul.f32 %v1361, %v1793
        %v2222 = vmul.f32 %v1362, %v1797
        %v2223 = vmul.f32 %v1363, %v1801
        %v2224 = vmul.f32 %v1364, %v1805
        %v2225 = vmul.f32 %v1365, %v1809
        %v2226 = vmul.f32 %v1366, %v1813
        %v2227 = vmul.f32 %v1367, %v1817
        %v2228 = vmul.f32 %v1368, %v1821
        %v2229 = vmul.f32 %v1369, %v1825
        %v2230 = vmul.f32 %v1370, %v1829
        %v2231 = vmul.f32 %v1371, %v1833
        %v2232 = vmul.f32 %v1372, %v1837
        %v2233 = vmul.f32 %v1373, %v1841
        %v2234 = vmul.f32 %v1374, %v1845
        %v2235 = vmul.f32 %v1375, %v1849
        %v2236 = vmul.f32 %v1376, %v1853
        %v2237 = vmul.f32 %v1377, %v1857
        %v2238 = vmul.f32 %v1378, %v1861
        %v2239 = vmul.f32 %v1379, %v1865
        %v2240 = vmul.f32 %v1380, %v1869
        %v2241 = vmul.f32 %v1381, %v1873
        %v2242 = vmul.f32 %v1382, %v1877
        %v2243 = vmul.f32 %v1383, %v1881
        %v2244 = vmul.f32 %v1384, %v1885
        %v2245 = vmul.f32 %v1385, %v1889
        %v2246 = vmul.f32 %v1386, %v1893
        %v2247 = vmul.f32 %v1387, %v1897
        %v2248 = vmul.f32 %v1388, %v1901
        %v2249 = vmul.f32 %v1389, %v1905
        %v2250 = vmul.f32 %v1390, %v1909
        %v2251 = vmul.f32 %v1391, %v1913
        %v2252 = vmul.f32 %v1392, %v1917
        %v2253 = vmul.f32 %v1393, %v1921
        %v2254 = vmul.f32 %v1394, %v1925
        %v2255 = vmul.f32 %v1395, %v1929
        %v2256 = vmul.f32 %v1396, %v1933
        %v2257 = vmul.f32 %v1397, %v1937
        %v2258 = vmul.f32 %v1398, %v1941
        %v2259 = vmul.f32 %v1399, %v1945
        %v2260 = vmul.f32 %v1400, %v1949
        %v2261 = vmul.f32 %v1401, %v1953
        %v2262 = vmul.f32 %v1402, %v1957
        %v2263 = vmul.f32 %v1403, %v1961
        %v2264 = vmul.f32 %v1404, %v1965
        %v2265 = vmul.f32 %v1405, %v1969
        %v2266 = vmul.f32 %v1406, %v1973
        %v2267 = vmul.f32 %v1407, %v1977
        %v2268 = vmul.f32 %v1408, %v1981
        %v2269 = vmul.f32 %v1409, %v1985
        %v2270 = vmul.f32 %v1410, %v1989
        %v2271 = vmul.f32 %v1411, %v1993
        %v2272 = vmul.f32 %v1412, %v1997
        %v2273 = vmul.f32 %v1413, %v2001
        %v2274 = vmul.f32 %v1414, %v2005
        %v2275 = vmul.f32 %v1415, %v2009
        %v2276 = vmul.f32 %v1416, %v2013
        %v2277 = vmul.f32 %v1417, %v2017
        %v2278 = vmul.f32 %v1418, %v2021
        %v2279 = vmul.f32 %v1419, %v2025
        %v2280 = vmul.f32 %v1420, %v2029
        %v2281 = vmul.f32 %v1421, %v2033
        %v2282 = vmul.f32 %v1422, %v2037
        %v2283 = vmul.f32 %v1423, %v2041
        %v2284 = vmul.f32 %v1424, %v2045
        %v2285 = vmul.f32 %v1425, %v2049
        %v2286 = vmul.f32 %v1426, %v2053
        %v2287 = vmul.f32 %v1427, %v2057
        %v2288 = vmul.f32 %v1428, %v2061
        %v2289 = vmul.f32 %v1429, %v2065
        %v2290 = vmul.f32 %v1430, %v2069
        %v2291 = vmul.f32 %v1431, %v2073
        %v2292 = vmul.f32 %v1432, %v2077
        %v2293 = vmul.f32 %v1433, %v2081
        %v2294 = vmul.f32 %v1434, %v2085
        %v2295 = vmul.f32 %v1435, %v2089
        %v2296 = vmul.f32 %v1436, %v2093
        %v2297 = vmul.f32 %v1437, %v2097
        %v2298 = vmul.f32 %v1438, %v2101
        %v2299 = vmul.f32 %v1439, %v2105
        %v2300 = vmul.f32 %v1440, %v2109
        %v2301 = vmul.f32 %v1441, %v2113
        %v2302 = vmul.f32 %v1442, %v2117
        %v2303 = vmul.f32 %v1443, %v2121
        %v2304 = vmul.f32 %v1444, %v2125
        %v2305 = vmul.f32 %v1445, %v2129
        %v2306 = vmul.f32 %v1446, %v2133
        %v2307 = vperm.slane %v410, 0
        %v2308 = vsub.f32 %v2135, %v2307
        %v2309 = vsub.f32 %v2136, %v2307
        %v2310 = vsub.f32 %v2137, %v2307
        %v2311 = vsub.f32 %v2138, %v2307
        %v2312 = vsub.f32 %v2139, %v2307
        %v2313 = vsub.f32 %v2140, %v2307
        %v2314 = vsub.f32 %v2141, %v2307
        %v2315 = vsub.f32 %v2142, %v2307
        %v2316 = vsub.f32 %v2143, %v2307
        %v2317 = vsub.f32 %v2144, %v2307
        %v2318 = vsub.f32 %v2145, %v2307
        %v2319 = vsub.f32 %v2146, %v2307
        %v2320 = vsub.f32 %v2147, %v2307
        %v2321 = vsub.f32 %v2148, %v2307
        %v2322 = vsub.f32 %v2149, %v2307
        %v2323 = vsub.f32 %v2150, %v2307
        %v2324 = vsub.f32 %v2151, %v2307
        %v2325 = vsub.f32 %v2152, %v2307
        %v2326 = vsub.f32 %v2153, %v2307
        %v2327 = vsub.f32 %v2154, %v2307
        %v2328 = vsub.f32 %v2155, %v2307
        %v2329 = vsub.f32 %v2156, %v2307
        %v2330 = vsub.f32 %v2157, %v2307
        %v2331 = vsub.f32 %v2158, %v2307
        %v2332 = vsub.f32 %v2159, %v2307
        %v2333 = vsub.f32 %v2160, %v2307
        %v2334 = vsub.f32 %v2161, %v2307
        %v2335 = vsub.f32 %v2162, %v2307
        %v2336 = vsub.f32 %v2163, %v2307
        %v2337 = vsub.f32 %v2164, %v2307
        %v2338 = vsub.f32 %v2165, %v2307
        %v2339 = vsub.f32 %v2166, %v2307
        %v2340 = vsub.f32 %v2167, %v2307
        %v2341 = vsub.f32 %v2168, %v2307
        %v2342 = vsub.f32 %v2169, %v2307
        %v2343 = vsub.f32 %v2170, %v2307
        %v2344 = vsub.f32 %v2171, %v2307
        %v2345 = vsub.f32 %v2172, %v2307
        %v2346 = vsub.f32 %v2173, %v2307
        %v2347 = vsub.f32 %v2174, %v2307
        %v2348 = vsub.f32 %v2175, %v2307
        %v2349 = vsub.f32 %v2176, %v2307
        %v2350 = vsub.f32 %v2177, %v2307
        %v2351 = vsub.f32 %v2178, %v2307
        %v2352 = vsub.f32 %v2179, %v2307
        %v2353 = vsub.f32 %v2180, %v2307
        %v2354 = vsub.f32 %v2181, %v2307
        %v2355 = vsub.f32 %v2182, %v2307
        %v2356 = vsub.f32 %v2183, %v2307
        %v2357 = vsub.f32 %v2184, %v2307
        %v2358 = vsub.f32 %v2185, %v2307
        %v2359 = vsub.f32 %v2186, %v2307
        %v2360 = vsub.f32 %v2187, %v2307
        %v2361 = vsub.f32 %v2188, %v2307
        %v2362 = vsub.f32 %v2189, %v2307
        %v2363 = vsub.f32 %v2190, %v2307
        %v2364 = vsub.f32 %v2191, %v2307
        %v2365 = vsub.f32 %v2192, %v2307
        %v2366 = vsub.f32 %v2193, %v2307
        %v2367 = vsub.f32 %v2194, %v2307
        %v2368 = vsub.f32 %v2195, %v2307
        %v2369 = vsub.f32 %v2196, %v2307
        %v2370 = vsub.f32 %v2197, %v2307
        %v2371 = vsub.f32 %v2198, %v2307
        %v2372 = vsub.f32 %v2199, %v2307
        %v2373 = vsub.f32 %v2200, %v2307
        %v2374 = vsub.f32 %v2201, %v2307
        %v2375 = vsub.f32 %v2202, %v2307
        %v2376 = vsub.f32 %v2203, %v2307
        %v2377 = vsub.f32 %v2204, %v2307
        %v2378 = vsub.f32 %v2205, %v2307
        %v2379 = vsub.f32 %v2206, %v2307
        %v2380 = vsub.f32 %v2207, %v2307
        %v2381 = vsub.f32 %v2208, %v2307
        %v2382 = vsub.f32 %v2209, %v2307
        %v2383 = vsub.f32 %v2210, %v2307
        %v2384 = vsub.f32 %v2211, %v2307
        %v2385 = vsub.f32 %v2212, %v2307
        %v2386 = vsub.f32 %v2213, %v2307
        %v2387 = vsub.f32 %v2214, %v2307
        %v2388 = vsub.f32 %v2215, %v2307
        %v2389 = vsub.f32 %v2216, %v2307
        %v2390 = vsub.f32 %v2217, %v2307
        %v2391 = vsub.f32 %v2218, %v2307
        %v2392 = vsub.f32 %v2219, %v2307
        %v2393 = vsub.f32 %v2220, %v2307
        %v2394 = vsub.f32 %v2221, %v2307
        %v2395 = vsub.f32 %v2222, %v2307
        %v2396 = vsub.f32 %v2223, %v2307
        %v2397 = vsub.f32 %v2224, %v2307
        %v2398 = vsub.f32 %v2225, %v2307
        %v2399 = vsub.f32 %v2226, %v2307
        %v2400 = vsub.f32 %v2227, %v2307
        %v2401 = vsub.f32 %v2228, %v2307
        %v2402 = vsub.f32 %v2229, %v2307
        %v2403 = vsub.f32 %v2230, %v2307
        %v2404 = vsub.f32 %v2231, %v2307
        %v2405 = vsub.f32 %v2232, %v2307
        %v2406 = vsub.f32 %v2233, %v2307
        %v2407 = vsub.f32 %v2234, %v2307
        %v2408 = vsub.f32 %v2235, %v2307
        %v2409 = vsub.f32 %v2236, %v2307
        %v2410 = vsub.f32 %v2237, %v2307
        %v2411 = vsub.f32 %v2238, %v2307
        %v2412 = vsub.f32 %v2239, %v2307
        %v2413 = vsub.f32 %v2240, %v2307
        %v2414 = vsub.f32 %v2241, %v2307
        %v2415 = vsub.f32 %v2242, %v2307
        %v2416 = vsub.f32 %v2243, %v2307
        %v2417 = vsub.f32 %v2244, %v2307
        %v2418 = vsub.f32 %v2245, %v2307
        %v2419 = vsub.f32 %v2246, %v2307
        %v2420 = vsub.f32 %v2247, %v2307
        %v2421 = vsub.f32 %v2248, %v2307
        %v2422 = vsub.f32 %v2249, %v2307
        %v2423 = vsub.f32 %v2250, %v2307
        %v2424 = vsub.f32 %v2251, %v2307
        %v2425 = vsub.f32 %v2252, %v2307
        %v2426 = vsub.f32 %v2253, %v2307
        %v2427 = vsub.f32 %v2254, %v2307
        %v2428 = vsub.f32 %v2255, %v2307
        %v2429 = vsub.f32 %v2256, %v2307
        %v2430 = vsub.f32 %v2257, %v2307
        %v2431 = vsub.f32 %v2258, %v2307
        %v2432 = vsub.f32 %v2259, %v2307
        %v2433 = vsub.f32 %v2260, %v2307
        %v2434 = vsub.f32 %v2261, %v2307
        %v2435 = vsub.f32 %v2262, %v2307
        %v2436 = vsub.f32 %v2263, %v2307
        %v2437 = vsub.f32 %v2264, %v2307
        %v2438 = vsub.f32 %v2265, %v2307
        %v2439 = vsub.f32 %v2266, %v2307
        %v2440 = vsub.f32 %v2267, %v2307
        %v2441 = vsub.f32 %v2268, %v2307
        %v2442 = vsub.f32 %v2269, %v2307
        %v2443 = vsub.f32 %v2270, %v2307
        %v2444 = vsub.f32 %v2271, %v2307
        %v2445 = vsub.f32 %v2272, %v2307
        %v2446 = vsub.f32 %v2273, %v2307
        %v2447 = vsub.f32 %v2274, %v2307
        %v2448 = vsub.f32 %v2275, %v2307
        %v2449 = vsub.f32 %v2276, %v2307
        %v2450 = vsub.f32 %v2277, %v2307
        %v2451 = vsub.f32 %v2278, %v2307
        %v2452 = vsub.f32 %v2279, %v2307
        %v2453 = vsub.f32 %v2280, %v2307
        %v2454 = vsub.f32 %v2281, %v2307
        %v2455 = vsub.f32 %v2282, %v2307
        %v2456 = vsub.f32 %v2283, %v2307
        %v2457 = vsub.f32 %v2284, %v2307
        %v2458 = vsub.f32 %v2285, %v2307
        %v2459 = vsub.f32 %v2286, %v2307
        %v2460 = vsub.f32 %v2287, %v2307
        %v2461 = vsub.f32 %v2288, %v2307
        %v2462 = vsub.f32 %v2289, %v2307
        %v2463 = vsub.f32 %v2290, %v2307
        %v2464 = vsub.f32 %v2291, %v2307
        %v2465 = vsub.f32 %v2292, %v2307
        %v2466 = vsub.f32 %v2293, %v2307
        %v2467 = vsub.f32 %v2294, %v2307
        %v2468 = vsub.f32 %v2295, %v2307
        %v2469 = vsub.f32 %v2296, %v2307
        %v2470 = vsub.f32 %v2297, %v2307
        %v2471 = vsub.f32 %v2298, %v2307
        %v2472 = vsub.f32 %v2299, %v2307
        %v2473 = vsub.f32 %v2300, %v2307
        %v2474 = vsub.f32 %v2301, %v2307
        %v2475 = vsub.f32 %v2302, %v2307
        %v2476 = vsub.f32 %v2303, %v2307
        %v2477 = vsub.f32 %v2304, %v2307
        %v2478 = vsub.f32 %v2305, %v2307
        %v2479 = vsub.f32 %v2306, %v2307
        %2480 = vset.pattern.permute.xlu0 1
        %2481 = vperm.xlu0 %2480, %v236
        %v2482 = vpop.permute.xlu0 %2481
        %2484 = vset.pattern.permute.xlu0 1
        %2485 = vperm.xlu0 %2484, %v237
        %v2486 = vpop.permute.xlu0 %2485
        %2488 = vset.pattern.permute.xlu0 1
        %2489 = vperm.xlu0 %2488, %v238
        %v2490 = vpop.permute.xlu0 %2489
        %2492 = vset.pattern.permute.xlu0 1
        %2493 = vperm.xlu0 %2492, %v239
        %v2494 = vpop.permute.xlu0 %2493
        %2496 = vset.pattern.permute.xlu0 1
        %2497 = vperm.xlu0 %2496, %v240
        %v2498 = vpop.permute.xlu0 %2497
        %2500 = vset.pattern.permute.xlu0 1
        %2501 = vperm.xlu0 %2500, %v241
        %v2502 = vpop.permute.xlu0 %2501
        %2504 = vset.pattern.permute.xlu0 1
        %2505 = vperm.xlu0 %2504, %v242
        %v2506 = vpop.permute.xlu0 %2505
        %2508 = vset.pattern.permute.xlu0 1
        %2509 = vperm.xlu0 %2508, %v243
        %v2510 = vpop.permute.xlu0 %2509
        %2512 = vset.pattern.permute.xlu0 1
        %2513 = vperm.xlu0 %2512, %v244
        %v2514 = vpop.permute.xlu0 %2513
        %2516 = vset.pattern.permute.xlu0 1
        %2517 = vperm.xlu0 %2516, %v245
        %v2518 = vpop.permute.xlu0 %2517
        %2520 = vset.pattern.permute.xlu0 1
        %2521 = vperm.xlu0 %2520, %v246
        %v2522 = vpop.permute.xlu0 %2521
        %2524 = vset.pattern.permute.xlu0 1
        %2525 = vperm.xlu0 %2524, %v247
        %v2526 = vpop.permute.xlu0 %2525
        %2528 = vset.pattern.permute.xlu0 1
        %2529 = vperm.xlu0 %2528, %v248
        %v2530 = vpop.permute.xlu0 %2529
        %2532 = vset.pattern.permute.xlu0 1
        %2533 = vperm.xlu0 %2532, %v249
        %v2534 = vpop.permute.xlu0 %2533
        %2536 = vset.pattern.permute.xlu0 1
        %2537 = vperm.xlu0 %2536, %v250
        %v2538 = vpop.permute.xlu0 %2537
        %2540 = vset.pattern.permute.xlu0 1
        %2541 = vperm.xlu0 %2540, %v251
        %v2542 = vpop.permute.xlu0 %2541
        %2544 = vset.pattern.permute.xlu0 1
        %2545 = vperm.xlu0 %2544, %v252
        %v2546 = vpop.permute.xlu0 %2545
        %2548 = vset.pattern.permute.xlu0 1
        %2549 = vperm.xlu0 %2548, %v253
        %v2550 = vpop.permute.xlu0 %2549
        %2552 = vset.pattern.permute.xlu0 1
        %2553 = vperm.xlu0 %2552, %v254
        %v2554 = vpop.permute.xlu0 %2553
        %2556 = vset.pattern.permute.xlu0 1
        %2557 = vperm.xlu0 %2556, %v255
        %v2558 = vpop.permute.xlu0 %2557
        %2560 = vset.pattern.permute.xlu0 1
        %2561 = vperm.xlu0 %2560, %v256
        %v2562 = vpop.permute.xlu0 %2561
        %2564 = vset.pattern.permute.xlu0 1
        %2565 = vperm.xlu0 %2564, %v257
        %v2566 = vpop.permute.xlu0 %2565
        %2568 = vset.pattern.permute.xlu0 1
        %2569 = vperm.xlu0 %2568, %v258
        %v2570 = vpop.permute.xlu0 %2569
        %2572 = vset.pattern.permute.xlu0 1
        %2573 = vperm.xlu0 %2572, %v259
        %v2574 = vpop.permute.xlu0 %2573
        %2576 = vset.pattern.permute.xlu0 1
        %2577 = vperm.xlu0 %2576, %v260
        %v2578 = vpop.permute.xlu0 %2577
        %2580 = vset.pattern.permute.xlu0 1
        %2581 = vperm.xlu0 %2580, %v261
        %v2582 = vpop.permute.xlu0 %2581
        %2584 = vset.pattern.permute.xlu0 1
        %2585 = vperm.xlu0 %2584, %v262
        %v2586 = vpop.permute.xlu0 %2585
        %2588 = vset.pattern.permute.xlu0 1
        %2589 = vperm.xlu0 %2588, %v263
        %v2590 = vpop.permute.xlu0 %2589
        %2592 = vset.pattern.permute.xlu0 1
        %2593 = vperm.xlu0 %2592, %v264
        %v2594 = vpop.permute.xlu0 %2593
        %2596 = vset.pattern.permute.xlu0 1
        %2597 = vperm.xlu0 %2596, %v265
        %v2598 = vpop.permute.xlu0 %2597
        %2600 = vset.pattern.permute.xlu0 1
        %2601 = vperm.xlu0 %2600, %v266
        %v2602 = vpop.permute.xlu0 %2601
        %2604 = vset.pattern.permute.xlu0 1
        %2605 = vperm.xlu0 %2604, %v267
        %v2606 = vpop.permute.xlu0 %2605
        %2608 = vset.pattern.permute.xlu0 1
        %2609 = vperm.xlu0 %2608, %v268
        %v2610 = vpop.permute.xlu0 %2609
        %2612 = vset.pattern.permute.xlu0 1
        %2613 = vperm.xlu0 %2612, %v269
        %v2614 = vpop.permute.xlu0 %2613
        %2616 = vset.pattern.permute.xlu0 1
        %2617 = vperm.xlu0 %2616, %v270
        %v2618 = vpop.permute.xlu0 %2617
        %2620 = vset.pattern.permute.xlu0 1
        %2621 = vperm.xlu0 %2620, %v271
        %v2622 = vpop.permute.xlu0 %2621
        %2624 = vset.pattern.permute.xlu0 1
        %2625 = vperm.xlu0 %2624, %v272
        %v2626 = vpop.permute.xlu0 %2625
        %2628 = vset.pattern.permute.xlu0 1
        %2629 = vperm.xlu0 %2628, %v273
        %v2630 = vpop.permute.xlu0 %2629
        %2632 = vset.pattern.permute.xlu0 1
        %2633 = vperm.xlu0 %2632, %v274
        %v2634 = vpop.permute.xlu0 %2633
        %2636 = vset.pattern.permute.xlu0 1
        %2637 = vperm.xlu0 %2636, %v275
        %v2638 = vpop.permute.xlu0 %2637
        %2640 = vset.pattern.permute.xlu0 1
        %2641 = vperm.xlu0 %2640, %v276
        %v2642 = vpop.permute.xlu0 %2641
        %2644 = vset.pattern.permute.xlu0 1
        %2645 = vperm.xlu0 %2644, %v277
        %v2646 = vpop.permute.xlu0 %2645
        %2648 = vset.pattern.permute.xlu0 1
        %2649 = vperm.xlu0 %2648, %v278
        %v2650 = vpop.permute.xlu0 %2649
        %2652 = vset.pattern.permute.xlu0 1
        %2653 = vperm.xlu0 %2652, %v279
        %v2654 = vpop.permute.xlu0 %2653
        %2656 = vset.pattern.permute.xlu0 1
        %2657 = vperm.xlu0 %2656, %v280
        %v2658 = vpop.permute.xlu0 %2657
        %2660 = vset.pattern.permute.xlu0 1
        %2661 = vperm.xlu0 %2660, %v281
        %v2662 = vpop.permute.xlu0 %2661
        %2664 = vset.pattern.permute.xlu0 1
        %2665 = vperm.xlu0 %2664, %v282
        %v2666 = vpop.permute.xlu0 %2665
        %2668 = vset.pattern.permute.xlu0 1
        %2669 = vperm.xlu0 %2668, %v283
        %v2670 = vpop.permute.xlu0 %2669
        %2672 = vset.pattern.permute.xlu0 1
        %2673 = vperm.xlu0 %2672, %v284
        %v2674 = vpop.permute.xlu0 %2673
        %2676 = vset.pattern.permute.xlu0 1
        %2677 = vperm.xlu0 %2676, %v285
        %v2678 = vpop.permute.xlu0 %2677
        %2680 = vset.pattern.permute.xlu0 1
        %2681 = vperm.xlu0 %2680, %v286
        %v2682 = vpop.permute.xlu0 %2681
        %2684 = vset.pattern.permute.xlu0 1
        %2685 = vperm.xlu0 %2684, %v287
        %v2686 = vpop.permute.xlu0 %2685
        %2688 = vset.pattern.permute.xlu0 1
        %2689 = vperm.xlu0 %2688, %v288
        %v2690 = vpop.permute.xlu0 %2689
        %2692 = vset.pattern.permute.xlu0 1
        %2693 = vperm.xlu0 %2692, %v289
        %v2694 = vpop.permute.xlu0 %2693
        %2696 = vset.pattern.permute.xlu0 1
        %2697 = vperm.xlu0 %2696, %v290
        %v2698 = vpop.permute.xlu0 %2697
        %2700 = vset.pattern.permute.xlu0 1
        %2701 = vperm.xlu0 %2700, %v291
        %v2702 = vpop.permute.xlu0 %2701
        %2704 = vset.pattern.permute.xlu0 1
        %2705 = vperm.xlu0 %2704, %v292
        %v2706 = vpop.permute.xlu0 %2705
        %2708 = vset.pattern.permute.xlu0 1
        %2709 = vperm.xlu0 %2708, %v293
        %v2710 = vpop.permute.xlu0 %2709
        %2712 = vset.pattern.permute.xlu0 1
        %2713 = vperm.xlu0 %2712, %v294
        %v2714 = vpop.permute.xlu0 %2713
        %2716 = vset.pattern.permute.xlu0 1
        %2717 = vperm.xlu0 %2716, %v295
        %v2718 = vpop.permute.xlu0 %2717
        %2720 = vset.pattern.permute.xlu0 1
        %2721 = vperm.xlu0 %2720, %v296
        %v2722 = vpop.permute.xlu0 %2721
        %2724 = vset.pattern.permute.xlu0 1
        %2725 = vperm.xlu0 %2724, %v297
        %v2726 = vpop.permute.xlu0 %2725
        %2728 = vset.pattern.permute.xlu0 1
        %2729 = vperm.xlu0 %2728, %v298
        %v2730 = vpop.permute.xlu0 %2729
        %2732 = vset.pattern.permute.xlu0 1
        %2733 = vperm.xlu0 %2732, %v299
        %v2734 = vpop.permute.xlu0 %2733
        %2736 = vset.pattern.permute.xlu0 1
        %2737 = vperm.xlu0 %2736, %v300
        %v2738 = vpop.permute.xlu0 %2737
        %2740 = vset.pattern.permute.xlu0 1
        %2741 = vperm.xlu0 %2740, %v301
        %v2742 = vpop.permute.xlu0 %2741
        %2744 = vset.pattern.permute.xlu0 1
        %2745 = vperm.xlu0 %2744, %v302
        %v2746 = vpop.permute.xlu0 %2745
        %2748 = vset.pattern.permute.xlu0 1
        %2749 = vperm.xlu0 %2748, %v303
        %v2750 = vpop.permute.xlu0 %2749
        %2752 = vset.pattern.permute.xlu0 1
        %2753 = vperm.xlu0 %2752, %v304
        %v2754 = vpop.permute.xlu0 %2753
        %2756 = vset.pattern.permute.xlu0 1
        %2757 = vperm.xlu0 %2756, %v305
        %v2758 = vpop.permute.xlu0 %2757
        %2760 = vset.pattern.permute.xlu0 1
        %2761 = vperm.xlu0 %2760, %v306
        %v2762 = vpop.permute.xlu0 %2761
        %2764 = vset.pattern.permute.xlu0 1
        %2765 = vperm.xlu0 %2764, %v307
        %v2766 = vpop.permute.xlu0 %2765
        %2768 = vset.pattern.permute.xlu0 1
        %2769 = vperm.xlu0 %2768, %v308
        %v2770 = vpop.permute.xlu0 %2769
        %2772 = vset.pattern.permute.xlu0 1
        %2773 = vperm.xlu0 %2772, %v309
        %v2774 = vpop.permute.xlu0 %2773
        %2776 = vset.pattern.permute.xlu0 1
        %2777 = vperm.xlu0 %2776, %v310
        %v2778 = vpop.permute.xlu0 %2777
        %2780 = vset.pattern.permute.xlu0 1
        %2781 = vperm.xlu0 %2780, %v311
        %v2782 = vpop.permute.xlu0 %2781
        %2784 = vset.pattern.permute.xlu0 1
        %2785 = vperm.xlu0 %2784, %v312
        %v2786 = vpop.permute.xlu0 %2785
        %2788 = vset.pattern.permute.xlu0 1
        %2789 = vperm.xlu0 %2788, %v313
        %v2790 = vpop.permute.xlu0 %2789
        %2792 = vset.pattern.permute.xlu0 1
        %2793 = vperm.xlu0 %2792, %v314
        %v2794 = vpop.permute.xlu0 %2793
        %2796 = vset.pattern.permute.xlu0 1
        %2797 = vperm.xlu0 %2796, %v315
        %v2798 = vpop.permute.xlu0 %2797
        %2800 = vset.pattern.permute.xlu0 1
        %2801 = vperm.xlu0 %2800, %v316
        %v2802 = vpop.permute.xlu0 %2801
        %2804 = vset.pattern.permute.xlu0 1
        %2805 = vperm.xlu0 %2804, %v317
        %v2806 = vpop.permute.xlu0 %2805
        %2808 = vset.pattern.permute.xlu0 1
        %2809 = vperm.xlu0 %2808, %v318
        %v2810 = vpop.permute.xlu0 %2809
        %2812 = vset.pattern.permute.xlu0 1
        %2813 = vperm.xlu0 %2812, %v319
        %v2814 = vpop.permute.xlu0 %2813
        %2816 = vset.pattern.permute.xlu0 1
        %2817 = vperm.xlu0 %2816, %v320
        %v2818 = vpop.permute.xlu0 %2817
        %2820 = vset.pattern.permute.xlu0 1
        %2821 = vperm.xlu0 %2820, %v321
        %v2822 = vpop.permute.xlu0 %2821
        %2824 = vset.pattern.permute.xlu0 1
        %2825 = vperm.xlu0 %2824, %v322
        %v2826 = vpop.permute.xlu0 %2825
        %2828 = vset.pattern.permute.xlu0 1
        %2829 = vperm.xlu0 %2828, %v323
        %v2830 = vpop.permute.xlu0 %2829
        %2832 = vset.pattern.permute.xlu0 1
        %2833 = vperm.xlu0 %2832, %v324
        %v2834 = vpop.permute.xlu0 %2833
        %2836 = vset.pattern.permute.xlu0 1
        %2837 = vperm.xlu0 %2836, %v325
        %v2838 = vpop.permute.xlu0 %2837
        %2840 = vset.pattern.permute.xlu0 1
        %2841 = vperm.xlu0 %2840, %v326
        %v2842 = vpop.permute.xlu0 %2841
        %2844 = vset.pattern.permute.xlu0 1
        %2845 = vperm.xlu0 %2844, %v327
        %v2846 = vpop.permute.xlu0 %2845
        %2848 = vset.pattern.permute.xlu0 1
        %2849 = vperm.xlu0 %2848, %v328
        %v2850 = vpop.permute.xlu0 %2849
        %2852 = vset.pattern.permute.xlu0 1
        %2853 = vperm.xlu0 %2852, %v329
        %v2854 = vpop.permute.xlu0 %2853
        %2856 = vset.pattern.permute.xlu0 1
        %2857 = vperm.xlu0 %2856, %v330
        %v2858 = vpop.permute.xlu0 %2857
        %2860 = vset.pattern.permute.xlu0 1
        %2861 = vperm.xlu0 %2860, %v331
        %v2862 = vpop.permute.xlu0 %2861
        %2864 = vset.pattern.permute.xlu0 1
        %2865 = vperm.xlu0 %2864, %v332
        %v2866 = vpop.permute.xlu0 %2865
        %2868 = vset.pattern.permute.xlu0 1
        %2869 = vperm.xlu0 %2868, %v333
        %v2870 = vpop.permute.xlu0 %2869
        %2872 = vset.pattern.permute.xlu0 1
        %2873 = vperm.xlu0 %2872, %v334
        %v2874 = vpop.permute.xlu0 %2873
        %2876 = vset.pattern.permute.xlu0 1
        %2877 = vperm.xlu0 %2876, %v335
        %v2878 = vpop.permute.xlu0 %2877
        %2880 = vset.pattern.permute.xlu0 1
        %2881 = vperm.xlu0 %2880, %v336
        %v2882 = vpop.permute.xlu0 %2881
        %2884 = vset.pattern.permute.xlu0 1
        %2885 = vperm.xlu0 %2884, %v337
        %v2886 = vpop.permute.xlu0 %2885
        %2888 = vset.pattern.permute.xlu0 1
        %2889 = vperm.xlu0 %2888, %v338
        %v2890 = vpop.permute.xlu0 %2889
        %2892 = vset.pattern.permute.xlu0 1
        %2893 = vperm.xlu0 %2892, %v339
        %v2894 = vpop.permute.xlu0 %2893
        %2896 = vset.pattern.permute.xlu0 1
        %2897 = vperm.xlu0 %2896, %v340
        %v2898 = vpop.permute.xlu0 %2897
        %2900 = vset.pattern.permute.xlu0 1
        %2901 = vperm.xlu0 %2900, %v341
        %v2902 = vpop.permute.xlu0 %2901
        %2904 = vset.pattern.permute.xlu0 1
        %2905 = vperm.xlu0 %2904, %v342
        %v2906 = vpop.permute.xlu0 %2905
        %2908 = vset.pattern.permute.xlu0 1
        %2909 = vperm.xlu0 %2908, %v343
        %v2910 = vpop.permute.xlu0 %2909
        %2912 = vset.pattern.permute.xlu0 1
        %2913 = vperm.xlu0 %2912, %v344
        %v2914 = vpop.permute.xlu0 %2913
        %2916 = vset.pattern.permute.xlu0 1
        %2917 = vperm.xlu0 %2916, %v345
        %v2918 = vpop.permute.xlu0 %2917
        %2920 = vset.pattern.permute.xlu0 1
        %2921 = vperm.xlu0 %2920, %v346
        %v2922 = vpop.permute.xlu0 %2921
        %2924 = vset.pattern.permute.xlu0 1
        %2925 = vperm.xlu0 %2924, %v347
        %v2926 = vpop.permute.xlu0 %2925
        %2928 = vset.pattern.permute.xlu0 1
        %2929 = vperm.xlu0 %2928, %v348
        %v2930 = vpop.permute.xlu0 %2929
        %2932 = vset.pattern.permute.xlu0 1
        %2933 = vperm.xlu0 %2932, %v349
        %v2934 = vpop.permute.xlu0 %2933
        %2936 = vset.pattern.permute.xlu0 1
        %2937 = vperm.xlu0 %2936, %v350
        %v2938 = vpop.permute.xlu0 %2937
        %2940 = vset.pattern.permute.xlu0 1
        %2941 = vperm.xlu0 %2940, %v351
        %v2942 = vpop.permute.xlu0 %2941
        %2944 = vset.pattern.permute.xlu0 1
        %2945 = vperm.xlu0 %2944, %v352
        %v2946 = vpop.permute.xlu0 %2945
        %2948 = vset.pattern.permute.xlu0 1
        %2949 = vperm.xlu0 %2948, %v353
        %v2950 = vpop.permute.xlu0 %2949
        %2952 = vset.pattern.permute.xlu0 1
        %2953 = vperm.xlu0 %2952, %v354
        %v2954 = vpop.permute.xlu0 %2953
        %2956 = vset.pattern.permute.xlu0 1
        %2957 = vperm.xlu0 %2956, %v355
        %v2958 = vpop.permute.xlu0 %2957
        %2960 = vset.pattern.permute.xlu0 1
        %2961 = vperm.xlu0 %2960, %v356
        %v2962 = vpop.permute.xlu0 %2961
        %2964 = vset.pattern.permute.xlu0 1
        %2965 = vperm.xlu0 %2964, %v357
        %v2966 = vpop.permute.xlu0 %2965
        %2968 = vset.pattern.permute.xlu0 1
        %2969 = vperm.xlu0 %2968, %v358
        %v2970 = vpop.permute.xlu0 %2969
        %2972 = vset.pattern.permute.xlu0 1
        %2973 = vperm.xlu0 %2972, %v359
        %v2974 = vpop.permute.xlu0 %2973
        %2976 = vset.pattern.permute.xlu0 1
        %2977 = vperm.xlu0 %2976, %v360
        %v2978 = vpop.permute.xlu0 %2977
        %2980 = vset.pattern.permute.xlu0 1
        %2981 = vperm.xlu0 %2980, %v361
        %v2982 = vpop.permute.xlu0 %2981
        %2984 = vset.pattern.permute.xlu0 1
        %2985 = vperm.xlu0 %2984, %v362
        %v2986 = vpop.permute.xlu0 %2985
        %2988 = vset.pattern.permute.xlu0 1
        %2989 = vperm.xlu0 %2988, %v363
        %v2990 = vpop.permute.xlu0 %2989
        %2992 = vset.pattern.permute.xlu0 1
        %2993 = vperm.xlu0 %2992, %v364
        %v2994 = vpop.permute.xlu0 %2993
        %2996 = vset.pattern.permute.xlu0 1
        %2997 = vperm.xlu0 %2996, %v365
        %v2998 = vpop.permute.xlu0 %2997
        %3000 = vset.pattern.permute.xlu0 1
        %3001 = vperm.xlu0 %3000, %v366
        %v3002 = vpop.permute.xlu0 %3001
        %3004 = vset.pattern.permute.xlu0 1
        %3005 = vperm.xlu0 %3004, %v367
        %v3006 = vpop.permute.xlu0 %3005
        %3008 = vset.pattern.permute.xlu0 1
        %3009 = vperm.xlu0 %3008, %v368
        %v3010 = vpop.permute.xlu0 %3009
        %3012 = vset.pattern.permute.xlu0 1
        %3013 = vperm.xlu0 %3012, %v369
        %v3014 = vpop.permute.xlu0 %3013
        %3016 = vset.pattern.permute.xlu0 1
        %3017 = vperm.xlu0 %3016, %v370
        %v3018 = vpop.permute.xlu0 %3017
        %3020 = vset.pattern.permute.xlu0 1
        %3021 = vperm.xlu0 %3020, %v371
        %v3022 = vpop.permute.xlu0 %3021
        %3024 = vset.pattern.permute.xlu0 1
        %3025 = vperm.xlu0 %3024, %v372
        %v3026 = vpop.permute.xlu0 %3025
        %3028 = vset.pattern.permute.xlu0 1
        %3029 = vperm.xlu0 %3028, %v373
        %v3030 = vpop.permute.xlu0 %3029
        %3032 = vset.pattern.permute.xlu0 1
        %3033 = vperm.xlu0 %3032, %v374
        %v3034 = vpop.permute.xlu0 %3033
        %3036 = vset.pattern.permute.xlu0 1
        %3037 = vperm.xlu0 %3036, %v375
        %v3038 = vpop.permute.xlu0 %3037
        %3040 = vset.pattern.permute.xlu0 1
        %3041 = vperm.xlu0 %3040, %v376
        %v3042 = vpop.permute.xlu0 %3041
        %3044 = vset.pattern.permute.xlu0 1
        %3045 = vperm.xlu0 %3044, %v377
        %v3046 = vpop.permute.xlu0 %3045
        %3048 = vset.pattern.permute.xlu0 1
        %3049 = vperm.xlu0 %3048, %v378
        %v3050 = vpop.permute.xlu0 %3049
        %3052 = vset.pattern.permute.xlu0 1
        %3053 = vperm.xlu0 %3052, %v379
        %v3054 = vpop.permute.xlu0 %3053
        %3056 = vset.pattern.permute.xlu0 1
        %3057 = vperm.xlu0 %3056, %v380
        %v3058 = vpop.permute.xlu0 %3057
        %3060 = vset.pattern.permute.xlu0 1
        %3061 = vperm.xlu0 %3060, %v381
        %v3062 = vpop.permute.xlu0 %3061
        %3064 = vset.pattern.permute.xlu0 1
        %3065 = vperm.xlu0 %3064, %v382
        %v3066 = vpop.permute.xlu0 %3065
        %3068 = vset.pattern.permute.xlu0 1
        %3069 = vperm.xlu0 %3068, %v383
        %v3070 = vpop.permute.xlu0 %3069
        %3072 = vset.pattern.permute.xlu0 1
        %3073 = vperm.xlu0 %3072, %v384
        %v3074 = vpop.permute.xlu0 %3073
        %3076 = vset.pattern.permute.xlu0 1
        %3077 = vperm.xlu0 %3076, %v385
        %v3078 = vpop.permute.xlu0 %3077
        %3080 = vset.pattern.permute.xlu0 1
        %3081 = vperm.xlu0 %3080, %v386
        %v3082 = vpop.permute.xlu0 %3081
        %3084 = vset.pattern.permute.xlu0 1
        %3085 = vperm.xlu0 %3084, %v387
        %v3086 = vpop.permute.xlu0 %3085
        %3088 = vset.pattern.permute.xlu0 1
        %3089 = vperm.xlu0 %3088, %v388
        %v3090 = vpop.permute.xlu0 %3089
        %3092 = vset.pattern.permute.xlu0 1
        %3093 = vperm.xlu0 %3092, %v389
        %v3094 = vpop.permute.xlu0 %3093
        %3096 = vset.pattern.permute.xlu0 1
        %3097 = vperm.xlu0 %3096, %v390
        %v3098 = vpop.permute.xlu0 %3097
        %3100 = vset.pattern.permute.xlu0 1
        %3101 = vperm.xlu0 %3100, %v391
        %v3102 = vpop.permute.xlu0 %3101
        %3104 = vset.pattern.permute.xlu0 1
        %3105 = vperm.xlu0 %3104, %v392
        %v3106 = vpop.permute.xlu0 %3105
        %3108 = vset.pattern.permute.xlu0 1
        %3109 = vperm.xlu0 %3108, %v393
        %v3110 = vpop.permute.xlu0 %3109
        %3112 = vset.pattern.permute.xlu0 1
        %3113 = vperm.xlu0 %3112, %v394
        %v3114 = vpop.permute.xlu0 %3113
        %3116 = vset.pattern.permute.xlu0 1
        %3117 = vperm.xlu0 %3116, %v395
        %v3118 = vpop.permute.xlu0 %3117
        %3120 = vset.pattern.permute.xlu0 1
        %3121 = vperm.xlu0 %3120, %v396
        %v3122 = vpop.permute.xlu0 %3121
        %3124 = vset.pattern.permute.xlu0 1
        %3125 = vperm.xlu0 %3124, %v397
        %v3126 = vpop.permute.xlu0 %3125
        %3128 = vset.pattern.permute.xlu0 1
        %3129 = vperm.xlu0 %3128, %v398
        %v3130 = vpop.permute.xlu0 %3129
        %3132 = vset.pattern.permute.xlu0 1
        %3133 = vperm.xlu0 %3132, %v399
        %v3134 = vpop.permute.xlu0 %3133
        %3136 = vset.pattern.permute.xlu0 1
        %3137 = vperm.xlu0 %3136, %v400
        %v3138 = vpop.permute.xlu0 %3137
        %3140 = vset.pattern.permute.xlu0 1
        %3141 = vperm.xlu0 %3140, %v401
        %v3142 = vpop.permute.xlu0 %3141
        %3144 = vset.pattern.permute.xlu0 1
        %3145 = vperm.xlu0 %3144, %v402
        %v3146 = vpop.permute.xlu0 %3145
        %3148 = vset.pattern.permute.xlu0 1
        %3149 = vperm.xlu0 %3148, %v403
        %v3150 = vpop.permute.xlu0 %3149
        %3152 = vset.pattern.permute.xlu0 1
        %3153 = vperm.xlu0 %3152, %v404
        %v3154 = vpop.permute.xlu0 %3153
        %3156 = vset.pattern.permute.xlu0 1
        %3157 = vperm.xlu0 %3156, %v405
        %v3158 = vpop.permute.xlu0 %3157
        %3160 = vset.pattern.permute.xlu0 1
        %3161 = vperm.xlu0 %3160, %v406
        %v3162 = vpop.permute.xlu0 %3161
        %3164 = vset.pattern.permute.xlu0 1
        %3165 = vperm.xlu0 %3164, %v407
        %v3166 = vpop.permute.xlu0 %3165
        %v3168 = vperm.slane %v409, 0
        %v3169 = vsub.f32 %v2482, %v3168
        %v3170 = vsub.f32 %v2486, %v3168
        %v3171 = vsub.f32 %v2490, %v3168
        %v3172 = vsub.f32 %v2494, %v3168
        %v3173 = vsub.f32 %v2498, %v3168
        %v3174 = vsub.f32 %v2502, %v3168
        %v3175 = vsub.f32 %v2506, %v3168
        %v3176 = vsub.f32 %v2510, %v3168
        %v3177 = vsub.f32 %v2514, %v3168
        %v3178 = vsub.f32 %v2518, %v3168
        %v3179 = vsub.f32 %v2522, %v3168
        %v3180 = vsub.f32 %v2526, %v3168
        %v3181 = vsub.f32 %v2530, %v3168
        %v3182 = vsub.f32 %v2534, %v3168
        %v3183 = vsub.f32 %v2538, %v3168
        %v3184 = vsub.f32 %v2542, %v3168
        %v3185 = vsub.f32 %v2546, %v3168
        %v3186 = vsub.f32 %v2550, %v3168
        %v3187 = vsub.f32 %v2554, %v3168
        %v3188 = vsub.f32 %v2558, %v3168
        %v3189 = vsub.f32 %v2562, %v3168
        %v3190 = vsub.f32 %v2566, %v3168
        %v3191 = vsub.f32 %v2570, %v3168
        %v3192 = vsub.f32 %v2574, %v3168
        %v3193 = vsub.f32 %v2578, %v3168
        %v3194 = vsub.f32 %v2582, %v3168
        %v3195 = vsub.f32 %v2586, %v3168
        %v3196 = vsub.f32 %v2590, %v3168
        %v3197 = vsub.f32 %v2594, %v3168
        %v3198 = vsub.f32 %v2598, %v3168
        %v3199 = vsub.f32 %v2602, %v3168
        %v3200 = vsub.f32 %v2606, %v3168
        %v3201 = vsub.f32 %v2610, %v3168
        %v3202 = vsub.f32 %v2614, %v3168
        %v3203 = vsub.f32 %v2618, %v3168
        %v3204 = vsub.f32 %v2622, %v3168
        %v3205 = vsub.f32 %v2626, %v3168
        %v3206 = vsub.f32 %v2630, %v3168
        %v3207 = vsub.f32 %v2634, %v3168
        %v3208 = vsub.f32 %v2638, %v3168
        %v3209 = vsub.f32 %v2642, %v3168
        %v3210 = vsub.f32 %v2646, %v3168
        %v3211 = vsub.f32 %v2650, %v3168
        %v3212 = vsub.f32 %v2654, %v3168
        %v3213 = vsub.f32 %v2658, %v3168
        %v3214 = vsub.f32 %v2662, %v3168
        %v3215 = vsub.f32 %v2666, %v3168
        %v3216 = vsub.f32 %v2670, %v3168
        %v3217 = vsub.f32 %v2674, %v3168
        %v3218 = vsub.f32 %v2678, %v3168
        %v3219 = vsub.f32 %v2682, %v3168
        %v3220 = vsub.f32 %v2686, %v3168
        %v3221 = vsub.f32 %v2690, %v3168
        %v3222 = vsub.f32 %v2694, %v3168
        %v3223 = vsub.f32 %v2698, %v3168
        %v3224 = vsub.f32 %v2702, %v3168
        %v3225 = vsub.f32 %v2706, %v3168
        %v3226 = vsub.f32 %v2710, %v3168
        %v3227 = vsub.f32 %v2714, %v3168
        %v3228 = vsub.f32 %v2718, %v3168
        %v3229 = vsub.f32 %v2722, %v3168
        %v3230 = vsub.f32 %v2726, %v3168
        %v3231 = vsub.f32 %v2730, %v3168
        %v3232 = vsub.f32 %v2734, %v3168
        %v3233 = vsub.f32 %v2738, %v3168
        %v3234 = vsub.f32 %v2742, %v3168
        %v3235 = vsub.f32 %v2746, %v3168
        %v3236 = vsub.f32 %v2750, %v3168
        %v3237 = vsub.f32 %v2754, %v3168
        %v3238 = vsub.f32 %v2758, %v3168
        %v3239 = vsub.f32 %v2762, %v3168
        %v3240 = vsub.f32 %v2766, %v3168
        %v3241 = vsub.f32 %v2770, %v3168
        %v3242 = vsub.f32 %v2774, %v3168
        %v3243 = vsub.f32 %v2778, %v3168
        %v3244 = vsub.f32 %v2782, %v3168
        %v3245 = vsub.f32 %v2786, %v3168
        %v3246 = vsub.f32 %v2790, %v3168
        %v3247 = vsub.f32 %v2794, %v3168
        %v3248 = vsub.f32 %v2798, %v3168
        %v3249 = vsub.f32 %v2802, %v3168
        %v3250 = vsub.f32 %v2806, %v3168
        %v3251 = vsub.f32 %v2810, %v3168
        %v3252 = vsub.f32 %v2814, %v3168
        %v3253 = vsub.f32 %v2818, %v3168
        %v3254 = vsub.f32 %v2822, %v3168
        %v3255 = vsub.f32 %v2826, %v3168
        %v3256 = vsub.f32 %v2830, %v3168
        %v3257 = vsub.f32 %v2834, %v3168
        %v3258 = vsub.f32 %v2838, %v3168
        %v3259 = vsub.f32 %v2842, %v3168
        %v3260 = vsub.f32 %v2846, %v3168
        %v3261 = vsub.f32 %v2850, %v3168
        %v3262 = vsub.f32 %v2854, %v3168
        %v3263 = vsub.f32 %v2858, %v3168
        %v3264 = vsub.f32 %v2862, %v3168
        %v3265 = vsub.f32 %v2866, %v3168
        %v3266 = vsub.f32 %v2870, %v3168
        %v3267 = vsub.f32 %v2874, %v3168
        %v3268 = vsub.f32 %v2878, %v3168
        %v3269 = vsub.f32 %v2882, %v3168
        %v3270 = vsub.f32 %v2886, %v3168
        %v3271 = vsub.f32 %v2890, %v3168
        %v3272 = vsub.f32 %v2894, %v3168
        %v3273 = vsub.f32 %v2898, %v3168
        %v3274 = vsub.f32 %v2902, %v3168
        %v3275 = vsub.f32 %v2906, %v3168
        %v3276 = vsub.f32 %v2910, %v3168
        %v3277 = vsub.f32 %v2914, %v3168
        %v3278 = vsub.f32 %v2918, %v3168
        %v3279 = vsub.f32 %v2922, %v3168
        %v3280 = vsub.f32 %v2926, %v3168
        %v3281 = vsub.f32 %v2930, %v3168
        %v3282 = vsub.f32 %v2934, %v3168
        %v3283 = vsub.f32 %v2938, %v3168
        %v3284 = vsub.f32 %v2942, %v3168
        %v3285 = vsub.f32 %v2946, %v3168
        %v3286 = vsub.f32 %v2950, %v3168
        %v3287 = vsub.f32 %v2954, %v3168
        %v3288 = vsub.f32 %v2958, %v3168
        %v3289 = vsub.f32 %v2962, %v3168
        %v3290 = vsub.f32 %v2966, %v3168
        %v3291 = vsub.f32 %v2970, %v3168
        %v3292 = vsub.f32 %v2974, %v3168
        %v3293 = vsub.f32 %v2978, %v3168
        %v3294 = vsub.f32 %v2982, %v3168
        %v3295 = vsub.f32 %v2986, %v3168
        %v3296 = vsub.f32 %v2990, %v3168
        %v3297 = vsub.f32 %v2994, %v3168
        %v3298 = vsub.f32 %v2998, %v3168
        %v3299 = vsub.f32 %v3002, %v3168
        %v3300 = vsub.f32 %v3006, %v3168
        %v3301 = vsub.f32 %v3010, %v3168
        %v3302 = vsub.f32 %v3014, %v3168
        %v3303 = vsub.f32 %v3018, %v3168
        %v3304 = vsub.f32 %v3022, %v3168
        %v3305 = vsub.f32 %v3026, %v3168
        %v3306 = vsub.f32 %v3030, %v3168
        %v3307 = vsub.f32 %v3034, %v3168
        %v3308 = vsub.f32 %v3038, %v3168
        %v3309 = vsub.f32 %v3042, %v3168
        %v3310 = vsub.f32 %v3046, %v3168
        %v3311 = vsub.f32 %v3050, %v3168
        %v3312 = vsub.f32 %v3054, %v3168
        %v3313 = vsub.f32 %v3058, %v3168
        %v3314 = vsub.f32 %v3062, %v3168
        %v3315 = vsub.f32 %v3066, %v3168
        %v3316 = vsub.f32 %v3070, %v3168
        %v3317 = vsub.f32 %v3074, %v3168
        %v3318 = vsub.f32 %v3078, %v3168
        %v3319 = vsub.f32 %v3082, %v3168
        %v3320 = vsub.f32 %v3086, %v3168
        %v3321 = vsub.f32 %v3090, %v3168
        %v3322 = vsub.f32 %v3094, %v3168
        %v3323 = vsub.f32 %v3098, %v3168
        %v3324 = vsub.f32 %v3102, %v3168
        %v3325 = vsub.f32 %v3106, %v3168
        %v3326 = vsub.f32 %v3110, %v3168
        %v3327 = vsub.f32 %v3114, %v3168
        %v3328 = vsub.f32 %v3118, %v3168
        %v3329 = vsub.f32 %v3122, %v3168
        %v3330 = vsub.f32 %v3126, %v3168
        %v3331 = vsub.f32 %v3130, %v3168
        %v3332 = vsub.f32 %v3134, %v3168
        %v3333 = vsub.f32 %v3138, %v3168
        %v3334 = vsub.f32 %v3142, %v3168
        %v3335 = vsub.f32 %v3146, %v3168
        %v3336 = vsub.f32 %v3150, %v3168
        %v3337 = vsub.f32 %v3154, %v3168
        %v3338 = vsub.f32 %v3158, %v3168
        %v3339 = vsub.f32 %v3162, %v3168
        %v3340 = vsub.f32 %v3166, %v3168
        %v3341 = vmul.f32 %v3169, %v1449
        %v3342 = vmul.f32 %v3170, %v1453
        %v3343 = vmul.f32 %v3171, %v1457
        %v3344 = vmul.f32 %v3172, %v1461
        %v3345 = vmul.f32 %v3173, %v1465
        %v3346 = vmul.f32 %v3174, %v1469
        %v3347 = vmul.f32 %v3175, %v1473
        %v3348 = vmul.f32 %v3176, %v1477
        %v3349 = vmul.f32 %v3177, %v1481
        %v3350 = vmul.f32 %v3178, %v1485
        %v3351 = vmul.f32 %v3179, %v1489
        %v3352 = vmul.f32 %v3180, %v1493
        %v3353 = vmul.f32 %v3181, %v1497
        %v3354 = vmul.f32 %v3182, %v1501
        %v3355 = vmul.f32 %v3183, %v1505
        %v3356 = vmul.f32 %v3184, %v1509
        %v3357 = vmul.f32 %v3185, %v1513
        %v3358 = vmul.f32 %v3186, %v1517
        %v3359 = vmul.f32 %v3187, %v1521
        %v3360 = vmul.f32 %v3188, %v1525
        %v3361 = vmul.f32 %v3189, %v1529
        %v3362 = vmul.f32 %v3190, %v1533
        %v3363 = vmul.f32 %v3191, %v1537
        %v3364 = vmul.f32 %v3192, %v1541
        %v3365 = vmul.f32 %v3193, %v1545
        %v3366 = vmul.f32 %v3194, %v1549
        %v3367 = vmul.f32 %v3195, %v1553
        %v3368 = vmul.f32 %v3196, %v1557
        %v3369 = vmul.f32 %v3197, %v1561
        %v3370 = vmul.f32 %v3198, %v1565
        %v3371 = vmul.f32 %v3199, %v1569
        %v3372 = vmul.f32 %v3200, %v1573
        %v3373 = vmul.f32 %v3201, %v1577
        %v3374 = vmul.f32 %v3202, %v1581
        %v3375 = vmul.f32 %v3203, %v1585
        %v3376 = vmul.f32 %v3204, %v1589
        %v3377 = vmul.f32 %v3205, %v1593
        %v3378 = vmul.f32 %v3206, %v1597
        %v3379 = vmul.f32 %v3207, %v1601
        %v3380 = vmul.f32 %v3208, %v1605
        %v3381 = vmul.f32 %v3209, %v1609
        %v3382 = vmul.f32 %v3210, %v1613
        %v3383 = vmul.f32 %v3211, %v1617
        %v3384 = vmul.f32 %v3212, %v1621
        %v3385 = vmul.f32 %v3213, %v1625
        %v3386 = vmul.f32 %v3214, %v1629
        %v3387 = vmul.f32 %v3215, %v1633
        %v3388 = vmul.f32 %v3216, %v1637
        %v3389 = vmul.f32 %v3217, %v1641
        %v3390 = vmul.f32 %v3218, %v1645
        %v3391 = vmul.f32 %v3219, %v1649
        %v3392 = vmul.f32 %v3220, %v1653
        %v3393 = vmul.f32 %v3221, %v1657
        %v3394 = vmul.f32 %v3222, %v1661
        %v3395 = vmul.f32 %v3223, %v1665
        %v3396 = vmul.f32 %v3224, %v1669
        %v3397 = vmul.f32 %v3225, %v1673
        %v3398 = vmul.f32 %v3226, %v1677
        %v3399 = vmul.f32 %v3227, %v1681
        %v3400 = vmul.f32 %v3228, %v1685
        %v3401 = vmul.f32 %v3229, %v1689
        %v3402 = vmul.f32 %v3230, %v1693
        %v3403 = vmul.f32 %v3231, %v1697
        %v3404 = vmul.f32 %v3232, %v1701
        %v3405 = vmul.f32 %v3233, %v1705
        %v3406 = vmul.f32 %v3234, %v1709
        %v3407 = vmul.f32 %v3235, %v1713
        %v3408 = vmul.f32 %v3236, %v1717
        %v3409 = vmul.f32 %v3237, %v1721
        %v3410 = vmul.f32 %v3238, %v1725
        %v3411 = vmul.f32 %v3239, %v1729
        %v3412 = vmul.f32 %v3240, %v1733
        %v3413 = vmul.f32 %v3241, %v1737
        %v3414 = vmul.f32 %v3242, %v1741
        %v3415 = vmul.f32 %v3243, %v1745
        %v3416 = vmul.f32 %v3244, %v1749
        %v3417 = vmul.f32 %v3245, %v1753
        %v3418 = vmul.f32 %v3246, %v1757
        %v3419 = vmul.f32 %v3247, %v1761
        %v3420 = vmul.f32 %v3248, %v1765
        %v3421 = vmul.f32 %v3249, %v1769
        %v3422 = vmul.f32 %v3250, %v1773
        %v3423 = vmul.f32 %v3251, %v1777
        %v3424 = vmul.f32 %v3252, %v1781
        %v3425 = vmul.f32 %v3253, %v1785
        %v3426 = vmul.f32 %v3254, %v1789
        %v3427 = vmul.f32 %v3255, %v1793
        %v3428 = vmul.f32 %v3256, %v1797
        %v3429 = vmul.f32 %v3257, %v1801
        %v3430 = vmul.f32 %v3258, %v1805
        %v3431 = vmul.f32 %v3259, %v1809
        %v3432 = vmul.f32 %v3260, %v1813
        %v3433 = vmul.f32 %v3261, %v1817
        %v3434 = vmul.f32 %v3262, %v1821
        %v3435 = vmul.f32 %v3263, %v1825
        %v3436 = vmul.f32 %v3264, %v1829
        %v3437 = vmul.f32 %v3265, %v1833
        %v3438 = vmul.f32 %v3266, %v1837
        %v3439 = vmul.f32 %v3267, %v1841
        %v3440 = vmul.f32 %v3268, %v1845
        %v3441 = vmul.f32 %v3269, %v1849
        %v3442 = vmul.f32 %v3270, %v1853
        %v3443 = vmul.f32 %v3271, %v1857
        %v3444 = vmul.f32 %v3272, %v1861
        %v3445 = vmul.f32 %v3273, %v1865
        %v3446 = vmul.f32 %v3274, %v1869
        %v3447 = vmul.f32 %v3275, %v1873
        %v3448 = vmul.f32 %v3276, %v1877
        %v3449 = vmul.f32 %v3277, %v1881
        %v3450 = vmul.f32 %v3278, %v1885
        %v3451 = vmul.f32 %v3279, %v1889
        %v3452 = vmul.f32 %v3280, %v1893
        %v3453 = vmul.f32 %v3281, %v1897
        %v3454 = vmul.f32 %v3282, %v1901
        %v3455 = vmul.f32 %v3283, %v1905
        %v3456 = vmul.f32 %v3284, %v1909
        %v3457 = vmul.f32 %v3285, %v1913
        %v3458 = vmul.f32 %v3286, %v1917
        %v3459 = vmul.f32 %v3287, %v1921
        %v3460 = vmul.f32 %v3288, %v1925
        %v3461 = vmul.f32 %v3289, %v1929
        %v3462 = vmul.f32 %v3290, %v1933
        %v3463 = vmul.f32 %v3291, %v1937
        %v3464 = vmul.f32 %v3292, %v1941
        %v3465 = vmul.f32 %v3293, %v1945
        %v3466 = vmul.f32 %v3294, %v1949
        %v3467 = vmul.f32 %v3295, %v1953
        %v3468 = vmul.f32 %v3296, %v1957
        %v3469 = vmul.f32 %v3297, %v1961
        %v3470 = vmul.f32 %v3298, %v1965
        %v3471 = vmul.f32 %v3299, %v1969
        %v3472 = vmul.f32 %v3300, %v1973
        %v3473 = vmul.f32 %v3301, %v1977
        %v3474 = vmul.f32 %v3302, %v1981
        %v3475 = vmul.f32 %v3303, %v1985
        %v3476 = vmul.f32 %v3304, %v1989
        %v3477 = vmul.f32 %v3305, %v1993
        %v3478 = vmul.f32 %v3306, %v1997
        %v3479 = vmul.f32 %v3307, %v2001
        %v3480 = vmul.f32 %v3308, %v2005
        %v3481 = vmul.f32 %v3309, %v2009
        %v3482 = vmul.f32 %v3310, %v2013
        %v3483 = vmul.f32 %v3311, %v2017
        %v3484 = vmul.f32 %v3312, %v2021
        %v3485 = vmul.f32 %v3313, %v2025
        %v3486 = vmul.f32 %v3314, %v2029
        %v3487 = vmul.f32 %v3315, %v2033
        %v3488 = vmul.f32 %v3316, %v2037
        %v3489 = vmul.f32 %v3317, %v2041
        %v3490 = vmul.f32 %v3318, %v2045
        %v3491 = vmul.f32 %v3319, %v2049
        %v3492 = vmul.f32 %v3320, %v2053
        %v3493 = vmul.f32 %v3321, %v2057
        %v3494 = vmul.f32 %v3322, %v2061
        %v3495 = vmul.f32 %v3323, %v2065
        %v3496 = vmul.f32 %v3324, %v2069
        %v3497 = vmul.f32 %v3325, %v2073
        %v3498 = vmul.f32 %v3326, %v2077
        %v3499 = vmul.f32 %v3327, %v2081
        %v3500 = vmul.f32 %v3328, %v2085
        %v3501 = vmul.f32 %v3329, %v2089
        %v3502 = vmul.f32 %v3330, %v2093
        %v3503 = vmul.f32 %v3331, %v2097
        %v3504 = vmul.f32 %v3332, %v2101
        %v3505 = vmul.f32 %v3333, %v2105
        %v3506 = vmul.f32 %v3334, %v2109
        %v3507 = vmul.f32 %v3335, %v2113
        %v3508 = vmul.f32 %v3336, %v2117
        %v3509 = vmul.f32 %v3337, %v2121
        %v3510 = vmul.f32 %v3338, %v2125
        %v3511 = vmul.f32 %v3339, %v2129
        %v3512 = vmul.f32 %v3340, %v2133
        %v3513 = vperm.slane %v411, 0
        %v3514 = vsub.f32 %v3341, %v3513
        %v3515 = vsub.f32 %v3342, %v3513
        %v3516 = vsub.f32 %v3343, %v3513
        %v3517 = vsub.f32 %v3344, %v3513
        %v3518 = vsub.f32 %v3345, %v3513
        %v3519 = vsub.f32 %v3346, %v3513
        %v3520 = vsub.f32 %v3347, %v3513
        %v3521 = vsub.f32 %v3348, %v3513
        %v3522 = vsub.f32 %v3349, %v3513
        %v3523 = vsub.f32 %v3350, %v3513
        %v3524 = vsub.f32 %v3351, %v3513
        %v3525 = vsub.f32 %v3352, %v3513
        %v3526 = vsub.f32 %v3353, %v3513
        %v3527 = vsub.f32 %v3354, %v3513
        %v3528 = vsub.f32 %v3355, %v3513
        %v3529 = vsub.f32 %v3356, %v3513
        %v3530 = vsub.f32 %v3357, %v3513
        %v3531 = vsub.f32 %v3358, %v3513
        %v3532 = vsub.f32 %v3359, %v3513
        %v3533 = vsub.f32 %v3360, %v3513
        %v3534 = vsub.f32 %v3361, %v3513
        %v3535 = vsub.f32 %v3362, %v3513
        %v3536 = vsub.f32 %v3363, %v3513
        %v3537 = vsub.f32 %v3364, %v3513
        %v3538 = vsub.f32 %v3365, %v3513
        %v3539 = vsub.f32 %v3366, %v3513
        %v3540 = vsub.f32 %v3367, %v3513
        %v3541 = vsub.f32 %v3368, %v3513
        %v3542 = vsub.f32 %v3369, %v3513
        %v3543 = vsub.f32 %v3370, %v3513
        %v3544 = vsub.f32 %v3371, %v3513
        %v3545 = vsub.f32 %v3372, %v3513
        %v3546 = vsub.f32 %v3373, %v3513
        %v3547 = vsub.f32 %v3374, %v3513
        %v3548 = vsub.f32 %v3375, %v3513
        %v3549 = vsub.f32 %v3376, %v3513
        %v3550 = vsub.f32 %v3377, %v3513
        %v3551 = vsub.f32 %v3378, %v3513
        %v3552 = vsub.f32 %v3379, %v3513
        %v3553 = vsub.f32 %v3380, %v3513
        %v3554 = vsub.f32 %v3381, %v3513
        %v3555 = vsub.f32 %v3382, %v3513
        %v3556 = vsub.f32 %v3383, %v3513
        %v3557 = vsub.f32 %v3384, %v3513
        %v3558 = vsub.f32 %v3385, %v3513
        %v3559 = vsub.f32 %v3386, %v3513
        %v3560 = vsub.f32 %v3387, %v3513
        %v3561 = vsub.f32 %v3388, %v3513
        %v3562 = vsub.f32 %v3389, %v3513
        %v3563 = vsub.f32 %v3390, %v3513
        %v3564 = vsub.f32 %v3391, %v3513
        %v3565 = vsub.f32 %v3392, %v3513
        %v3566 = vsub.f32 %v3393, %v3513
        %v3567 = vsub.f32 %v3394, %v3513
        %v3568 = vsub.f32 %v3395, %v3513
        %v3569 = vsub.f32 %v3396, %v3513
        %v3570 = vsub.f32 %v3397, %v3513
        %v3571 = vsub.f32 %v3398, %v3513
        %v3572 = vsub.f32 %v3399, %v3513
        %v3573 = vsub.f32 %v3400, %v3513
        %v3574 = vsub.f32 %v3401, %v3513
        %v3575 = vsub.f32 %v3402, %v3513
        %v3576 = vsub.f32 %v3403, %v3513
        %v3577 = vsub.f32 %v3404, %v3513
        %v3578 = vsub.f32 %v3405, %v3513
        %v3579 = vsub.f32 %v3406, %v3513
        %v3580 = vsub.f32 %v3407, %v3513
        %v3581 = vsub.f32 %v3408, %v3513
        %v3582 = vsub.f32 %v3409, %v3513
        %v3583 = vsub.f32 %v3410, %v3513
        %v3584 = vsub.f32 %v3411, %v3513
        %v3585 = vsub.f32 %v3412, %v3513
        %v3586 = vsub.f32 %v3413, %v3513
        %v3587 = vsub.f32 %v3414, %v3513
        %v3588 = vsub.f32 %v3415, %v3513
        %v3589 = vsub.f32 %v3416, %v3513
        %v3590 = vsub.f32 %v3417, %v3513
        %v3591 = vsub.f32 %v3418, %v3513
        %v3592 = vsub.f32 %v3419, %v3513
        %v3593 = vsub.f32 %v3420, %v3513
        %v3594 = vsub.f32 %v3421, %v3513
        %v3595 = vsub.f32 %v3422, %v3513
        %v3596 = vsub.f32 %v3423, %v3513
        %v3597 = vsub.f32 %v3424, %v3513
        %v3598 = vsub.f32 %v3425, %v3513
        %v3599 = vsub.f32 %v3426, %v3513
        %v3600 = vsub.f32 %v3427, %v3513
        %v3601 = vsub.f32 %v3428, %v3513
        %v3602 = vsub.f32 %v3429, %v3513
        %v3603 = vsub.f32 %v3430, %v3513
        %v3604 = vsub.f32 %v3431, %v3513
        %v3605 = vsub.f32 %v3432, %v3513
        %v3606 = vsub.f32 %v3433, %v3513
        %v3607 = vsub.f32 %v3434, %v3513
        %v3608 = vsub.f32 %v3435, %v3513
        %v3609 = vsub.f32 %v3436, %v3513
        %v3610 = vsub.f32 %v3437, %v3513
        %v3611 = vsub.f32 %v3438, %v3513
        %v3612 = vsub.f32 %v3439, %v3513
        %v3613 = vsub.f32 %v3440, %v3513
        %v3614 = vsub.f32 %v3441, %v3513
        %v3615 = vsub.f32 %v3442, %v3513
        %v3616 = vsub.f32 %v3443, %v3513
        %v3617 = vsub.f32 %v3444, %v3513
        %v3618 = vsub.f32 %v3445, %v3513
        %v3619 = vsub.f32 %v3446, %v3513
        %v3620 = vsub.f32 %v3447, %v3513
        %v3621 = vsub.f32 %v3448, %v3513
        %v3622 = vsub.f32 %v3449, %v3513
        %v3623 = vsub.f32 %v3450, %v3513
        %v3624 = vsub.f32 %v3451, %v3513
        %v3625 = vsub.f32 %v3452, %v3513
        %v3626 = vsub.f32 %v3453, %v3513
        %v3627 = vsub.f32 %v3454, %v3513
        %v3628 = vsub.f32 %v3455, %v3513
        %v3629 = vsub.f32 %v3456, %v3513
        %v3630 = vsub.f32 %v3457, %v3513
        %v3631 = vsub.f32 %v3458, %v3513
        %v3632 = vsub.f32 %v3459, %v3513
        %v3633 = vsub.f32 %v3460, %v3513
        %v3634 = vsub.f32 %v3461, %v3513
        %v3635 = vsub.f32 %v3462, %v3513
        %v3636 = vsub.f32 %v3463, %v3513
        %v3637 = vsub.f32 %v3464, %v3513
        %v3638 = vsub.f32 %v3465, %v3513
        %v3639 = vsub.f32 %v3466, %v3513
        %v3640 = vsub.f32 %v3467, %v3513
        %v3641 = vsub.f32 %v3468, %v3513
        %v3642 = vsub.f32 %v3469, %v3513
        %v3643 = vsub.f32 %v3470, %v3513
        %v3644 = vsub.f32 %v3471, %v3513
        %v3645 = vsub.f32 %v3472, %v3513
        %v3646 = vsub.f32 %v3473, %v3513
        %v3647 = vsub.f32 %v3474, %v3513
        %v3648 = vsub.f32 %v3475, %v3513
        %v3649 = vsub.f32 %v3476, %v3513
        %v3650 = vsub.f32 %v3477, %v3513
        %v3651 = vsub.f32 %v3478, %v3513
        %v3652 = vsub.f32 %v3479, %v3513
        %v3653 = vsub.f32 %v3480, %v3513
        %v3654 = vsub.f32 %v3481, %v3513
        %v3655 = vsub.f32 %v3482, %v3513
        %v3656 = vsub.f32 %v3483, %v3513
        %v3657 = vsub.f32 %v3484, %v3513
        %v3658 = vsub.f32 %v3485, %v3513
        %v3659 = vsub.f32 %v3486, %v3513
        %v3660 = vsub.f32 %v3487, %v3513
        %v3661 = vsub.f32 %v3488, %v3513
        %v3662 = vsub.f32 %v3489, %v3513
        %v3663 = vsub.f32 %v3490, %v3513
        %v3664 = vsub.f32 %v3491, %v3513
        %v3665 = vsub.f32 %v3492, %v3513
        %v3666 = vsub.f32 %v3493, %v3513
        %v3667 = vsub.f32 %v3494, %v3513
        %v3668 = vsub.f32 %v3495, %v3513
        %v3669 = vsub.f32 %v3496, %v3513
        %v3670 = vsub.f32 %v3497, %v3513
        %v3671 = vsub.f32 %v3498, %v3513
        %v3672 = vsub.f32 %v3499, %v3513
        %v3673 = vsub.f32 %v3500, %v3513
        %v3674 = vsub.f32 %v3501, %v3513
        %v3675 = vsub.f32 %v3502, %v3513
        %v3676 = vsub.f32 %v3503, %v3513
        %v3677 = vsub.f32 %v3504, %v3513
        %v3678 = vsub.f32 %v3505, %v3513
        %v3679 = vsub.f32 %v3506, %v3513
        %v3680 = vsub.f32 %v3507, %v3513
        %v3681 = vsub.f32 %v3508, %v3513
        %v3682 = vsub.f32 %v3509, %v3513
        %v3683 = vsub.f32 %v3510, %v3513
        %v3684 = vsub.f32 %v3511, %v3513
        %v3685 = vsub.f32 %v3512, %v3513
        %v3686 = vmul.f32 %v2308, %v2308
        %v3687 = vmul.f32 %v2309, %v2309
        %v3688 = vmul.f32 %v2310, %v2310
        %v3689 = vmul.f32 %v2311, %v2311
        %v3690 = vmul.f32 %v2312, %v2312
        %v3691 = vmul.f32 %v2313, %v2313
        %v3692 = vmul.f32 %v2314, %v2314
        %v3693 = vmul.f32 %v2315, %v2315
        %v3694 = vmul.f32 %v2316, %v2316
        %v3695 = vmul.f32 %v2317, %v2317
        %v3696 = vmul.f32 %v2318, %v2318
        %v3697 = vmul.f32 %v2319, %v2319
        %v3698 = vmul.f32 %v2320, %v2320
        %v3699 = vmul.f32 %v2321, %v2321
        %v3700 = vmul.f32 %v2322, %v2322
        %v3701 = vmul.f32 %v2323, %v2323
        %v3702 = vmul.f32 %v2324, %v2324
        %v3703 = vmul.f32 %v2325, %v2325
        %v3704 = vmul.f32 %v2326, %v2326
        %v3705 = vmul.f32 %v2327, %v2327
        %v3706 = vmul.f32 %v2328, %v2328
        %v3707 = vmul.f32 %v2329, %v2329
        %v3708 = vmul.f32 %v2330, %v2330
        %v3709 = vmul.f32 %v2331, %v2331
        %v3710 = vmul.f32 %v2332, %v2332
        %v3711 = vmul.f32 %v2333, %v2333
        %v3712 = vmul.f32 %v2334, %v2334
        %v3713 = vmul.f32 %v2335, %v2335
        %v3714 = vmul.f32 %v2336, %v2336
        %v3715 = vmul.f32 %v2337, %v2337
        %v3716 = vmul.f32 %v2338, %v2338
        %v3717 = vmul.f32 %v2339, %v2339
        %v3718 = vmul.f32 %v2340, %v2340
        %v3719 = vmul.f32 %v2341, %v2341
        %v3720 = vmul.f32 %v2342, %v2342
        %v3721 = vmul.f32 %v2343, %v2343
        %v3722 = vmul.f32 %v2344, %v2344
        %v3723 = vmul.f32 %v2345, %v2345
        %v3724 = vmul.f32 %v2346, %v2346
        %v3725 = vmul.f32 %v2347, %v2347
        %v3726 = vmul.f32 %v2348, %v2348
        %v3727 = vmul.f32 %v2349, %v2349
        %v3728 = vmul.f32 %v2350, %v2350
        %v3729 = vmul.f32 %v2351, %v2351
        %v3730 = vmul.f32 %v2352, %v2352
        %v3731 = vmul.f32 %v2353, %v2353
        %v3732 = vmul.f32 %v2354, %v2354
        %v3733 = vmul.f32 %v2355, %v2355
        %v3734 = vmul.f32 %v2356, %v2356
        %v3735 = vmul.f32 %v2357, %v2357
        %v3736 = vmul.f32 %v2358, %v2358
        %v3737 = vmul.f32 %v2359, %v2359
        %v3738 = vmul.f32 %v2360, %v2360
        %v3739 = vmul.f32 %v2361, %v2361
        %v3740 = vmul.f32 %v2362, %v2362
        %v3741 = vmul.f32 %v2363, %v2363
        %v3742 = vmul.f32 %v2364, %v2364
        %v3743 = vmul.f32 %v2365, %v2365
        %v3744 = vmul.f32 %v2366, %v2366
        %v3745 = vmul.f32 %v2367, %v2367
        %v3746 = vmul.f32 %v2368, %v2368
        %v3747 = vmul.f32 %v2369, %v2369
        %v3748 = vmul.f32 %v2370, %v2370
        %v3749 = vmul.f32 %v2371, %v2371
        %v3750 = vmul.f32 %v2372, %v2372
        %v3751 = vmul.f32 %v2373, %v2373
        %v3752 = vmul.f32 %v2374, %v2374
        %v3753 = vmul.f32 %v2375, %v2375
        %v3754 = vmul.f32 %v2376, %v2376
        %v3755 = vmul.f32 %v2377, %v2377
        %v3756 = vmul.f32 %v2378, %v2378
        %v3757 = vmul.f32 %v2379, %v2379
        %v3758 = vmul.f32 %v2380, %v2380
        %v3759 = vmul.f32 %v2381, %v2381
        %v3760 = vmul.f32 %v2382, %v2382
        %v3761 = vmul.f32 %v2383, %v2383
        %v3762 = vmul.f32 %v2384, %v2384
        %v3763 = vmul.f32 %v2385, %v2385
        %v3764 = vmul.f32 %v2386, %v2386
        %v3765 = vmul.f32 %v2387, %v2387
        %v3766 = vmul.f32 %v2388, %v2388
        %v3767 = vmul.f32 %v2389, %v2389
        %v3768 = vmul.f32 %v2390, %v2390
        %v3769 = vmul.f32 %v2391, %v2391
        %v3770 = vmul.f32 %v2392, %v2392
        %v3771 = vmul.f32 %v2393, %v2393
        %v3772 = vmul.f32 %v2394, %v2394
        %v3773 = vmul.f32 %v2395, %v2395
        %v3774 = vmul.f32 %v2396, %v2396
        %v3775 = vmul.f32 %v2397, %v2397
        %v3776 = vmul.f32 %v2398, %v2398
        %v3777 = vmul.f32 %v2399, %v2399
        %v3778 = vmul.f32 %v2400, %v2400
        %v3779 = vmul.f32 %v2401, %v2401
        %v3780 = vmul.f32 %v2402, %v2402
        %v3781 = vmul.f32 %v2403, %v2403
        %v3782 = vmul.f32 %v2404, %v2404
        %v3783 = vmul.f32 %v2405, %v2405
        %v3784 = vmul.f32 %v2406, %v2406
        %v3785 = vmul.f32 %v2407, %v2407
        %v3786 = vmul.f32 %v2408, %v2408
        %v3787 = vmul.f32 %v2409, %v2409
        %v3788 = vmul.f32 %v2410, %v2410
        %v3789 = vmul.f32 %v2411, %v2411
        %v3790 = vmul.f32 %v2412, %v2412
        %v3791 = vmul.f32 %v2413, %v2413
        %v3792 = vmul.f32 %v2414, %v2414
        %v3793 = vmul.f32 %v2415, %v2415
        %v3794 = vmul.f32 %v2416, %v2416
        %v3795 = vmul.f32 %v2417, %v2417
        %v3796 = vmul.f32 %v2418, %v2418
        %v3797 = vmul.f32 %v2419, %v2419
        %v3798 = vmul.f32 %v2420, %v2420
        %v3799 = vmul.f32 %v2421, %v2421
        %v3800 = vmul.f32 %v2422, %v2422
        %v3801 = vmul.f32 %v2423, %v2423
        %v3802 = vmul.f32 %v2424, %v2424
        %v3803 = vmul.f32 %v2425, %v2425
        %v3804 = vmul.f32 %v2426, %v2426
        %v3805 = vmul.f32 %v2427, %v2427
        %v3806 = vmul.f32 %v2428, %v2428
        %v3807 = vmul.f32 %v2429, %v2429
        %v3808 = vmul.f32 %v2430, %v2430
        %v3809 = vmul.f32 %v2431, %v2431
        %v3810 = vmul.f32 %v2432, %v2432
        %v3811 = vmul.f32 %v2433, %v2433
        %v3812 = vmul.f32 %v2434, %v2434
        %v3813 = vmul.f32 %v2435, %v2435
        %v3814 = vmul.f32 %v2436, %v2436
        %v3815 = vmul.f32 %v2437, %v2437
        %v3816 = vmul.f32 %v2438, %v2438
        %v3817 = vmul.f32 %v2439, %v2439
        %v3818 = vmul.f32 %v2440, %v2440
        %v3819 = vmul.f32 %v2441, %v2441
        %v3820 = vmul.f32 %v2442, %v2442
        %v3821 = vmul.f32 %v2443, %v2443
        %v3822 = vmul.f32 %v2444, %v2444
        %v3823 = vmul.f32 %v2445, %v2445
        %v3824 = vmul.f32 %v2446, %v2446
        %v3825 = vmul.f32 %v2447, %v2447
        %v3826 = vmul.f32 %v2448, %v2448
        %v3827 = vmul.f32 %v2449, %v2449
        %v3828 = vmul.f32 %v2450, %v2450
        %v3829 = vmul.f32 %v2451, %v2451
        %v3830 = vmul.f32 %v2452, %v2452
        %v3831 = vmul.f32 %v2453, %v2453
        %v3832 = vmul.f32 %v2454, %v2454
        %v3833 = vmul.f32 %v2455, %v2455
        %v3834 = vmul.f32 %v2456, %v2456
        %v3835 = vmul.f32 %v2457, %v2457
        %v3836 = vmul.f32 %v2458, %v2458
        %v3837 = vmul.f32 %v2459, %v2459
        %v3838 = vmul.f32 %v2460, %v2460
        %v3839 = vmul.f32 %v2461, %v2461
        %v3840 = vmul.f32 %v2462, %v2462
        %v3841 = vmul.f32 %v2463, %v2463
        %v3842 = vmul.f32 %v2464, %v2464
        %v3843 = vmul.f32 %v2465, %v2465
        %v3844 = vmul.f32 %v2466, %v2466
        %v3845 = vmul.f32 %v2467, %v2467
        %v3846 = vmul.f32 %v2468, %v2468
        %v3847 = vmul.f32 %v2469, %v2469
        %v3848 = vmul.f32 %v2470, %v2470
        %v3849 = vmul.f32 %v2471, %v2471
        %v3850 = vmul.f32 %v2472, %v2472
        %v3851 = vmul.f32 %v2473, %v2473
        %v3852 = vmul.f32 %v2474, %v2474
        %v3853 = vmul.f32 %v2475, %v2475
        %v3854 = vmul.f32 %v2476, %v2476
        %v3855 = vmul.f32 %v2477, %v2477
        %v3856 = vmul.f32 %v2478, %v2478
        %v3857 = vmul.f32 %v2479, %v2479
        %v3858 = vperm.slane %v412, 0
        %v3859 = vmul.f32 %v3686, %v3858
        %v3860 = vmul.f32 %v3687, %v3858
        %v3861 = vmul.f32 %v3688, %v3858
        %v3862 = vmul.f32 %v3689, %v3858
        %v3863 = vmul.f32 %v3690, %v3858
        %v3864 = vmul.f32 %v3691, %v3858
        %v3865 = vmul.f32 %v3692, %v3858
        %v3866 = vmul.f32 %v3693, %v3858
        %v3867 = vmul.f32 %v3694, %v3858
        %v3868 = vmul.f32 %v3695, %v3858
        %v3869 = vmul.f32 %v3696, %v3858
        %v3870 = vmul.f32 %v3697, %v3858
        %v3871 = vmul.f32 %v3698, %v3858
        %v3872 = vmul.f32 %v3699, %v3858
        %v3873 = vmul.f32 %v3700, %v3858
        %v3874 = vmul.f32 %v3701, %v3858
        %v3875 = vmul.f32 %v3702, %v3858
        %v3876 = vmul.f32 %v3703, %v3858
        %v3877 = vmul.f32 %v3704, %v3858
        %v3878 = vmul.f32 %v3705, %v3858
        %v3879 = vmul.f32 %v3706, %v3858
        %v3880 = vmul.f32 %v3707, %v3858
        %v3881 = vmul.f32 %v3708, %v3858
        %v3882 = vmul.f32 %v3709, %v3858
        %v3883 = vmul.f32 %v3710, %v3858
        %v3884 = vmul.f32 %v3711, %v3858
        %v3885 = vmul.f32 %v3712, %v3858
        %v3886 = vmul.f32 %v3713, %v3858
        %v3887 = vmul.f32 %v3714, %v3858
        %v3888 = vmul.f32 %v3715, %v3858
        %v3889 = vmul.f32 %v3716, %v3858
        %v3890 = vmul.f32 %v3717, %v3858
        %v3891 = vmul.f32 %v3718, %v3858
        %v3892 = vmul.f32 %v3719, %v3858
        %v3893 = vmul.f32 %v3720, %v3858
        %v3894 = vmul.f32 %v3721, %v3858
        %v3895 = vmul.f32 %v3722, %v3858
        %v3896 = vmul.f32 %v3723, %v3858
        %v3897 = vmul.f32 %v3724, %v3858
        %v3898 = vmul.f32 %v3725, %v3858
        %v3899 = vmul.f32 %v3726, %v3858
        %v3900 = vmul.f32 %v3727, %v3858
        %v3901 = vmul.f32 %v3728, %v3858
        %v3902 = vmul.f32 %v3729, %v3858
        %v3903 = vmul.f32 %v3730, %v3858
        %v3904 = vmul.f32 %v3731, %v3858
        %v3905 = vmul.f32 %v3732, %v3858
        %v3906 = vmul.f32 %v3733, %v3858
        %v3907 = vmul.f32 %v3734, %v3858
        %v3908 = vmul.f32 %v3735, %v3858
        %v3909 = vmul.f32 %v3736, %v3858
        %v3910 = vmul.f32 %v3737, %v3858
        %v3911 = vmul.f32 %v3738, %v3858
        %v3912 = vmul.f32 %v3739, %v3858
        %v3913 = vmul.f32 %v3740, %v3858
        %v3914 = vmul.f32 %v3741, %v3858
        %v3915 = vmul.f32 %v3742, %v3858
        %v3916 = vmul.f32 %v3743, %v3858
        %v3917 = vmul.f32 %v3744, %v3858
        %v3918 = vmul.f32 %v3745, %v3858
        %v3919 = vmul.f32 %v3746, %v3858
        %v3920 = vmul.f32 %v3747, %v3858
        %v3921 = vmul.f32 %v3748, %v3858
        %v3922 = vmul.f32 %v3749, %v3858
        %v3923 = vmul.f32 %v3750, %v3858
        %v3924 = vmul.f32 %v3751, %v3858
        %v3925 = vmul.f32 %v3752, %v3858
        %v3926 = vmul.f32 %v3753, %v3858
        %v3927 = vmul.f32 %v3754, %v3858
        %v3928 = vmul.f32 %v3755, %v3858
        %v3929 = vmul.f32 %v3756, %v3858
        %v3930 = vmul.f32 %v3757, %v3858
        %v3931 = vmul.f32 %v3758, %v3858
        %v3932 = vmul.f32 %v3759, %v3858
        %v3933 = vmul.f32 %v3760, %v3858
        %v3934 = vmul.f32 %v3761, %v3858
        %v3935 = vmul.f32 %v3762, %v3858
        %v3936 = vmul.f32 %v3763, %v3858
        %v3937 = vmul.f32 %v3764, %v3858
        %v3938 = vmul.f32 %v3765, %v3858
        %v3939 = vmul.f32 %v3766, %v3858
        %v3940 = vmul.f32 %v3767, %v3858
        %v3941 = vmul.f32 %v3768, %v3858
        %v3942 = vmul.f32 %v3769, %v3858
        %v3943 = vmul.f32 %v3770, %v3858
        %v3944 = vmul.f32 %v3771, %v3858
        %v3945 = vmul.f32 %v3772, %v3858
        %v3946 = vmul.f32 %v3773, %v3858
        %v3947 = vmul.f32 %v3774, %v3858
        %v3948 = vmul.f32 %v3775, %v3858
        %v3949 = vmul.f32 %v3776, %v3858
        %v3950 = vmul.f32 %v3777, %v3858
        %v3951 = vmul.f32 %v3778, %v3858
        %v3952 = vmul.f32 %v3779, %v3858
        %v3953 = vmul.f32 %v3780, %v3858
        %v3954 = vmul.f32 %v3781, %v3858
        %v3955 = vmul.f32 %v3782, %v3858
        %v3956 = vmul.f32 %v3783, %v3858
        %v3957 = vmul.f32 %v3784, %v3858
        %v3958 = vmul.f32 %v3785, %v3858
        %v3959 = vmul.f32 %v3786, %v3858
        %v3960 = vmul.f32 %v3787, %v3858
        %v3961 = vmul.f32 %v3788, %v3858
        %v3962 = vmul.f32 %v3789, %v3858
        %v3963 = vmul.f32 %v3790, %v3858
        %v3964 = vmul.f32 %v3791, %v3858
        %v3965 = vmul.f32 %v3792, %v3858
        %v3966 = vmul.f32 %v3793, %v3858
        %v3967 = vmul.f32 %v3794, %v3858
        %v3968 = vmul.f32 %v3795, %v3858
        %v3969 = vmul.f32 %v3796, %v3858
        %v3970 = vmul.f32 %v3797, %v3858
        %v3971 = vmul.f32 %v3798, %v3858
        %v3972 = vmul.f32 %v3799, %v3858
        %v3973 = vmul.f32 %v3800, %v3858
        %v3974 = vmul.f32 %v3801, %v3858
        %v3975 = vmul.f32 %v3802, %v3858
        %v3976 = vmul.f32 %v3803, %v3858
        %v3977 = vmul.f32 %v3804, %v3858
        %v3978 = vmul.f32 %v3805, %v3858
        %v3979 = vmul.f32 %v3806, %v3858
        %v3980 = vmul.f32 %v3807, %v3858
        %v3981 = vmul.f32 %v3808, %v3858
        %v3982 = vmul.f32 %v3809, %v3858
        %v3983 = vmul.f32 %v3810, %v3858
        %v3984 = vmul.f32 %v3811, %v3858
        %v3985 = vmul.f32 %v3812, %v3858
        %v3986 = vmul.f32 %v3813, %v3858
        %v3987 = vmul.f32 %v3814, %v3858
        %v3988 = vmul.f32 %v3815, %v3858
        %v3989 = vmul.f32 %v3816, %v3858
        %v3990 = vmul.f32 %v3817, %v3858
        %v3991 = vmul.f32 %v3818, %v3858
        %v3992 = vmul.f32 %v3819, %v3858
        %v3993 = vmul.f32 %v3820, %v3858
        %v3994 = vmul.f32 %v3821, %v3858
        %v3995 = vmul.f32 %v3822, %v3858
        %v3996 = vmul.f32 %v3823, %v3858
        %v3997 = vmul.f32 %v3824, %v3858
        %v3998 = vmul.f32 %v3825, %v3858
        %v3999 = vmul.f32 %v3826, %v3858
        %v4000 = vmul.f32 %v3827, %v3858
        %v4001 = vmul.f32 %v3828, %v3858
        %v4002 = vmul.f32 %v3829, %v3858
        %v4003 = vmul.f32 %v3830, %v3858
        %v4004 = vmul.f32 %v3831, %v3858
        %v4005 = vmul.f32 %v3832, %v3858
        %v4006 = vmul.f32 %v3833, %v3858
        %v4007 = vmul.f32 %v3834, %v3858
        %v4008 = vmul.f32 %v3835, %v3858
        %v4009 = vmul.f32 %v3836, %v3858
        %v4010 = vmul.f32 %v3837, %v3858
        %v4011 = vmul.f32 %v3838, %v3858
        %v4012 = vmul.f32 %v3839, %v3858
        %v4013 = vmul.f32 %v3840, %v3858
        %v4014 = vmul.f32 %v3841, %v3858
        %v4015 = vmul.f32 %v3842, %v3858
        %v4016 = vmul.f32 %v3843, %v3858
        %v4017 = vmul.f32 %v3844, %v3858
        %v4018 = vmul.f32 %v3845, %v3858
        %v4019 = vmul.f32 %v3846, %v3858
        %v4020 = vmul.f32 %v3847, %v3858
        %v4021 = vmul.f32 %v3848, %v3858
        %v4022 = vmul.f32 %v3849, %v3858
        %v4023 = vmul.f32 %v3850, %v3858
        %v4024 = vmul.f32 %v3851, %v3858
        %v4025 = vmul.f32 %v3852, %v3858
        %v4026 = vmul.f32 %v3853, %v3858
        %v4027 = vmul.f32 %v3854, %v3858
        %v4028 = vmul.f32 %v3855, %v3858
        %v4029 = vmul.f32 %v3856, %v3858
        %v4030 = vmul.f32 %v3857, %v3858
        %v4031 = vmul.f32 %v3514, %v3514
        %v4032 = vmul.f32 %v3515, %v3515
        %v4033 = vmul.f32 %v3516, %v3516
        %v4034 = vmul.f32 %v3517, %v3517
        %v4035 = vmul.f32 %v3518, %v3518
        %v4036 = vmul.f32 %v3519, %v3519
        %v4037 = vmul.f32 %v3520, %v3520
        %v4038 = vmul.f32 %v3521, %v3521
        %v4039 = vmul.f32 %v3522, %v3522
        %v4040 = vmul.f32 %v3523, %v3523
        %v4041 = vmul.f32 %v3524, %v3524
        %v4042 = vmul.f32 %v3525, %v3525
        %v4043 = vmul.f32 %v3526, %v3526
        %v4044 = vmul.f32 %v3527, %v3527
        %v4045 = vmul.f32 %v3528, %v3528
        %v4046 = vmul.f32 %v3529, %v3529
        %v4047 = vmul.f32 %v3530, %v3530
        %v4048 = vmul.f32 %v3531, %v3531
        %v4049 = vmul.f32 %v3532, %v3532
        %v4050 = vmul.f32 %v3533, %v3533
        %v4051 = vmul.f32 %v3534, %v3534
        %v4052 = vmul.f32 %v3535, %v3535
        %v4053 = vmul.f32 %v3536, %v3536
        %v4054 = vmul.f32 %v3537, %v3537
        %v4055 = vmul.f32 %v3538, %v3538
        %v4056 = vmul.f32 %v3539, %v3539
        %v4057 = vmul.f32 %v3540, %v3540
        %v4058 = vmul.f32 %v3541, %v3541
        %v4059 = vmul.f32 %v3542, %v3542
        %v4060 = vmul.f32 %v3543, %v3543
        %v4061 = vmul.f32 %v3544, %v3544
        %v4062 = vmul.f32 %v3545, %v3545
        %v4063 = vmul.f32 %v3546, %v3546
        %v4064 = vmul.f32 %v3547, %v3547
        %v4065 = vmul.f32 %v3548, %v3548
        %v4066 = vmul.f32 %v3549, %v3549
        %v4067 = vmul.f32 %v3550, %v3550
        %v4068 = vmul.f32 %v3551, %v3551
        %v4069 = vmul.f32 %v3552, %v3552
        %v4070 = vmul.f32 %v3553, %v3553
        %v4071 = vmul.f32 %v3554, %v3554
        %v4072 = vmul.f32 %v3555, %v3555
        %v4073 = vmul.f32 %v3556, %v3556
        %v4074 = vmul.f32 %v3557, %v3557
        %v4075 = vmul.f32 %v3558, %v3558
        %v4076 = vmul.f32 %v3559, %v3559
        %v4077 = vmul.f32 %v3560, %v3560
        %v4078 = vmul.f32 %v3561, %v3561
        %v4079 = vmul.f32 %v3562, %v3562
        %v4080 = vmul.f32 %v3563, %v3563
        %v4081 = vmul.f32 %v3564, %v3564
        %v4082 = vmul.f32 %v3565, %v3565
        %v4083 = vmul.f32 %v3566, %v3566
        %v4084 = vmul.f32 %v3567, %v3567
        %v4085 = vmul.f32 %v3568, %v3568
        %v4086 = vmul.f32 %v3569, %v3569
        %v4087 = vmul.f32 %v3570, %v3570
        %v4088 = vmul.f32 %v3571, %v3571
        %v4089 = vmul.f32 %v3572, %v3572
        %v4090 = vmul.f32 %v3573, %v3573
        %v4091 = vmul.f32 %v3574, %v3574
        %v4092 = vmul.f32 %v3575, %v3575
        %v4093 = vmul.f32 %v3576, %v3576
        %v4094 = vmul.f32 %v3577, %v3577
        %v4095 = vmul.f32 %v3578, %v3578
        %v4096 = vmul.f32 %v3579, %v3579
        %v4097 = vmul.f32 %v3580, %v3580
        %v4098 = vmul.f32 %v3581, %v3581
        %v4099 = vmul.f32 %v3582, %v3582
        %v4100 = vmul.f32 %v3583, %v3583
        %v4101 = vmul.f32 %v3584, %v3584
        %v4102 = vmul.f32 %v3585, %v3585
        %v4103 = vmul.f32 %v3586, %v3586
        %v4104 = vmul.f32 %v3587, %v3587
        %v4105 = vmul.f32 %v3588, %v3588
        %v4106 = vmul.f32 %v3589, %v3589
        %v4107 = vmul.f32 %v3590, %v3590
        %v4108 = vmul.f32 %v3591, %v3591
        %v4109 = vmul.f32 %v3592, %v3592
        %v4110 = vmul.f32 %v3593, %v3593
        %v4111 = vmul.f32 %v3594, %v3594
        %v4112 = vmul.f32 %v3595, %v3595
        %v4113 = vmul.f32 %v3596, %v3596
        %v4114 = vmul.f32 %v3597, %v3597
        %v4115 = vmul.f32 %v3598, %v3598
        %v4116 = vmul.f32 %v3599, %v3599
        %v4117 = vmul.f32 %v3600, %v3600
        %v4118 = vmul.f32 %v3601, %v3601
        %v4119 = vmul.f32 %v3602, %v3602
        %v4120 = vmul.f32 %v3603, %v3603
        %v4121 = vmul.f32 %v3604, %v3604
        %v4122 = vmul.f32 %v3605, %v3605
        %v4123 = vmul.f32 %v3606, %v3606
        %v4124 = vmul.f32 %v3607, %v3607
        %v4125 = vmul.f32 %v3608, %v3608
        %v4126 = vmul.f32 %v3609, %v3609
        %v4127 = vmul.f32 %v3610, %v3610
        %v4128 = vmul.f32 %v3611, %v3611
        %v4129 = vmul.f32 %v3612, %v3612
        %v4130 = vmul.f32 %v3613, %v3613
        %v4131 = vmul.f32 %v3614, %v3614
        %v4132 = vmul.f32 %v3615, %v3615
        %v4133 = vmul.f32 %v3616, %v3616
        %v4134 = vmul.f32 %v3617, %v3617
        %v4135 = vmul.f32 %v3618, %v3618
        %v4136 = vmul.f32 %v3619, %v3619
        %v4137 = vmul.f32 %v3620, %v3620
        %v4138 = vmul.f32 %v3621, %v3621
        %v4139 = vmul.f32 %v3622, %v3622
        %v4140 = vmul.f32 %v3623, %v3623
        %v4141 = vmul.f32 %v3624, %v3624
        %v4142 = vmul.f32 %v3625, %v3625
        %v4143 = vmul.f32 %v3626, %v3626
        %v4144 = vmul.f32 %v3627, %v3627
        %v4145 = vmul.f32 %v3628, %v3628
        %v4146 = vmul.f32 %v3629, %v3629
        %v4147 = vmul.f32 %v3630, %v3630
        %v4148 = vmul.f32 %v3631, %v3631
        %v4149 = vmul.f32 %v3632, %v3632
        %v4150 = vmul.f32 %v3633, %v3633
        %v4151 = vmul.f32 %v3634, %v3634
        %v4152 = vmul.f32 %v3635, %v3635
        %v4153 = vmul.f32 %v3636, %v3636
        %v4154 = vmul.f32 %v3637, %v3637
        %v4155 = vmul.f32 %v3638, %v3638
        %v4156 = vmul.f32 %v3639, %v3639
        %v4157 = vmul.f32 %v3640, %v3640
        %v4158 = vmul.f32 %v3641, %v3641
        %v4159 = vmul.f32 %v3642, %v3642
        %v4160 = vmul.f32 %v3643, %v3643
        %v4161 = vmul.f32 %v3644, %v3644
        %v4162 = vmul.f32 %v3645, %v3645
        %v4163 = vmul.f32 %v3646, %v3646
        %v4164 = vmul.f32 %v3647, %v3647
        %v4165 = vmul.f32 %v3648, %v3648
        %v4166 = vmul.f32 %v3649, %v3649
        %v4167 = vmul.f32 %v3650, %v3650
        %v4168 = vmul.f32 %v3651, %v3651
        %v4169 = vmul.f32 %v3652, %v3652
        %v4170 = vmul.f32 %v3653, %v3653
        %v4171 = vmul.f32 %v3654, %v3654
        %v4172 = vmul.f32 %v3655, %v3655
        %v4173 = vmul.f32 %v3656, %v3656
        %v4174 = vmul.f32 %v3657, %v3657
        %v4175 = vmul.f32 %v3658, %v3658
        %v4176 = vmul.f32 %v3659, %v3659
        %v4177 = vmul.f32 %v3660, %v3660
        %v4178 = vmul.f32 %v3661, %v3661
        %v4179 = vmul.f32 %v3662, %v3662
        %v4180 = vmul.f32 %v3663, %v3663
        %v4181 = vmul.f32 %v3664, %v3664
        %v4182 = vmul.f32 %v3665, %v3665
        %v4183 = vmul.f32 %v3666, %v3666
        %v4184 = vmul.f32 %v3667, %v3667
        %v4185 = vmul.f32 %v3668, %v3668
        %v4186 = vmul.f32 %v3669, %v3669
        %v4187 = vmul.f32 %v3670, %v3670
        %v4188 = vmul.f32 %v3671, %v3671
        %v4189 = vmul.f32 %v3672, %v3672
        %v4190 = vmul.f32 %v3673, %v3673
        %v4191 = vmul.f32 %v3674, %v3674
        %v4192 = vmul.f32 %v3675, %v3675
        %v4193 = vmul.f32 %v3676, %v3676
        %v4194 = vmul.f32 %v3677, %v3677
        %v4195 = vmul.f32 %v3678, %v3678
        %v4196 = vmul.f32 %v3679, %v3679
        %v4197 = vmul.f32 %v3680, %v3680
        %v4198 = vmul.f32 %v3681, %v3681
        %v4199 = vmul.f32 %v3682, %v3682
        %v4200 = vmul.f32 %v3683, %v3683
        %v4201 = vmul.f32 %v3684, %v3684
        %v4202 = vmul.f32 %v3685, %v3685
        %v4203 = vperm.slane %v413, 0
        %v4204 = vmul.f32 %v4031, %v4203
        %v4205 = vmul.f32 %v4032, %v4203
        %v4206 = vmul.f32 %v4033, %v4203
        %v4207 = vmul.f32 %v4034, %v4203
        %v4208 = vmul.f32 %v4035, %v4203
        %v4209 = vmul.f32 %v4036, %v4203
        %v4210 = vmul.f32 %v4037, %v4203
        %v4211 = vmul.f32 %v4038, %v4203
        %v4212 = vmul.f32 %v4039, %v4203
        %v4213 = vmul.f32 %v4040, %v4203
        %v4214 = vmul.f32 %v4041, %v4203
        %v4215 = vmul.f32 %v4042, %v4203
        %v4216 = vmul.f32 %v4043, %v4203
        %v4217 = vmul.f32 %v4044, %v4203
        %v4218 = vmul.f32 %v4045, %v4203
        %v4219 = vmul.f32 %v4046, %v4203
        %v4220 = vmul.f32 %v4047, %v4203
        %v4221 = vmul.f32 %v4048, %v4203
        %v4222 = vmul.f32 %v4049, %v4203
        %v4223 = vmul.f32 %v4050, %v4203
        %v4224 = vmul.f32 %v4051, %v4203
        %v4225 = vmul.f32 %v4052, %v4203
        %v4226 = vmul.f32 %v4053, %v4203
        %v4227 = vmul.f32 %v4054, %v4203
        %v4228 = vmul.f32 %v4055, %v4203
        %v4229 = vmul.f32 %v4056, %v4203
        %v4230 = vmul.f32 %v4057, %v4203
        %v4231 = vmul.f32 %v4058, %v4203
        %v4232 = vmul.f32 %v4059, %v4203
        %v4233 = vmul.f32 %v4060, %v4203
        %v4234 = vmul.f32 %v4061, %v4203
        %v4235 = vmul.f32 %v4062, %v4203
        %v4236 = vmul.f32 %v4063, %v4203
        %v4237 = vmul.f32 %v4064, %v4203
        %v4238 = vmul.f32 %v4065, %v4203
        %v4239 = vmul.f32 %v4066, %v4203
        %v4240 = vmul.f32 %v4067, %v4203
        %v4241 = vmul.f32 %v4068, %v4203
        %v4242 = vmul.f32 %v4069, %v4203
        %v4243 = vmul.f32 %v4070, %v4203
        %v4244 = vmul.f32 %v4071, %v4203
        %v4245 = vmul.f32 %v4072, %v4203
        %v4246 = vmul.f32 %v4073, %v4203
        %v4247 = vmul.f32 %v4074, %v4203
        %v4248 = vmul.f32 %v4075, %v4203
        %v4249 = vmul.f32 %v4076, %v4203
        %v4250 = vmul.f32 %v4077, %v4203
        %v4251 = vmul.f32 %v4078, %v4203
        %v4252 = vmul.f32 %v4079, %v4203
        %v4253 = vmul.f32 %v4080, %v4203
        %v4254 = vmul.f32 %v4081, %v4203
        %v4255 = vmul.f32 %v4082, %v4203
        %v4256 = vmul.f32 %v4083, %v4203
        %v4257 = vmul.f32 %v4084, %v4203
        %v4258 = vmul.f32 %v4085, %v4203
        %v4259 = vmul.f32 %v4086, %v4203
        %v4260 = vmul.f32 %v4087, %v4203
        %v4261 = vmul.f32 %v4088, %v4203
        %v4262 = vmul.f32 %v4089, %v4203
        %v4263 = vmul.f32 %v4090, %v4203
        %v4264 = vmul.f32 %v4091, %v4203
        %v4265 = vmul.f32 %v4092, %v4203
        %v4266 = vmul.f32 %v4093, %v4203
        %v4267 = vmul.f32 %v4094, %v4203
        %v4268 = vmul.f32 %v4095, %v4203
        %v4269 = vmul.f32 %v4096, %v4203
        %v4270 = vmul.f32 %v4097, %v4203
        %v4271 = vmul.f32 %v4098, %v4203
        %v4272 = vmul.f32 %v4099, %v4203
        %v4273 = vmul.f32 %v4100, %v4203
        %v4274 = vmul.f32 %v4101, %v4203
        %v4275 = vmul.f32 %v4102, %v4203
        %v4276 = vmul.f32 %v4103, %v4203
        %v4277 = vmul.f32 %v4104, %v4203
        %v4278 = vmul.f32 %v4105, %v4203
        %v4279 = vmul.f32 %v4106, %v4203
        %v4280 = vmul.f32 %v4107, %v4203
        %v4281 = vmul.f32 %v4108, %v4203
        %v4282 = vmul.f32 %v4109, %v4203
        %v4283 = vmul.f32 %v4110, %v4203
        %v4284 = vmul.f32 %v4111, %v4203
        %v4285 = vmul.f32 %v4112, %v4203
        %v4286 = vmul.f32 %v4113, %v4203
        %v4287 = vmul.f32 %v4114, %v4203
        %v4288 = vmul.f32 %v4115, %v4203
        %v4289 = vmul.f32 %v4116, %v4203
        %v4290 = vmul.f32 %v4117, %v4203
        %v4291 = vmul.f32 %v4118, %v4203
        %v4292 = vmul.f32 %v4119, %v4203
        %v4293 = vmul.f32 %v4120, %v4203
        %v4294 = vmul.f32 %v4121, %v4203
        %v4295 = vmul.f32 %v4122, %v4203
        %v4296 = vmul.f32 %v4123, %v4203
        %v4297 = vmul.f32 %v4124, %v4203
        %v4298 = vmul.f32 %v4125, %v4203
        %v4299 = vmul.f32 %v4126, %v4203
        %v4300 = vmul.f32 %v4127, %v4203
        %v4301 = vmul.f32 %v4128, %v4203
        %v4302 = vmul.f32 %v4129, %v4203
        %v4303 = vmul.f32 %v4130, %v4203
        %v4304 = vmul.f32 %v4131, %v4203
        %v4305 = vmul.f32 %v4132, %v4203
        %v4306 = vmul.f32 %v4133, %v4203
        %v4307 = vmul.f32 %v4134, %v4203
        %v4308 = vmul.f32 %v4135, %v4203
        %v4309 = vmul.f32 %v4136, %v4203
        %v4310 = vmul.f32 %v4137, %v4203
        %v4311 = vmul.f32 %v4138, %v4203
        %v4312 = vmul.f32 %v4139, %v4203
        %v4313 = vmul.f32 %v4140, %v4203
        %v4314 = vmul.f32 %v4141, %v4203
        %v4315 = vmul.f32 %v4142, %v4203
        %v4316 = vmul.f32 %v4143, %v4203
        %v4317 = vmul.f32 %v4144, %v4203
        %v4318 = vmul.f32 %v4145, %v4203
        %v4319 = vmul.f32 %v4146, %v4203
        %v4320 = vmul.f32 %v4147, %v4203
        %v4321 = vmul.f32 %v4148, %v4203
        %v4322 = vmul.f32 %v4149, %v4203
        %v4323 = vmul.f32 %v4150, %v4203
        %v4324 = vmul.f32 %v4151, %v4203
        %v4325 = vmul.f32 %v4152, %v4203
        %v4326 = vmul.f32 %v4153, %v4203
        %v4327 = vmul.f32 %v4154, %v4203
        %v4328 = vmul.f32 %v4155, %v4203
        %v4329 = vmul.f32 %v4156, %v4203
        %v4330 = vmul.f32 %v4157, %v4203
        %v4331 = vmul.f32 %v4158, %v4203
        %v4332 = vmul.f32 %v4159, %v4203
        %v4333 = vmul.f32 %v4160, %v4203
        %v4334 = vmul.f32 %v4161, %v4203
        %v4335 = vmul.f32 %v4162, %v4203
        %v4336 = vmul.f32 %v4163, %v4203
        %v4337 = vmul.f32 %v4164, %v4203
        %v4338 = vmul.f32 %v4165, %v4203
        %v4339 = vmul.f32 %v4166, %v4203
        %v4340 = vmul.f32 %v4167, %v4203
        %v4341 = vmul.f32 %v4168, %v4203
        %v4342 = vmul.f32 %v4169, %v4203
        %v4343 = vmul.f32 %v4170, %v4203
        %v4344 = vmul.f32 %v4171, %v4203
        %v4345 = vmul.f32 %v4172, %v4203
        %v4346 = vmul.f32 %v4173, %v4203
        %v4347 = vmul.f32 %v4174, %v4203
        %v4348 = vmul.f32 %v4175, %v4203
        %v4349 = vmul.f32 %v4176, %v4203
        %v4350 = vmul.f32 %v4177, %v4203
        %v4351 = vmul.f32 %v4178, %v4203
        %v4352 = vmul.f32 %v4179, %v4203
        %v4353 = vmul.f32 %v4180, %v4203
        %v4354 = vmul.f32 %v4181, %v4203
        %v4355 = vmul.f32 %v4182, %v4203
        %v4356 = vmul.f32 %v4183, %v4203
        %v4357 = vmul.f32 %v4184, %v4203
        %v4358 = vmul.f32 %v4185, %v4203
        %v4359 = vmul.f32 %v4186, %v4203
        %v4360 = vmul.f32 %v4187, %v4203
        %v4361 = vmul.f32 %v4188, %v4203
        %v4362 = vmul.f32 %v4189, %v4203
        %v4363 = vmul.f32 %v4190, %v4203
        %v4364 = vmul.f32 %v4191, %v4203
        %v4365 = vmul.f32 %v4192, %v4203
        %v4366 = vmul.f32 %v4193, %v4203
        %v4367 = vmul.f32 %v4194, %v4203
        %v4368 = vmul.f32 %v4195, %v4203
        %v4369 = vmul.f32 %v4196, %v4203
        %v4370 = vmul.f32 %v4197, %v4203
        %v4371 = vmul.f32 %v4198, %v4203
        %v4372 = vmul.f32 %v4199, %v4203
        %v4373 = vmul.f32 %v4200, %v4203
        %v4374 = vmul.f32 %v4201, %v4203
        %v4375 = vmul.f32 %v4202, %v4203
        %v4376 = vadd.f32 %v3859, %v4204
        %v4377 = vadd.f32 %v3860, %v4205
        %v4378 = vadd.f32 %v3861, %v4206
        %v4379 = vadd.f32 %v3862, %v4207
        %v4380 = vadd.f32 %v3863, %v4208
        %v4381 = vadd.f32 %v3864, %v4209
        %v4382 = vadd.f32 %v3865, %v4210
        %v4383 = vadd.f32 %v3866, %v4211
        %v4384 = vadd.f32 %v3867, %v4212
        %v4385 = vadd.f32 %v3868, %v4213
        %v4386 = vadd.f32 %v3869, %v4214
        %v4387 = vadd.f32 %v3870, %v4215
        %v4388 = vadd.f32 %v3871, %v4216
        %v4389 = vadd.f32 %v3872, %v4217
        %v4390 = vadd.f32 %v3873, %v4218
        %v4391 = vadd.f32 %v3874, %v4219
        %v4392 = vadd.f32 %v3875, %v4220
        %v4393 = vadd.f32 %v3876, %v4221
        %v4394 = vadd.f32 %v3877, %v4222
        %v4395 = vadd.f32 %v3878, %v4223
        %v4396 = vadd.f32 %v3879, %v4224
        %v4397 = vadd.f32 %v3880, %v4225
        %v4398 = vadd.f32 %v3881, %v4226
        %v4399 = vadd.f32 %v3882, %v4227
        %v4400 = vadd.f32 %v3883, %v4228
        %v4401 = vadd.f32 %v3884, %v4229
        %v4402 = vadd.f32 %v3885, %v4230
        %v4403 = vadd.f32 %v3886, %v4231
        %v4404 = vadd.f32 %v3887, %v4232
        %v4405 = vadd.f32 %v3888, %v4233
        %v4406 = vadd.f32 %v3889, %v4234
        %v4407 = vadd.f32 %v3890, %v4235
        %v4408 = vadd.f32 %v3891, %v4236
        %v4409 = vadd.f32 %v3892, %v4237
        %v4410 = vadd.f32 %v3893, %v4238
        %v4411 = vadd.f32 %v3894, %v4239
        %v4412 = vadd.f32 %v3895, %v4240
        %v4413 = vadd.f32 %v3896, %v4241
        %v4414 = vadd.f32 %v3897, %v4242
        %v4415 = vadd.f32 %v3898, %v4243
        %v4416 = vadd.f32 %v3899, %v4244
        %v4417 = vadd.f32 %v3900, %v4245
        %v4418 = vadd.f32 %v3901, %v4246
        %v4419 = vadd.f32 %v3902, %v4247
        %v4420 = vadd.f32 %v3903, %v4248
        %v4421 = vadd.f32 %v3904, %v4249
        %v4422 = vadd.f32 %v3905, %v4250
        %v4423 = vadd.f32 %v3906, %v4251
        %v4424 = vadd.f32 %v3907, %v4252
        %v4425 = vadd.f32 %v3908, %v4253
        %v4426 = vadd.f32 %v3909, %v4254
        %v4427 = vadd.f32 %v3910, %v4255
        %v4428 = vadd.f32 %v3911, %v4256
        %v4429 = vadd.f32 %v3912, %v4257
        %v4430 = vadd.f32 %v3913, %v4258
        %v4431 = vadd.f32 %v3914, %v4259
        %v4432 = vadd.f32 %v3915, %v4260
        %v4433 = vadd.f32 %v3916, %v4261
        %v4434 = vadd.f32 %v3917, %v4262
        %v4435 = vadd.f32 %v3918, %v4263
        %v4436 = vadd.f32 %v3919, %v4264
        %v4437 = vadd.f32 %v3920, %v4265
        %v4438 = vadd.f32 %v3921, %v4266
        %v4439 = vadd.f32 %v3922, %v4267
        %v4440 = vadd.f32 %v3923, %v4268
        %v4441 = vadd.f32 %v3924, %v4269
        %v4442 = vadd.f32 %v3925, %v4270
        %v4443 = vadd.f32 %v3926, %v4271
        %v4444 = vadd.f32 %v3927, %v4272
        %v4445 = vadd.f32 %v3928, %v4273
        %v4446 = vadd.f32 %v3929, %v4274
        %v4447 = vadd.f32 %v3930, %v4275
        %v4448 = vadd.f32 %v3931, %v4276
        %v4449 = vadd.f32 %v3932, %v4277
        %v4450 = vadd.f32 %v3933, %v4278
        %v4451 = vadd.f32 %v3934, %v4279
        %v4452 = vadd.f32 %v3935, %v4280
        %v4453 = vadd.f32 %v3936, %v4281
        %v4454 = vadd.f32 %v3937, %v4282
        %v4455 = vadd.f32 %v3938, %v4283
        %v4456 = vadd.f32 %v3939, %v4284
        %v4457 = vadd.f32 %v3940, %v4285
        %v4458 = vadd.f32 %v3941, %v4286
        %v4459 = vadd.f32 %v3942, %v4287
        %v4460 = vadd.f32 %v3943, %v4288
        %v4461 = vadd.f32 %v3944, %v4289
        %v4462 = vadd.f32 %v3945, %v4290
        %v4463 = vadd.f32 %v3946, %v4291
        %v4464 = vadd.f32 %v3947, %v4292
        %v4465 = vadd.f32 %v3948, %v4293
        %v4466 = vadd.f32 %v3949, %v4294
        %v4467 = vadd.f32 %v3950, %v4295
        %v4468 = vadd.f32 %v3951, %v4296
        %v4469 = vadd.f32 %v3952, %v4297
        %v4470 = vadd.f32 %v3953, %v4298
        %v4471 = vadd.f32 %v3954, %v4299
        %v4472 = vadd.f32 %v3955, %v4300
        %v4473 = vadd.f32 %v3956, %v4301
        %v4474 = vadd.f32 %v3957, %v4302
        %v4475 = vadd.f32 %v3958, %v4303
        %v4476 = vadd.f32 %v3959, %v4304
        %v4477 = vadd.f32 %v3960, %v4305
        %v4478 = vadd.f32 %v3961, %v4306
        %v4479 = vadd.f32 %v3962, %v4307
        %v4480 = vadd.f32 %v3963, %v4308
        %v4481 = vadd.f32 %v3964, %v4309
        %v4482 = vadd.f32 %v3965, %v4310
        %v4483 = vadd.f32 %v3966, %v4311
        %v4484 = vadd.f32 %v3967, %v4312
        %v4485 = vadd.f32 %v3968, %v4313
        %v4486 = vadd.f32 %v3969, %v4314
        %v4487 = vadd.f32 %v3970, %v4315
        %v4488 = vadd.f32 %v3971, %v4316
        %v4489 = vadd.f32 %v3972, %v4317
        %v4490 = vadd.f32 %v3973, %v4318
        %v4491 = vadd.f32 %v3974, %v4319
        %v4492 = vadd.f32 %v3975, %v4320
        %v4493 = vadd.f32 %v3976, %v4321
        %v4494 = vadd.f32 %v3977, %v4322
        %v4495 = vadd.f32 %v3978, %v4323
        %v4496 = vadd.f32 %v3979, %v4324
        %v4497 = vadd.f32 %v3980, %v4325
        %v4498 = vadd.f32 %v3981, %v4326
        %v4499 = vadd.f32 %v3982, %v4327
        %v4500 = vadd.f32 %v3983, %v4328
        %v4501 = vadd.f32 %v3984, %v4329
        %v4502 = vadd.f32 %v3985, %v4330
        %v4503 = vadd.f32 %v3986, %v4331
        %v4504 = vadd.f32 %v3987, %v4332
        %v4505 = vadd.f32 %v3988, %v4333
        %v4506 = vadd.f32 %v3989, %v4334
        %v4507 = vadd.f32 %v3990, %v4335
        %v4508 = vadd.f32 %v3991, %v4336
        %v4509 = vadd.f32 %v3992, %v4337
        %v4510 = vadd.f32 %v3993, %v4338
        %v4511 = vadd.f32 %v3994, %v4339
        %v4512 = vadd.f32 %v3995, %v4340
        %v4513 = vadd.f32 %v3996, %v4341
        %v4514 = vadd.f32 %v3997, %v4342
        %v4515 = vadd.f32 %v3998, %v4343
        %v4516 = vadd.f32 %v3999, %v4344
        %v4517 = vadd.f32 %v4000, %v4345
        %v4518 = vadd.f32 %v4001, %v4346
        %v4519 = vadd.f32 %v4002, %v4347
        %v4520 = vadd.f32 %v4003, %v4348
        %v4521 = vadd.f32 %v4004, %v4349
        %v4522 = vadd.f32 %v4005, %v4350
        %v4523 = vadd.f32 %v4006, %v4351
        %v4524 = vadd.f32 %v4007, %v4352
        %v4525 = vadd.f32 %v4008, %v4353
        %v4526 = vadd.f32 %v4009, %v4354
        %v4527 = vadd.f32 %v4010, %v4355
        %v4528 = vadd.f32 %v4011, %v4356
        %v4529 = vadd.f32 %v4012, %v4357
        %v4530 = vadd.f32 %v4013, %v4358
        %v4531 = vadd.f32 %v4014, %v4359
        %v4532 = vadd.f32 %v4015, %v4360
        %v4533 = vadd.f32 %v4016, %v4361
        %v4534 = vadd.f32 %v4017, %v4362
        %v4535 = vadd.f32 %v4018, %v4363
        %v4536 = vadd.f32 %v4019, %v4364
        %v4537 = vadd.f32 %v4020, %v4365
        %v4538 = vadd.f32 %v4021, %v4366
        %v4539 = vadd.f32 %v4022, %v4367
        %v4540 = vadd.f32 %v4023, %v4368
        %v4541 = vadd.f32 %v4024, %v4369
        %v4542 = vadd.f32 %v4025, %v4370
        %v4543 = vadd.f32 %v4026, %v4371
        %v4544 = vadd.f32 %v4027, %v4372
        %v4545 = vadd.f32 %v4028, %v4373
        %v4546 = vadd.f32 %v4029, %v4374
        %v4547 = vadd.f32 %v4030, %v4375
        %v4548 = vmul.f32 %v4376, 1.442695
        %v4549 = vpow.pop %v4548
        %v4550 = vmul.f32 %v4377, 1.442695
        %v4551 = vpow.pop %v4550
        %v4552 = vmul.f32 %v4378, 1.442695
        %v4553 = vpow.pop %v4552
        %v4554 = vmul.f32 %v4379, 1.442695
        %v4555 = vpow.pop %v4554
        %v4556 = vmul.f32 %v4380, 1.442695
        %v4557 = vpow.pop %v4556
        %v4558 = vmul.f32 %v4381, 1.442695
        %v4559 = vpow.pop %v4558
        %v4560 = vmul.f32 %v4382, 1.442695
        %v4561 = vpow.pop %v4560
        %v4562 = vmul.f32 %v4383, 1.442695
        %v4563 = vpow.pop %v4562
        %v4564 = vmul.f32 %v4384, 1.442695
        %v4565 = vpow.pop %v4564
        %v4566 = vmul.f32 %v4385, 1.442695
        %v4567 = vpow.pop %v4566
        %v4568 = vmul.f32 %v4386, 1.442695
        %v4569 = vpow.pop %v4568
        %v4570 = vmul.f32 %v4387, 1.442695
        %v4571 = vpow.pop %v4570
        %v4572 = vmul.f32 %v4388, 1.442695
        %v4573 = vpow.pop %v4572
        %v4574 = vmul.f32 %v4389, 1.442695
        %v4575 = vpow.pop %v4574
        %v4576 = vmul.f32 %v4390, 1.442695
        %v4577 = vpow.pop %v4576
        %v4578 = vmul.f32 %v4391, 1.442695
        %v4579 = vpow.pop %v4578
        %v4580 = vmul.f32 %v4392, 1.442695
        %v4581 = vpow.pop %v4580
        %v4582 = vmul.f32 %v4393, 1.442695
        %v4583 = vpow.pop %v4582
        %v4584 = vmul.f32 %v4394, 1.442695
        %v4585 = vpow.pop %v4584
        %v4586 = vmul.f32 %v4395, 1.442695
        %v4587 = vpow.pop %v4586
        %v4588 = vmul.f32 %v4396, 1.442695
        %v4589 = vpow.pop %v4588
        %v4590 = vmul.f32 %v4397, 1.442695
        %v4591 = vpow.pop %v4590
        %v4592 = vmul.f32 %v4398, 1.442695
        %v4593 = vpow.pop %v4592
        %v4594 = vmul.f32 %v4399, 1.442695
        %v4595 = vpow.pop %v4594
        %v4596 = vmul.f32 %v4400, 1.442695
        %v4597 = vpow.pop %v4596
        %v4598 = vmul.f32 %v4401, 1.442695
        %v4599 = vpow.pop %v4598
        %v4600 = vmul.f32 %v4402, 1.442695
        %v4601 = vpow.pop %v4600
        %v4602 = vmul.f32 %v4403, 1.442695
        %v4603 = vpow.pop %v4602
        %v4604 = vmul.f32 %v4404, 1.442695
        %v4605 = vpow.pop %v4604
        %v4606 = vmul.f32 %v4405, 1.442695
        %v4607 = vpow.pop %v4606
        %v4608 = vmul.f32 %v4406, 1.442695
        %v4609 = vpow.pop %v4608
        %v4610 = vmul.f32 %v4407, 1.442695
        %v4611 = vpow.pop %v4610
        %v4612 = vmul.f32 %v4408, 1.442695
        %v4613 = vpow.pop %v4612
        %v4614 = vmul.f32 %v4409, 1.442695
        %v4615 = vpow.pop %v4614
        %v4616 = vmul.f32 %v4410, 1.442695
        %v4617 = vpow.pop %v4616
        %v4618 = vmul.f32 %v4411, 1.442695
        %v4619 = vpow.pop %v4618
        %v4620 = vmul.f32 %v4412, 1.442695
        %v4621 = vpow.pop %v4620
        %v4622 = vmul.f32 %v4413, 1.442695
        %v4623 = vpow.pop %v4622
        %v4624 = vmul.f32 %v4414, 1.442695
        %v4625 = vpow.pop %v4624
        %v4626 = vmul.f32 %v4415, 1.442695
        %v4627 = vpow.pop %v4626
        %v4628 = vmul.f32 %v4416, 1.442695
        %v4629 = vpow.pop %v4628
        %v4630 = vmul.f32 %v4417, 1.442695
        %v4631 = vpow.pop %v4630
        %v4632 = vmul.f32 %v4418, 1.442695
        %v4633 = vpow.pop %v4632
        %v4634 = vmul.f32 %v4419, 1.442695
        %v4635 = vpow.pop %v4634
        %v4636 = vmul.f32 %v4420, 1.442695
        %v4637 = vpow.pop %v4636
        %v4638 = vmul.f32 %v4421, 1.442695
        %v4639 = vpow.pop %v4638
        %v4640 = vmul.f32 %v4422, 1.442695
        %v4641 = vpow.pop %v4640
        %v4642 = vmul.f32 %v4423, 1.442695
        %v4643 = vpow.pop %v4642
        %v4644 = vmul.f32 %v4424, 1.442695
        %v4645 = vpow.pop %v4644
        %v4646 = vmul.f32 %v4425, 1.442695
        %v4647 = vpow.pop %v4646
        %v4648 = vmul.f32 %v4426, 1.442695
        %v4649 = vpow.pop %v4648
        %v4650 = vmul.f32 %v4427, 1.442695
        %v4651 = vpow.pop %v4650
        %v4652 = vmul.f32 %v4428, 1.442695
        %v4653 = vpow.pop %v4652
        %v4654 = vmul.f32 %v4429, 1.442695
        %v4655 = vpow.pop %v4654
        %v4656 = vmul.f32 %v4430, 1.442695
        %v4657 = vpow.pop %v4656
        %v4658 = vmul.f32 %v4431, 1.442695
        %v4659 = vpow.pop %v4658
        %v4660 = vmul.f32 %v4432, 1.442695
        %v4661 = vpow.pop %v4660
        %v4662 = vmul.f32 %v4433, 1.442695
        %v4663 = vpow.pop %v4662
        %v4664 = vmul.f32 %v4434, 1.442695
        %v4665 = vpow.pop %v4664
        %v4666 = vmul.f32 %v4435, 1.442695
        %v4667 = vpow.pop %v4666
        %v4668 = vmul.f32 %v4436, 1.442695
        %v4669 = vpow.pop %v4668
        %v4670 = vmul.f32 %v4437, 1.442695
        %v4671 = vpow.pop %v4670
        %v4672 = vmul.f32 %v4438, 1.442695
        %v4673 = vpow.pop %v4672
        %v4674 = vmul.f32 %v4439, 1.442695
        %v4675 = vpow.pop %v4674
        %v4676 = vmul.f32 %v4440, 1.442695
        %v4677 = vpow.pop %v4676
        %v4678 = vmul.f32 %v4441, 1.442695
        %v4679 = vpow.pop %v4678
        %v4680 = vmul.f32 %v4442, 1.442695
        %v4681 = vpow.pop %v4680
        %v4682 = vmul.f32 %v4443, 1.442695
        %v4683 = vpow.pop %v4682
        %v4684 = vmul.f32 %v4444, 1.442695
        %v4685 = vpow.pop %v4684
        %v4686 = vmul.f32 %v4445, 1.442695
        %v4687 = vpow.pop %v4686
        %v4688 = vmul.f32 %v4446, 1.442695
        %v4689 = vpow.pop %v4688
        %v4690 = vmul.f32 %v4447, 1.442695
        %v4691 = vpow.pop %v4690
        %v4692 = vmul.f32 %v4448, 1.442695
        %v4693 = vpow.pop %v4692
        %v4694 = vmul.f32 %v4449, 1.442695
        %v4695 = vpow.pop %v4694
        %v4696 = vmul.f32 %v4450, 1.442695
        %v4697 = vpow.pop %v4696
        %v4698 = vmul.f32 %v4451, 1.442695
        %v4699 = vpow.pop %v4698
        %v4700 = vmul.f32 %v4452, 1.442695
        %v4701 = vpow.pop %v4700
        %v4702 = vmul.f32 %v4453, 1.442695
        %v4703 = vpow.pop %v4702
        %v4704 = vmul.f32 %v4454, 1.442695
        %v4705 = vpow.pop %v4704
        %v4706 = vmul.f32 %v4455, 1.442695
        %v4707 = vpow.pop %v4706
        %v4708 = vmul.f32 %v4456, 1.442695
        %v4709 = vpow.pop %v4708
        %v4710 = vmul.f32 %v4457, 1.442695
        %v4711 = vpow.pop %v4710
        %v4712 = vmul.f32 %v4458, 1.442695
        %v4713 = vpow.pop %v4712
        %v4714 = vmul.f32 %v4459, 1.442695
        %v4715 = vpow.pop %v4714
        %v4716 = vmul.f32 %v4460, 1.442695
        %v4717 = vpow.pop %v4716
        %v4718 = vmul.f32 %v4461, 1.442695
        %v4719 = vpow.pop %v4718
        %v4720 = vmul.f32 %v4462, 1.442695
        %v4721 = vpow.pop %v4720
        %v4722 = vmul.f32 %v4463, 1.442695
        %v4723 = vpow.pop %v4722
        %v4724 = vmul.f32 %v4464, 1.442695
        %v4725 = vpow.pop %v4724
        %v4726 = vmul.f32 %v4465, 1.442695
        %v4727 = vpow.pop %v4726
        %v4728 = vmul.f32 %v4466, 1.442695
        %v4729 = vpow.pop %v4728
        %v4730 = vmul.f32 %v4467, 1.442695
        %v4731 = vpow.pop %v4730
        %v4732 = vmul.f32 %v4468, 1.442695
        %v4733 = vpow.pop %v4732
        %v4734 = vmul.f32 %v4469, 1.442695
        %v4735 = vpow.pop %v4734
        %v4736 = vmul.f32 %v4470, 1.442695
        %v4737 = vpow.pop %v4736
        %v4738 = vmul.f32 %v4471, 1.442695
        %v4739 = vpow.pop %v4738
        %v4740 = vmul.f32 %v4472, 1.442695
        %v4741 = vpow.pop %v4740
        %v4742 = vmul.f32 %v4473, 1.442695
        %v4743 = vpow.pop %v4742
        %v4744 = vmul.f32 %v4474, 1.442695
        %v4745 = vpow.pop %v4744
        %v4746 = vmul.f32 %v4475, 1.442695
        %v4747 = vpow.pop %v4746
        %v4748 = vmul.f32 %v4476, 1.442695
        %v4749 = vpow.pop %v4748
        %v4750 = vmul.f32 %v4477, 1.442695
        %v4751 = vpow.pop %v4750
        %v4752 = vmul.f32 %v4478, 1.442695
        %v4753 = vpow.pop %v4752
        %v4754 = vmul.f32 %v4479, 1.442695
        %v4755 = vpow.pop %v4754
        %v4756 = vmul.f32 %v4480, 1.442695
        %v4757 = vpow.pop %v4756
        %v4758 = vmul.f32 %v4481, 1.442695
        %v4759 = vpow.pop %v4758
        %v4760 = vmul.f32 %v4482, 1.442695
        %v4761 = vpow.pop %v4760
        %v4762 = vmul.f32 %v4483, 1.442695
        %v4763 = vpow.pop %v4762
        %v4764 = vmul.f32 %v4484, 1.442695
        %v4765 = vpow.pop %v4764
        %v4766 = vmul.f32 %v4485, 1.442695
        %v4767 = vpow.pop %v4766
        %v4768 = vmul.f32 %v4486, 1.442695
        %v4769 = vpow.pop %v4768
        %v4770 = vmul.f32 %v4487, 1.442695
        %v4771 = vpow.pop %v4770
        %v4772 = vmul.f32 %v4488, 1.442695
        %v4773 = vpow.pop %v4772
        %v4774 = vmul.f32 %v4489, 1.442695
        %v4775 = vpow.pop %v4774
        %v4776 = vmul.f32 %v4490, 1.442695
        %v4777 = vpow.pop %v4776
        %v4778 = vmul.f32 %v4491, 1.442695
        %v4779 = vpow.pop %v4778
        %v4780 = vmul.f32 %v4492, 1.442695
        %v4781 = vpow.pop %v4780
        %v4782 = vmul.f32 %v4493, 1.442695
        %v4783 = vpow.pop %v4782
        %v4784 = vmul.f32 %v4494, 1.442695
        %v4785 = vpow.pop %v4784
        %v4786 = vmul.f32 %v4495, 1.442695
        %v4787 = vpow.pop %v4786
        %v4788 = vmul.f32 %v4496, 1.442695
        %v4789 = vpow.pop %v4788
        %v4790 = vmul.f32 %v4497, 1.442695
        %v4791 = vpow.pop %v4790
        %v4792 = vmul.f32 %v4498, 1.442695
        %v4793 = vpow.pop %v4792
        %v4794 = vmul.f32 %v4499, 1.442695
        %v4795 = vpow.pop %v4794
        %v4796 = vmul.f32 %v4500, 1.442695
        %v4797 = vpow.pop %v4796
        %v4798 = vmul.f32 %v4501, 1.442695
        %v4799 = vpow.pop %v4798
        %v4800 = vmul.f32 %v4502, 1.442695
        %v4801 = vpow.pop %v4800
        %v4802 = vmul.f32 %v4503, 1.442695
        %v4803 = vpow.pop %v4802
        %v4804 = vmul.f32 %v4504, 1.442695
        %v4805 = vpow.pop %v4804
        %v4806 = vmul.f32 %v4505, 1.442695
        %v4807 = vpow.pop %v4806
        %v4808 = vmul.f32 %v4506, 1.442695
        %v4809 = vpow.pop %v4808
        %v4810 = vmul.f32 %v4507, 1.442695
        %v4811 = vpow.pop %v4810
        %v4812 = vmul.f32 %v4508, 1.442695
        %v4813 = vpow.pop %v4812
        %v4814 = vmul.f32 %v4509, 1.442695
        %v4815 = vpow.pop %v4814
        %v4816 = vmul.f32 %v4510, 1.442695
        %v4817 = vpow.pop %v4816
        %v4818 = vmul.f32 %v4511, 1.442695
        %v4819 = vpow.pop %v4818
        %v4820 = vmul.f32 %v4512, 1.442695
        %v4821 = vpow.pop %v4820
        %v4822 = vmul.f32 %v4513, 1.442695
        %v4823 = vpow.pop %v4822
        %v4824 = vmul.f32 %v4514, 1.442695
        %v4825 = vpow.pop %v4824
        %v4826 = vmul.f32 %v4515, 1.442695
        %v4827 = vpow.pop %v4826
        %v4828 = vmul.f32 %v4516, 1.442695
        %v4829 = vpow.pop %v4828
        %v4830 = vmul.f32 %v4517, 1.442695
        %v4831 = vpow.pop %v4830
        %v4832 = vmul.f32 %v4518, 1.442695
        %v4833 = vpow.pop %v4832
        %v4834 = vmul.f32 %v4519, 1.442695
        %v4835 = vpow.pop %v4834
        %v4836 = vmul.f32 %v4520, 1.442695
        %v4837 = vpow.pop %v4836
        %v4838 = vmul.f32 %v4521, 1.442695
        %v4839 = vpow.pop %v4838
        %v4840 = vmul.f32 %v4522, 1.442695
        %v4841 = vpow.pop %v4840
        %v4842 = vmul.f32 %v4523, 1.442695
        %v4843 = vpow.pop %v4842
        %v4844 = vmul.f32 %v4524, 1.442695
        %v4845 = vpow.pop %v4844
        %v4846 = vmul.f32 %v4525, 1.442695
        %v4847 = vpow.pop %v4846
        %v4848 = vmul.f32 %v4526, 1.442695
        %v4849 = vpow.pop %v4848
        %v4850 = vmul.f32 %v4527, 1.442695
        %v4851 = vpow.pop %v4850
        %v4852 = vmul.f32 %v4528, 1.442695
        %v4853 = vpow.pop %v4852
        %v4854 = vmul.f32 %v4529, 1.442695
        %v4855 = vpow.pop %v4854
        %v4856 = vmul.f32 %v4530, 1.442695
        %v4857 = vpow.pop %v4856
        %v4858 = vmul.f32 %v4531, 1.442695
        %v4859 = vpow.pop %v4858
        %v4860 = vmul.f32 %v4532, 1.442695
        %v4861 = vpow.pop %v4860
        %v4862 = vmul.f32 %v4533, 1.442695
        %v4863 = vpow.pop %v4862
        %v4864 = vmul.f32 %v4534, 1.442695
        %v4865 = vpow.pop %v4864
        %v4866 = vmul.f32 %v4535, 1.442695
        %v4867 = vpow.pop %v4866
        %v4868 = vmul.f32 %v4536, 1.442695
        %v4869 = vpow.pop %v4868
        %v4870 = vmul.f32 %v4537, 1.442695
        %v4871 = vpow.pop %v4870
        %v4872 = vmul.f32 %v4538, 1.442695
        %v4873 = vpow.pop %v4872
        %v4874 = vmul.f32 %v4539, 1.442695
        %v4875 = vpow.pop %v4874
        %v4876 = vmul.f32 %v4540, 1.442695
        %v4877 = vpow.pop %v4876
        %v4878 = vmul.f32 %v4541, 1.442695
        %v4879 = vpow.pop %v4878
        %v4880 = vmul.f32 %v4542, 1.442695
        %v4881 = vpow.pop %v4880
        %v4882 = vmul.f32 %v4543, 1.442695
        %v4883 = vpow.pop %v4882
        %v4884 = vmul.f32 %v4544, 1.442695
        %v4885 = vpow.pop %v4884
        %v4886 = vmul.f32 %v4545, 1.442695
        %v4887 = vpow.pop %v4886
        %v4888 = vmul.f32 %v4546, 1.442695
        %v4889 = vpow.pop %v4888
        %v4890 = vmul.f32 %v4547, 1.442695
        %v4891 = vpow.pop %v4890
        %v4892 = vld [vmem:[%s223] sm:$0x3]
        %v4893 = vld [vmem:[%s223 + $0x2] sm:$0x3]
        %v4894 = vld [vmem:[%s223 + $0x4] sm:$0x3]
        %v4895 = vld [vmem:[%s223 + $0x6] sm:$0x3]
        %v4896 = vld [vmem:[%s223 + $0x8] sm:$0x3]
        %v4897 = vld [vmem:[%s223 + $0xa] sm:$0x3]
        %v4898 = vld [vmem:[%s223 + $0xc] sm:$0x3]
        %v4899 = vld [vmem:[%s223 + $0xe] sm:$0x3]
        %v4900 = vld [vmem:[%s223 + $0x10] sm:$0x3]
        %v4901 = vld [vmem:[%s223 + $0x12] sm:$0x3]
        %v4902 = vld [vmem:[%s223 + $0x14] sm:$0x3]
        %v4903 = vld [vmem:[%s223 + $0x16] sm:$0x3]
        %v4904 = vld [vmem:[%s223 + $0x18] sm:$0x3]
        %v4905 = vld [vmem:[%s223 + $0x1a] sm:$0x3]
        %v4906 = vld [vmem:[%s223 + $0x1c] sm:$0x3]
        %v4907 = vld [vmem:[%s223 + $0x1e] sm:$0x3]
        %v4908 = vld [vmem:[%s223 + $0x20] sm:$0x3]
        %v4909 = vld [vmem:[%s223 + $0x22] sm:$0x3]
        %v4910 = vld [vmem:[%s223 + $0x24] sm:$0x3]
        %v4911 = vld [vmem:[%s223 + $0x26] sm:$0x3]
        %v4912 = vld [vmem:[%s223 + $0x28] sm:$0x3]
        %v4913 = vld [vmem:[%s223 + $0x2a] sm:$0x3]
        %v4914 = vld [vmem:[%s223 + $0x2c] sm:$0x3]
        %v4915 = vld [vmem:[%s223 + $0x2e] sm:$0x3]
        %v4916 = vld [vmem:[%s223 + $0x30] sm:$0x3]
        %v4917 = vld [vmem:[%s223 + $0x32] sm:$0x3]
        %v4918 = vld [vmem:[%s223 + $0x34] sm:$0x3]
        %v4919 = vld [vmem:[%s223 + $0x36] sm:$0x3]
        %v4920 = vld [vmem:[%s223 + $0x38] sm:$0x3]
        %v4921 = vld [vmem:[%s223 + $0x3a] sm:$0x3]
        %v4922 = vld [vmem:[%s223 + $0x3c] sm:$0x3]
        %v4923 = vld [vmem:[%s223 + $0x3e] sm:$0x3]
        %v4924 = vld [vmem:[%s223 + $0x40] sm:$0x3]
        %v4925 = vld [vmem:[%s223 + $0x42] sm:$0x3]
        %v4926 = vld [vmem:[%s223 + $0x44] sm:$0x3]
        %v4927 = vld [vmem:[%s223 + $0x46] sm:$0x3]
        %v4928 = vld [vmem:[%s223 + $0x48] sm:$0x3]
        %v4929 = vld [vmem:[%s223 + $0x4a] sm:$0x3]
        %v4930 = vld [vmem:[%s223 + $0x4c] sm:$0x3]
        %v4931 = vld [vmem:[%s223 + $0x4e] sm:$0x3]
        %v4932 = vld [vmem:[%s223 + $0x50] sm:$0x3]
        %v4933 = vld [vmem:[%s223 + $0x52] sm:$0x3]
        %v4934 = vld [vmem:[%s223 + $0x54] sm:$0x3]
        %v4935 = vld [vmem:[%s223 + $0x56] sm:$0x3]
        %v4936 = vld [vmem:[%s223 + $0x58] sm:$0x3]
        %v4937 = vld [vmem:[%s223 + $0x5a] sm:$0x3]
        %v4938 = vld [vmem:[%s223 + $0x5c] sm:$0x3]
        %v4939 = vld [vmem:[%s223 + $0x5e] sm:$0x3]
        %v4940 = vld [vmem:[%s223 + $0x60] sm:$0x3]
        %v4941 = vld [vmem:[%s223 + $0x62] sm:$0x3]
        %v4942 = vld [vmem:[%s223 + $0x64] sm:$0x3]
        %v4943 = vld [vmem:[%s223 + $0x66] sm:$0x3]
        %v4944 = vld [vmem:[%s223 + $0x68] sm:$0x3]
        %v4945 = vld [vmem:[%s223 + $0x6a] sm:$0x3]
        %v4946 = vld [vmem:[%s223 + $0x6c] sm:$0x3]
        %v4947 = vld [vmem:[%s223 + $0x6e] sm:$0x3]
        %v4948 = vld [vmem:[%s223 + $0x70] sm:$0x3]
        %v4949 = vld [vmem:[%s223 + $0x72] sm:$0x3]
        %v4950 = vld [vmem:[%s223 + $0x74] sm:$0x3]
        %v4951 = vld [vmem:[%s223 + $0x76] sm:$0x3]
        %v4952 = vld [vmem:[%s223 + $0x78] sm:$0x3]
        %v4953 = vld [vmem:[%s223 + $0x7a] sm:$0x3]
        %v4954 = vld [vmem:[%s223 + $0x7c] sm:$0x3]
        %v4955 = vld [vmem:[%s223 + $0x7e] sm:$0x3]
        %v4956 = vld [vmem:[%s223 + $0x80] sm:$0x3]
        %v4957 = vld [vmem:[%s223 + $0x82] sm:$0x3]
        %v4958 = vld [vmem:[%s223 + $0x84] sm:$0x3]
        %v4959 = vld [vmem:[%s223 + $0x86] sm:$0x3]
        %v4960 = vld [vmem:[%s223 + $0x88] sm:$0x3]
        %v4961 = vld [vmem:[%s223 + $0x8a] sm:$0x3]
        %v4962 = vld [vmem:[%s223 + $0x8c] sm:$0x3]
        %v4963 = vld [vmem:[%s223 + $0x8e] sm:$0x3]
        %v4964 = vld [vmem:[%s223 + $0x90] sm:$0x3]
        %v4965 = vld [vmem:[%s223 + $0x92] sm:$0x3]
        %v4966 = vld [vmem:[%s223 + $0x94] sm:$0x3]
        %v4967 = vld [vmem:[%s223 + $0x96] sm:$0x3]
        %v4968 = vld [vmem:[%s223 + $0x98] sm:$0x3]
        %v4969 = vld [vmem:[%s223 + $0x9a] sm:$0x3]
        %v4970 = vld [vmem:[%s223 + $0x9c] sm:$0x3]
        %v4971 = vld [vmem:[%s223 + $0x9e] sm:$0x3]
        %v4972 = vld [vmem:[%s223 + $0xa0] sm:$0x3]
        %v4973 = vld [vmem:[%s223 + $0xa2] sm:$0x3]
        %v4974 = vld [vmem:[%s223 + $0xa4] sm:$0x3]
        %v4975 = vld [vmem:[%s223 + $0xa6] sm:$0x3]
        %v4976 = vld [vmem:[%s223 + $0xa8] sm:$0x3]
        %v4977 = vld [vmem:[%s223 + $0xaa] sm:$0x3]
        %v4978 = vld [vmem:[%s223 + $0xac] sm:$0x3]
        %v4979 = vld [vmem:[%s223 + $0xae] sm:$0x3]
        %v4980 = vld [vmem:[%s223 + $0xb0] sm:$0x3]
        %v4981 = vld [vmem:[%s223 + $0xb2] sm:$0x3]
        %v4982 = vld [vmem:[%s223 + $0xb4] sm:$0x3]
        %v4983 = vld [vmem:[%s223 + $0xb6] sm:$0x3]
        %v4984 = vld [vmem:[%s223 + $0xb8] sm:$0x3]
        %v4985 = vld [vmem:[%s223 + $0xba] sm:$0x3]
        %v4986 = vld [vmem:[%s223 + $0xbc] sm:$0x3]
        %v4987 = vld [vmem:[%s223 + $0xbe] sm:$0x3]
        %v4988 = vld [vmem:[%s223 + $0xc0] sm:$0x3]
        %v4989 = vld [vmem:[%s223 + $0xc2] sm:$0x3]
        %v4990 = vld [vmem:[%s223 + $0xc4] sm:$0x3]
        %v4991 = vld [vmem:[%s223 + $0xc6] sm:$0x3]
        %v4992 = vld [vmem:[%s223 + $0xc8] sm:$0x3]
        %v4993 = vld [vmem:[%s223 + $0xca] sm:$0x3]
        %v4994 = vld [vmem:[%s223 + $0xcc] sm:$0x3]
        %v4995 = vld [vmem:[%s223 + $0xce] sm:$0x3]
        %v4996 = vld [vmem:[%s223 + $0xd0] sm:$0x3]
        %v4997 = vld [vmem:[%s223 + $0xd2] sm:$0x3]
        %v4998 = vld [vmem:[%s223 + $0xd4] sm:$0x3]
        %v4999 = vld [vmem:[%s223 + $0xd6] sm:$0x3]
        %v5000 = vld [vmem:[%s223 + $0xd8] sm:$0x3]
        %v5001 = vld [vmem:[%s223 + $0xda] sm:$0x3]
        %v5002 = vld [vmem:[%s223 + $0xdc] sm:$0x3]
        %v5003 = vld [vmem:[%s223 + $0xde] sm:$0x3]
        %v5004 = vld [vmem:[%s223 + $0xe0] sm:$0x3]
        %v5005 = vld [vmem:[%s223 + $0xe2] sm:$0x3]
        %v5006 = vld [vmem:[%s223 + $0xe4] sm:$0x3]
        %v5007 = vld [vmem:[%s223 + $0xe6] sm:$0x3]
        %v5008 = vld [vmem:[%s223 + $0xe8] sm:$0x3]
        %v5009 = vld [vmem:[%s223 + $0xea] sm:$0x3]
        %v5010 = vld [vmem:[%s223 + $0xec] sm:$0x3]
        %v5011 = vld [vmem:[%s223 + $0xee] sm:$0x3]
        %v5012 = vld [vmem:[%s223 + $0xf0] sm:$0x3]
        %v5013 = vld [vmem:[%s223 + $0xf2] sm:$0x3]
        %v5014 = vld [vmem:[%s223 + $0xf4] sm:$0x3]
        %v5015 = vld [vmem:[%s223 + $0xf6] sm:$0x3]
        %v5016 = vld [vmem:[%s223 + $0xf8] sm:$0x3]
        %v5017 = vld [vmem:[%s223 + $0xfa] sm:$0x3]
        %v5018 = vld [vmem:[%s223 + $0xfc] sm:$0x3]
        %v5019 = vld [vmem:[%s223 + $0xfe] sm:$0x3]
        %v5020 = vld [vmem:[%s223 + $0x100] sm:$0x3]
        %v5021 = vld [vmem:[%s223 + $0x102] sm:$0x3]
        %v5022 = vld [vmem:[%s223 + $0x104] sm:$0x3]
        %v5023 = vld [vmem:[%s223 + $0x106] sm:$0x3]
        %v5024 = vld [vmem:[%s223 + $0x108] sm:$0x3]
        %v5025 = vld [vmem:[%s223 + $0x10a] sm:$0x3]
        %v5026 = vld [vmem:[%s223 + $0x10c] sm:$0x3]
        %v5027 = vld [vmem:[%s223 + $0x10e] sm:$0x3]
        %v5028 = vld [vmem:[%s223 + $0x110] sm:$0x3]
        %v5029 = vld [vmem:[%s223 + $0x112] sm:$0x3]
        %v5030 = vld [vmem:[%s223 + $0x114] sm:$0x3]
        %v5031 = vld [vmem:[%s223 + $0x116] sm:$0x3]
        %v5032 = vld [vmem:[%s223 + $0x118] sm:$0x3]
        %v5033 = vld [vmem:[%s223 + $0x11a] sm:$0x3]
        %v5034 = vld [vmem:[%s223 + $0x11c] sm:$0x3]
        %v5035 = vld [vmem:[%s223 + $0x11e] sm:$0x3]
        %v5036 = vld [vmem:[%s223 + $0x120] sm:$0x3]
        %v5037 = vld [vmem:[%s223 + $0x122] sm:$0x3]
        %v5038 = vld [vmem:[%s223 + $0x124] sm:$0x3]
        %v5039 = vld [vmem:[%s223 + $0x126] sm:$0x3]
        %v5040 = vld [vmem:[%s223 + $0x128] sm:$0x3]
        %v5041 = vld [vmem:[%s223 + $0x12a] sm:$0x3]
        %v5042 = vld [vmem:[%s223 + $0x12c] sm:$0x3]
        %v5043 = vld [vmem:[%s223 + $0x12e] sm:$0x3]
        %v5044 = vld [vmem:[%s223 + $0x130] sm:$0x3]
        %v5045 = vld [vmem:[%s223 + $0x132] sm:$0x3]
        %v5046 = vld [vmem:[%s223 + $0x134] sm:$0x3]
        %v5047 = vld [vmem:[%s223 + $0x136] sm:$0x3]
        %v5048 = vld [vmem:[%s223 + $0x138] sm:$0x3]
        %v5049 = vld [vmem:[%s223 + $0x13a] sm:$0x3]
        %v5050 = vld [vmem:[%s223 + $0x13c] sm:$0x3]
        %v5051 = vld [vmem:[%s223 + $0x13e] sm:$0x3]
        %v5052 = vld [vmem:[%s223 + $0x140] sm:$0x3]
        %v5053 = vld [vmem:[%s223 + $0x142] sm:$0x3]
        %v5054 = vld [vmem:[%s223 + $0x144] sm:$0x3]
        %v5055 = vld [vmem:[%s223 + $0x146] sm:$0x3]
        %v5056 = vld [vmem:[%s223 + $0x148] sm:$0x3]
        %v5057 = vld [vmem:[%s223 + $0x14a] sm:$0x3]
        %v5058 = vld [vmem:[%s223 + $0x14c] sm:$0x3]
        %v5059 = vld [vmem:[%s223 + $0x14e] sm:$0x3]
        %v5060 = vld [vmem:[%s223 + $0x150] sm:$0x3]
        %v5061 = vld [vmem:[%s223 + $0x152] sm:$0x3]
        %v5062 = vld [vmem:[%s223 + $0x154] sm:$0x3]
        %v5063 = vld [vmem:[%s223 + $0x156] sm:$0x3]
        %vm5064 = vnez %v4892
        %vm5065 = vnez %v4893
        %vm5066 = vnez %v4894
        %vm5067 = vnez %v4895
        %vm5068 = vnez %v4896
        %vm5069 = vnez %v4897
        %vm5070 = vnez %v4898
        %vm5071 = vnez %v4899
        %vm5072 = vnez %v4900
        %vm5073 = vnez %v4901
        %vm5074 = vnez %v4902
        %vm5075 = vnez %v4903
        %vm5076 = vnez %v4904
        %vm5077 = vnez %v4905
        %vm5078 = vnez %v4906
        %vm5079 = vnez %v4907
        %vm5080 = vnez %v4908
        %vm5081 = vnez %v4909
        %vm5082 = vnez %v4910
        %vm5083 = vnez %v4911
        %vm5084 = vnez %v4912
        %vm5085 = vnez %v4913
        %vm5086 = vnez %v4914
        %vm5087 = vnez %v4915
        %vm5088 = vnez %v4916
        %vm5089 = vnez %v4917
        %vm5090 = vnez %v4918
        %vm5091 = vnez %v4919
        %vm5092 = vnez %v4920
        %vm5093 = vnez %v4921
        %vm5094 = vnez %v4922
        %vm5095 = vnez %v4923
        %vm5096 = vnez %v4924
        %vm5097 = vnez %v4925
        %vm5098 = vnez %v4926
        %vm5099 = vnez %v4927
        %vm5100 = vnez %v4928
        %vm5101 = vnez %v4929
        %vm5102 = vnez %v4930
        %vm5103 = vnez %v4931
        %vm5104 = vnez %v4932
        %vm5105 = vnez %v4933
        %vm5106 = vnez %v4934
        %vm5107 = vnez %v4935
        %vm5108 = vnez %v4936
        %vm5109 = vnez %v4937
        %vm5110 = vnez %v4938
        %vm5111 = vnez %v4939
        %vm5112 = vnez %v4940
        %vm5113 = vnez %v4941
        %vm5114 = vnez %v4942
        %vm5115 = vnez %v4943
        %vm5116 = vnez %v4944
        %vm5117 = vnez %v4945
        %vm5118 = vnez %v4946
        %vm5119 = vnez %v4947
        %vm5120 = vnez %v4948
        %vm5121 = vnez %v4949
        %vm5122 = vnez %v4950
        %vm5123 = vnez %v4951
        %vm5124 = vnez %v4952
        %vm5125 = vnez %v4953
        %vm5126 = vnez %v4954
        %vm5127 = vnez %v4955
        %vm5128 = vnez %v4956
        %vm5129 = vnez %v4957
        %vm5130 = vnez %v4958
        %vm5131 = vnez %v4959
        %vm5132 = vnez %v4960
        %vm5133 = vnez %v4961
        %vm5134 = vnez %v4962
        %vm5135 = vnez %v4963
        %vm5136 = vnez %v4964
        %vm5137 = vnez %v4965
        %vm5138 = vnez %v4966
        %vm5139 = vnez %v4967
        %vm5140 = vnez %v4968
        %vm5141 = vnez %v4969
        %vm5142 = vnez %v4970
        %vm5143 = vnez %v4971
        %vm5144 = vnez %v4972
        %vm5145 = vnez %v4973
        %vm5146 = vnez %v4974
        %vm5147 = vnez %v4975
        %vm5148 = vnez %v4976
        %vm5149 = vnez %v4977
        %vm5150 = vnez %v4978
        %vm5151 = vnez %v4979
        %vm5152 = vnez %v4980
        %vm5153 = vnez %v4981
        %vm5154 = vnez %v4982
        %vm5155 = vnez %v4983
        %vm5156 = vnez %v4984
        %vm5157 = vnez %v4985
        %vm5158 = vnez %v4986
        %vm5159 = vnez %v4987
        %vm5160 = vnez %v4988
        %vm5161 = vnez %v4989
        %vm5162 = vnez %v4990
        %vm5163 = vnez %v4991
        %vm5164 = vnez %v4992
        %vm5165 = vnez %v4993
        %vm5166 = vnez %v4994
        %vm5167 = vnez %v4995
        %vm5168 = vnez %v4996
        %vm5169 = vnez %v4997
        %vm5170 = vnez %v4998
        %vm5171 = vnez %v4999
        %vm5172 = vnez %v5000
        %vm5173 = vnez %v5001
        %vm5174 = vnez %v5002
        %vm5175 = vnez %v5003
        %vm5176 = vnez %v5004
        %vm5177 = vnez %v5005
        %vm5178 = vnez %v5006
        %vm5179 = vnez %v5007
        %vm5180 = vnez %v5008
        %vm5181 = vnez %v5009
        %vm5182 = vnez %v5010
        %vm5183 = vnez %v5011
        %vm5184 = vnez %v5012
        %vm5185 = vnez %v5013
        %vm5186 = vnez %v5014
        %vm5187 = vnez %v5015
        %vm5188 = vnez %v5016
        %vm5189 = vnez %v5017
        %vm5190 = vnez %v5018
        %vm5191 = vnez %v5019
        %vm5192 = vnez %v5020
        %vm5193 = vnez %v5021
        %vm5194 = vnez %v5022
        %vm5195 = vnez %v5023
        %vm5196 = vnez %v5024
        %vm5197 = vnez %v5025
        %vm5198 = vnez %v5026
        %vm5199 = vnez %v5027
        %vm5200 = vnez %v5028
        %vm5201 = vnez %v5029
        %vm5202 = vnez %v5030
        %vm5203 = vnez %v5031
        %vm5204 = vnez %v5032
        %vm5205 = vnez %v5033
        %vm5206 = vnez %v5034
        %vm5207 = vnez %v5035
        %vm5208 = vnez %v5036
        %vm5209 = vnez %v5037
        %vm5210 = vnez %v5038
        %vm5211 = vnez %v5039
        %vm5212 = vnez %v5040
        %vm5213 = vnez %v5041
        %vm5214 = vnez %v5042
        %vm5215 = vnez %v5043
        %vm5216 = vnez %v5044
        %vm5217 = vnez %v5045
        %vm5218 = vnez %v5046
        %vm5219 = vnez %v5047
        %vm5220 = vnez %v5048
        %vm5221 = vnez %v5049
        %vm5222 = vnez %v5050
        %vm5223 = vnez %v5051
        %vm5224 = vnez %v5052
        %vm5225 = vnez %v5053
        %vm5226 = vnez %v5054
        %vm5227 = vnez %v5055
        %vm5228 = vnez %v5056
        %vm5229 = vnez %v5057
        %vm5230 = vnez %v5058
        %vm5231 = vnez %v5059
        %vm5232 = vnez %v5060
        %vm5233 = vnez %v5061
        %vm5234 = vnez %v5062
        %vm5235 = vnez %v5063
        %v5236 = vsel %vm5064, 16843009, 0
        %v5237 = vsel %vm5065, 16843009, 0
        %v5238 = vsel %vm5066, 16843009, 0
        %v5239 = vsel %vm5067, 16843009, 0
        %v5240 = vsel %vm5068, 16843009, 0
        %v5241 = vsel %vm5069, 16843009, 0
        %v5242 = vsel %vm5070, 16843009, 0
        %v5243 = vsel %vm5071, 16843009, 0
        %v5244 = vsel %vm5072, 16843009, 0
        %v5245 = vsel %vm5073, 16843009, 0
        %v5246 = vsel %vm5074, 16843009, 0
        %v5247 = vsel %vm5075, 16843009, 0
        %v5248 = vsel %vm5076, 16843009, 0
        %v5249 = vsel %vm5077, 16843009, 0
        %v5250 = vsel %vm5078, 16843009, 0
        %v5251 = vsel %vm5079, 16843009, 0
        %v5252 = vsel %vm5080, 16843009, 0
        %v5253 = vsel %vm5081, 16843009, 0
        %v5254 = vsel %vm5082, 16843009, 0
        %v5255 = vsel %vm5083, 16843009, 0
        %v5256 = vsel %vm5084, 16843009, 0
        %v5257 = vsel %vm5085, 16843009, 0
        %v5258 = vsel %vm5086, 16843009, 0
        %v5259 = vsel %vm5087, 16843009, 0
        %v5260 = vsel %vm5088, 16843009, 0
        %v5261 = vsel %vm5089, 16843009, 0
        %v5262 = vsel %vm5090, 16843009, 0
        %v5263 = vsel %vm5091, 16843009, 0
        %v5264 = vsel %vm5092, 16843009, 0
        %v5265 = vsel %vm5093, 16843009, 0
        %v5266 = vsel %vm5094, 16843009, 0
        %v5267 = vsel %vm5095, 16843009, 0
        %v5268 = vsel %vm5096, 16843009, 0
        %v5269 = vsel %vm5097, 16843009, 0
        %v5270 = vsel %vm5098, 16843009, 0
        %v5271 = vsel %vm5099, 16843009, 0
        %v5272 = vsel %vm5100, 16843009, 0
        %v5273 = vsel %vm5101, 16843009, 0
        %v5274 = vsel %vm5102, 16843009, 0
        %v5275 = vsel %vm5103, 16843009, 0
        %v5276 = vsel %vm5104, 16843009, 0
        %v5277 = vsel %vm5105, 16843009, 0
        %v5278 = vsel %vm5106, 16843009, 0
        %v5279 = vsel %vm5107, 16843009, 0
        %v5280 = vsel %vm5108, 16843009, 0
        %v5281 = vsel %vm5109, 16843009, 0
        %v5282 = vsel %vm5110, 16843009, 0
        %v5283 = vsel %vm5111, 16843009, 0
        %v5284 = vsel %vm5112, 16843009, 0
        %v5285 = vsel %vm5113, 16843009, 0
        %v5286 = vsel %vm5114, 16843009, 0
        %v5287 = vsel %vm5115, 16843009, 0
        %v5288 = vsel %vm5116, 16843009, 0
        %v5289 = vsel %vm5117, 16843009, 0
        %v5290 = vsel %vm5118, 16843009, 0
        %v5291 = vsel %vm5119, 16843009, 0
        %v5292 = vsel %vm5120, 16843009, 0
        %v5293 = vsel %vm5121, 16843009, 0
        %v5294 = vsel %vm5122, 16843009, 0
        %v5295 = vsel %vm5123, 16843009, 0
        %v5296 = vsel %vm5124, 16843009, 0
        %v5297 = vsel %vm5125, 16843009, 0
        %v5298 = vsel %vm5126, 16843009, 0
        %v5299 = vsel %vm5127, 16843009, 0
        %v5300 = vsel %vm5128, 16843009, 0
        %v5301 = vsel %vm5129, 16843009, 0
        %v5302 = vsel %vm5130, 16843009, 0
        %v5303 = vsel %vm5131, 16843009, 0
        %v5304 = vsel %vm5132, 16843009, 0
        %v5305 = vsel %vm5133, 16843009, 0
        %v5306 = vsel %vm5134, 16843009, 0
        %v5307 = vsel %vm5135, 16843009, 0
        %v5308 = vsel %vm5136, 16843009, 0
        %v5309 = vsel %vm5137, 16843009, 0
        %v5310 = vsel %vm5138, 16843009, 0
        %v5311 = vsel %vm5139, 16843009, 0
        %v5312 = vsel %vm5140, 16843009, 0
        %v5313 = vsel %vm5141, 16843009, 0
        %v5314 = vsel %vm5142, 16843009, 0
        %v5315 = vsel %vm5143, 16843009, 0
        %v5316 = vsel %vm5144, 16843009, 0
        %v5317 = vsel %vm5145, 16843009, 0
        %v5318 = vsel %vm5146, 16843009, 0
        %v5319 = vsel %vm5147, 16843009, 0
        %v5320 = vsel %vm5148, 16843009, 0
        %v5321 = vsel %vm5149, 16843009, 0
        %v5322 = vsel %vm5150, 16843009, 0
        %v5323 = vsel %vm5151, 16843009, 0
        %v5324 = vsel %vm5152, 16843009, 0
        %v5325 = vsel %vm5153, 16843009, 0
        %v5326 = vsel %vm5154, 16843009, 0
        %v5327 = vsel %vm5155, 16843009, 0
        %v5328 = vsel %vm5156, 16843009, 0
        %v5329 = vsel %vm5157, 16843009, 0
        %v5330 = vsel %vm5158, 16843009, 0
        %v5331 = vsel %vm5159, 16843009, 0
        %v5332 = vsel %vm5160, 16843009, 0
        %v5333 = vsel %vm5161, 16843009, 0
        %v5334 = vsel %vm5162, 16843009, 0
        %v5335 = vsel %vm5163, 16843009, 0
        %v5336 = vsel %vm5164, 16843009, 0
        %v5337 = vsel %vm5165, 16843009, 0
        %v5338 = vsel %vm5166, 16843009, 0
        %v5339 = vsel %vm5167, 16843009, 0
        %v5340 = vsel %vm5168, 16843009, 0
        %v5341 = vsel %vm5169, 16843009, 0
        %v5342 = vsel %vm5170, 16843009, 0
        %v5343 = vsel %vm5171, 16843009, 0
        %v5344 = vsel %vm5172, 16843009, 0
        %v5345 = vsel %vm5173, 16843009, 0
        %v5346 = vsel %vm5174, 16843009, 0
        %v5347 = vsel %vm5175, 16843009, 0
        %v5348 = vsel %vm5176, 16843009, 0
        %v5349 = vsel %vm5177, 16843009, 0
        %v5350 = vsel %vm5178, 16843009, 0
        %v5351 = vsel %vm5179, 16843009, 0
        %v5352 = vsel %vm5180, 16843009, 0
        %v5353 = vsel %vm5181, 16843009, 0
        %v5354 = vsel %vm5182, 16843009, 0
        %v5355 = vsel %vm5183, 16843009, 0
        %v5356 = vsel %vm5184, 16843009, 0
        %v5357 = vsel %vm5185, 16843009, 0
        %v5358 = vsel %vm5186, 16843009, 0
        %v5359 = vsel %vm5187, 16843009, 0
        %v5360 = vsel %vm5188, 16843009, 0
        %v5361 = vsel %vm5189, 16843009, 0
        %v5362 = vsel %vm5190, 16843009, 0
        %v5363 = vsel %vm5191, 16843009, 0
        %v5364 = vsel %vm5192, 16843009, 0
        %v5365 = vsel %vm5193, 16843009, 0
        %v5366 = vsel %vm5194, 16843009, 0
        %v5367 = vsel %vm5195, 16843009, 0
        %v5368 = vsel %vm5196, 16843009, 0
        %v5369 = vsel %vm5197, 16843009, 0
        %v5370 = vsel %vm5198, 16843009, 0
        %v5371 = vsel %vm5199, 16843009, 0
        %v5372 = vsel %vm5200, 16843009, 0
        %v5373 = vsel %vm5201, 16843009, 0
        %v5374 = vsel %vm5202, 16843009, 0
        %v5375 = vsel %vm5203, 16843009, 0
        %v5376 = vsel %vm5204, 16843009, 0
        %v5377 = vsel %vm5205, 16843009, 0
        %v5378 = vsel %vm5206, 16843009, 0
        %v5379 = vsel %vm5207, 16843009, 0
        %v5380 = vsel %vm5208, 16843009, 0
        %v5381 = vsel %vm5209, 16843009, 0
        %v5382 = vsel %vm5210, 16843009, 0
        %v5383 = vsel %vm5211, 16843009, 0
        %v5384 = vsel %vm5212, 16843009, 0
        %v5385 = vsel %vm5213, 16843009, 0
        %v5386 = vsel %vm5214, 16843009, 0
        %v5387 = vsel %vm5215, 16843009, 0
        %v5388 = vsel %vm5216, 16843009, 0
        %v5389 = vsel %vm5217, 16843009, 0
        %v5390 = vsel %vm5218, 16843009, 0
        %v5391 = vsel %vm5219, 16843009, 0
        %v5392 = vsel %vm5220, 16843009, 0
        %v5393 = vsel %vm5221, 16843009, 0
        %v5394 = vsel %vm5222, 16843009, 0
        %v5395 = vsel %vm5223, 16843009, 0
        %v5396 = vsel %vm5224, 16843009, 0
        %v5397 = vsel %vm5225, 16843009, 0
        %v5398 = vsel %vm5226, 16843009, 0
        %v5399 = vsel %vm5227, 16843009, 0
        %v5400 = vsel %vm5228, 16843009, 0
        %v5401 = vsel %vm5229, 16843009, 0
        %v5402 = vsel %vm5230, 16843009, 0
        %v5403 = vsel %vm5231, 16843009, 0
        %v5404 = vsel %vm5232, 16843009, 0
        %v5405 = vsel %vm5233, 16843009, 0
        %v5406 = vsel %vm5234, 16843009, 0
        %v5407 = vsel %vm5235, 16843009, 0
        %v5408 = vunpack.c.0.s8 %v5236
        %v5409 = vunpack.c.0.s8 %v5237
        %v5410 = vunpack.c.0.s8 %v5238
        %v5411 = vunpack.c.0.s8 %v5239
        %v5412 = vunpack.c.0.s8 %v5240
        %v5413 = vunpack.c.0.s8 %v5241
        %v5414 = vunpack.c.0.s8 %v5242
        %v5415 = vunpack.c.0.s8 %v5243
        %v5416 = vunpack.c.0.s8 %v5244
        %v5417 = vunpack.c.0.s8 %v5245
        %v5418 = vunpack.c.0.s8 %v5246
        %v5419 = vunpack.c.0.s8 %v5247
        %v5420 = vunpack.c.0.s8 %v5248
        %v5421 = vunpack.c.0.s8 %v5249
        %v5422 = vunpack.c.0.s8 %v5250
        %v5423 = vunpack.c.0.s8 %v5251
        %v5424 = vunpack.c.0.s8 %v5252
        %v5425 = vunpack.c.0.s8 %v5253
        %v5426 = vunpack.c.0.s8 %v5254
        %v5427 = vunpack.c.0.s8 %v5255
        %v5428 = vunpack.c.0.s8 %v5256
        %v5429 = vunpack.c.0.s8 %v5257
        %v5430 = vunpack.c.0.s8 %v5258
        %v5431 = vunpack.c.0.s8 %v5259
        %v5432 = vunpack.c.0.s8 %v5260
        %v5433 = vunpack.c.0.s8 %v5261
        %v5434 = vunpack.c.0.s8 %v5262
        %v5435 = vunpack.c.0.s8 %v5263
        %v5436 = vunpack.c.0.s8 %v5264
        %v5437 = vunpack.c.0.s8 %v5265
        %v5438 = vunpack.c.0.s8 %v5266
        %v5439 = vunpack.c.0.s8 %v5267
        %v5440 = vunpack.c.0.s8 %v5268
        %v5441 = vunpack.c.0.s8 %v5269
        %v5442 = vunpack.c.0.s8 %v5270
        %v5443 = vunpack.c.0.s8 %v5271
        %v5444 = vunpack.c.0.s8 %v5272
        %v5445 = vunpack.c.0.s8 %v5273
        %v5446 = vunpack.c.0.s8 %v5274
        %v5447 = vunpack.c.0.s8 %v5275
        %v5448 = vunpack.c.0.s8 %v5276
        %v5449 = vunpack.c.0.s8 %v5277
        %v5450 = vunpack.c.0.s8 %v5278
        %v5451 = vunpack.c.0.s8 %v5279
        %v5452 = vunpack.c.0.s8 %v5280
        %v5453 = vunpack.c.0.s8 %v5281
        %v5454 = vunpack.c.0.s8 %v5282
        %v5455 = vunpack.c.0.s8 %v5283
        %v5456 = vunpack.c.0.s8 %v5284
        %v5457 = vunpack.c.0.s8 %v5285
        %v5458 = vunpack.c.0.s8 %v5286
        %v5459 = vunpack.c.0.s8 %v5287
        %v5460 = vunpack.c.0.s8 %v5288
        %v5461 = vunpack.c.0.s8 %v5289
        %v5462 = vunpack.c.0.s8 %v5290
        %v5463 = vunpack.c.0.s8 %v5291
        %v5464 = vunpack.c.0.s8 %v5292
        %v5465 = vunpack.c.0.s8 %v5293
        %v5466 = vunpack.c.0.s8 %v5294
        %v5467 = vunpack.c.0.s8 %v5295
        %v5468 = vunpack.c.0.s8 %v5296
        %v5469 = vunpack.c.0.s8 %v5297
        %v5470 = vunpack.c.0.s8 %v5298
        %v5471 = vunpack.c.0.s8 %v5299
        %v5472 = vunpack.c.0.s8 %v5300
        %v5473 = vunpack.c.0.s8 %v5301
        %v5474 = vunpack.c.0.s8 %v5302
        %v5475 = vunpack.c.0.s8 %v5303
        %v5476 = vunpack.c.0.s8 %v5304
        %v5477 = vunpack.c.0.s8 %v5305
        %v5478 = vunpack.c.0.s8 %v5306
        %v5479 = vunpack.c.0.s8 %v5307
        %v5480 = vunpack.c.0.s8 %v5308
        %v5481 = vunpack.c.0.s8 %v5309
        %v5482 = vunpack.c.0.s8 %v5310
        %v5483 = vunpack.c.0.s8 %v5311
        %v5484 = vunpack.c.0.s8 %v5312
        %v5485 = vunpack.c.0.s8 %v5313
        %v5486 = vunpack.c.0.s8 %v5314
        %v5487 = vunpack.c.0.s8 %v5315
        %v5488 = vunpack.c.0.s8 %v5316
        %v5489 = vunpack.c.0.s8 %v5317
        %v5490 = vunpack.c.0.s8 %v5318
        %v5491 = vunpack.c.0.s8 %v5319
        %v5492 = vunpack.c.0.s8 %v5320
        %v5493 = vunpack.c.0.s8 %v5321
        %v5494 = vunpack.c.0.s8 %v5322
        %v5495 = vunpack.c.0.s8 %v5323
        %v5496 = vunpack.c.0.s8 %v5324
        %v5497 = vunpack.c.0.s8 %v5325
        %v5498 = vunpack.c.0.s8 %v5326
        %v5499 = vunpack.c.0.s8 %v5327
        %v5500 = vunpack.c.0.s8 %v5328
        %v5501 = vunpack.c.0.s8 %v5329
        %v5502 = vunpack.c.0.s8 %v5330
        %v5503 = vunpack.c.0.s8 %v5331
        %v5504 = vunpack.c.0.s8 %v5332
        %v5505 = vunpack.c.0.s8 %v5333
        %v5506 = vunpack.c.0.s8 %v5334
        %v5507 = vunpack.c.0.s8 %v5335
        %v5508 = vunpack.c.0.s8 %v5336
        %v5509 = vunpack.c.0.s8 %v5337
        %v5510 = vunpack.c.0.s8 %v5338
        %v5511 = vunpack.c.0.s8 %v5339
        %v5512 = vunpack.c.0.s8 %v5340
        %v5513 = vunpack.c.0.s8 %v5341
        %v5514 = vunpack.c.0.s8 %v5342
        %v5515 = vunpack.c.0.s8 %v5343
        %v5516 = vunpack.c.0.s8 %v5344
        %v5517 = vunpack.c.0.s8 %v5345
        %v5518 = vunpack.c.0.s8 %v5346
        %v5519 = vunpack.c.0.s8 %v5347
        %v5520 = vunpack.c.0.s8 %v5348
        %v5521 = vunpack.c.0.s8 %v5349
        %v5522 = vunpack.c.0.s8 %v5350
        %v5523 = vunpack.c.0.s8 %v5351
        %v5524 = vunpack.c.0.s8 %v5352
        %v5525 = vunpack.c.0.s8 %v5353
        %v5526 = vunpack.c.0.s8 %v5354
        %v5527 = vunpack.c.0.s8 %v5355
        %v5528 = vunpack.c.0.s8 %v5356
        %v5529 = vunpack.c.0.s8 %v5357
        %v5530 = vunpack.c.0.s8 %v5358
        %v5531 = vunpack.c.0.s8 %v5359
        %v5532 = vunpack.c.0.s8 %v5360
        %v5533 = vunpack.c.0.s8 %v5361
        %v5534 = vunpack.c.0.s8 %v5362
        %v5535 = vunpack.c.0.s8 %v5363
        %v5536 = vunpack.c.0.s8 %v5364
        %v5537 = vunpack.c.0.s8 %v5365
        %v5538 = vunpack.c.0.s8 %v5366
        %v5539 = vunpack.c.0.s8 %v5367
        %v5540 = vunpack.c.0.s8 %v5368
        %v5541 = vunpack.c.0.s8 %v5369
        %v5542 = vunpack.c.0.s8 %v5370
        %v5543 = vunpack.c.0.s8 %v5371
        %v5544 = vunpack.c.0.s8 %v5372
        %v5545 = vunpack.c.0.s8 %v5373
        %v5546 = vunpack.c.0.s8 %v5374
        %v5547 = vunpack.c.0.s8 %v5375
        %v5548 = vunpack.c.0.s8 %v5376
        %v5549 = vunpack.c.0.s8 %v5377
        %v5550 = vunpack.c.0.s8 %v5378
        %v5551 = vunpack.c.0.s8 %v5379
        %v5552 = vunpack.c.0.s8 %v5380
        %v5553 = vunpack.c.0.s8 %v5381
        %v5554 = vunpack.c.0.s8 %v5382
        %v5555 = vunpack.c.0.s8 %v5383
        %v5556 = vunpack.c.0.s8 %v5384
        %v5557 = vunpack.c.0.s8 %v5385
        %v5558 = vunpack.c.0.s8 %v5386
        %v5559 = vunpack.c.0.s8 %v5387
        %v5560 = vunpack.c.0.s8 %v5388
        %v5561 = vunpack.c.0.s8 %v5389
        %v5562 = vunpack.c.0.s8 %v5390
        %v5563 = vunpack.c.0.s8 %v5391
        %v5564 = vunpack.c.0.s8 %v5392
        %v5565 = vunpack.c.0.s8 %v5393
        %v5566 = vunpack.c.0.s8 %v5394
        %v5567 = vunpack.c.0.s8 %v5395
        %v5568 = vunpack.c.0.s8 %v5396
        %v5569 = vunpack.c.0.s8 %v5397
        %v5570 = vunpack.c.0.s8 %v5398
        %v5571 = vunpack.c.0.s8 %v5399
        %v5572 = vunpack.c.0.s8 %v5400
        %v5573 = vunpack.c.0.s8 %v5401
        %v5574 = vunpack.c.0.s8 %v5402
        %v5575 = vunpack.c.0.s8 %v5403
        %v5576 = vunpack.c.0.s8 %v5404
        %v5577 = vunpack.c.0.s8 %v5405
        %v5578 = vunpack.c.0.s8 %v5406
        %v5579 = vunpack.c.0.s8 %v5407
        %vm5580 = vcmp.ne.s32.totalorder %v5408, 0
        %vm5581 = vcmp.ne.s32.totalorder %v5409, 0
        %vm5582 = vcmp.ne.s32.totalorder %v5410, 0
        %vm5583 = vcmp.ne.s32.totalorder %v5411, 0
        %vm5584 = vcmp.ne.s32.totalorder %v5412, 0
        %vm5585 = vcmp.ne.s32.totalorder %v5413, 0
        %vm5586 = vcmp.ne.s32.totalorder %v5414, 0
        %vm5587 = vcmp.ne.s32.totalorder %v5415, 0
        %vm5588 = vcmp.ne.s32.totalorder %v5416, 0
        %vm5589 = vcmp.ne.s32.totalorder %v5417, 0
        %vm5590 = vcmp.ne.s32.totalorder %v5418, 0
        %vm5591 = vcmp.ne.s32.totalorder %v5419, 0
        %vm5592 = vcmp.ne.s32.totalorder %v5420, 0
        %vm5593 = vcmp.ne.s32.totalorder %v5421, 0
        %vm5594 = vcmp.ne.s32.totalorder %v5422, 0
        %vm5595 = vcmp.ne.s32.totalorder %v5423, 0
        %vm5596 = vcmp.ne.s32.totalorder %v5424, 0
        %vm5597 = vcmp.ne.s32.totalorder %v5425, 0
        %vm5598 = vcmp.ne.s32.totalorder %v5426, 0
        %vm5599 = vcmp.ne.s32.totalorder %v5427, 0
        %vm5600 = vcmp.ne.s32.totalorder %v5428, 0
        %vm5601 = vcmp.ne.s32.totalorder %v5429, 0
        %vm5602 = vcmp.ne.s32.totalorder %v5430, 0
        %vm5603 = vcmp.ne.s32.totalorder %v5431, 0
        %vm5604 = vcmp.ne.s32.totalorder %v5432, 0
        %vm5605 = vcmp.ne.s32.totalorder %v5433, 0
        %vm5606 = vcmp.ne.s32.totalorder %v5434, 0
        %vm5607 = vcmp.ne.s32.totalorder %v5435, 0
        %vm5608 = vcmp.ne.s32.totalorder %v5436, 0
        %vm5609 = vcmp.ne.s32.totalorder %v5437, 0
        %vm5610 = vcmp.ne.s32.totalorder %v5438, 0
        %vm5611 = vcmp.ne.s32.totalorder %v5439, 0
        %vm5612 = vcmp.ne.s32.totalorder %v5440, 0
        %vm5613 = vcmp.ne.s32.totalorder %v5441, 0
        %vm5614 = vcmp.ne.s32.totalorder %v5442, 0
        %vm5615 = vcmp.ne.s32.totalorder %v5443, 0
        %vm5616 = vcmp.ne.s32.totalorder %v5444, 0
        %vm5617 = vcmp.ne.s32.totalorder %v5445, 0
        %vm5618 = vcmp.ne.s32.totalorder %v5446, 0
        %vm5619 = vcmp.ne.s32.totalorder %v5447, 0
        %vm5620 = vcmp.ne.s32.totalorder %v5448, 0
        %vm5621 = vcmp.ne.s32.totalorder %v5449, 0
        %vm5622 = vcmp.ne.s32.totalorder %v5450, 0
        %vm5623 = vcmp.ne.s32.totalorder %v5451, 0
        %vm5624 = vcmp.ne.s32.totalorder %v5452, 0
        %vm5625 = vcmp.ne.s32.totalorder %v5453, 0
        %vm5626 = vcmp.ne.s32.totalorder %v5454, 0
        %vm5627 = vcmp.ne.s32.totalorder %v5455, 0
        %vm5628 = vcmp.ne.s32.totalorder %v5456, 0
        %vm5629 = vcmp.ne.s32.totalorder %v5457, 0
        %vm5630 = vcmp.ne.s32.totalorder %v5458, 0
        %vm5631 = vcmp.ne.s32.totalorder %v5459, 0
        %vm5632 = vcmp.ne.s32.totalorder %v5460, 0
        %vm5633 = vcmp.ne.s32.totalorder %v5461, 0
        %vm5634 = vcmp.ne.s32.totalorder %v5462, 0
        %vm5635 = vcmp.ne.s32.totalorder %v5463, 0
        %vm5636 = vcmp.ne.s32.totalorder %v5464, 0
        %vm5637 = vcmp.ne.s32.totalorder %v5465, 0
        %vm5638 = vcmp.ne.s32.totalorder %v5466, 0
        %vm5639 = vcmp.ne.s32.totalorder %v5467, 0
        %vm5640 = vcmp.ne.s32.totalorder %v5468, 0
        %vm5641 = vcmp.ne.s32.totalorder %v5469, 0
        %vm5642 = vcmp.ne.s32.totalorder %v5470, 0
        %vm5643 = vcmp.ne.s32.totalorder %v5471, 0
        %vm5644 = vcmp.ne.s32.totalorder %v5472, 0
        %vm5645 = vcmp.ne.s32.totalorder %v5473, 0
        %vm5646 = vcmp.ne.s32.totalorder %v5474, 0
        %vm5647 = vcmp.ne.s32.totalorder %v5475, 0
        %vm5648 = vcmp.ne.s32.totalorder %v5476, 0
        %vm5649 = vcmp.ne.s32.totalorder %v5477, 0
        %vm5650 = vcmp.ne.s32.totalorder %v5478, 0
        %vm5651 = vcmp.ne.s32.totalorder %v5479, 0
        %vm5652 = vcmp.ne.s32.totalorder %v5480, 0
        %vm5653 = vcmp.ne.s32.totalorder %v5481, 0
        %vm5654 = vcmp.ne.s32.totalorder %v5482, 0
        %vm5655 = vcmp.ne.s32.totalorder %v5483, 0
        %vm5656 = vcmp.ne.s32.totalorder %v5484, 0
        %vm5657 = vcmp.ne.s32.totalorder %v5485, 0
        %vm5658 = vcmp.ne.s32.totalorder %v5486, 0
        %vm5659 = vcmp.ne.s32.totalorder %v5487, 0
        %vm5660 = vcmp.ne.s32.totalorder %v5488, 0
        %vm5661 = vcmp.ne.s32.totalorder %v5489, 0
        %vm5662 = vcmp.ne.s32.totalorder %v5490, 0
        %vm5663 = vcmp.ne.s32.totalorder %v5491, 0
        %vm5664 = vcmp.ne.s32.totalorder %v5492, 0
        %vm5665 = vcmp.ne.s32.totalorder %v5493, 0
        %vm5666 = vcmp.ne.s32.totalorder %v5494, 0
        %vm5667 = vcmp.ne.s32.totalorder %v5495, 0
        %vm5668 = vcmp.ne.s32.totalorder %v5496, 0
        %vm5669 = vcmp.ne.s32.totalorder %v5497, 0
        %vm5670 = vcmp.ne.s32.totalorder %v5498, 0
        %vm5671 = vcmp.ne.s32.totalorder %v5499, 0
        %vm5672 = vcmp.ne.s32.totalorder %v5500, 0
        %vm5673 = vcmp.ne.s32.totalorder %v5501, 0
        %vm5674 = vcmp.ne.s32.totalorder %v5502, 0
        %vm5675 = vcmp.ne.s32.totalorder %v5503, 0
        %vm5676 = vcmp.ne.s32.totalorder %v5504, 0
        %vm5677 = vcmp.ne.s32.totalorder %v5505, 0
        %vm5678 = vcmp.ne.s32.totalorder %v5506, 0
        %vm5679 = vcmp.ne.s32.totalorder %v5507, 0
        %vm5680 = vcmp.ne.s32.totalorder %v5508, 0
        %vm5681 = vcmp.ne.s32.totalorder %v5509, 0
        %vm5682 = vcmp.ne.s32.totalorder %v5510, 0
        %vm5683 = vcmp.ne.s32.totalorder %v5511, 0
        %vm5684 = vcmp.ne.s32.totalorder %v5512, 0
        %vm5685 = vcmp.ne.s32.totalorder %v5513, 0
        %vm5686 = vcmp.ne.s32.totalorder %v5514, 0
        %vm5687 = vcmp.ne.s32.totalorder %v5515, 0
        %vm5688 = vcmp.ne.s32.totalorder %v5516, 0
        %vm5689 = vcmp.ne.s32.totalorder %v5517, 0
        %vm5690 = vcmp.ne.s32.totalorder %v5518, 0
        %vm5691 = vcmp.ne.s32.totalorder %v5519, 0
        %vm5692 = vcmp.ne.s32.totalorder %v5520, 0
        %vm5693 = vcmp.ne.s32.totalorder %v5521, 0
        %vm5694 = vcmp.ne.s32.totalorder %v5522, 0
        %vm5695 = vcmp.ne.s32.totalorder %v5523, 0
        %vm5696 = vcmp.ne.s32.totalorder %v5524, 0
        %vm5697 = vcmp.ne.s32.totalorder %v5525, 0
        %vm5698 = vcmp.ne.s32.totalorder %v5526, 0
        %vm5699 = vcmp.ne.s32.totalorder %v5527, 0
        %vm5700 = vcmp.ne.s32.totalorder %v5528, 0
        %vm5701 = vcmp.ne.s32.totalorder %v5529, 0
        %vm5702 = vcmp.ne.s32.totalorder %v5530, 0
        %vm5703 = vcmp.ne.s32.totalorder %v5531, 0
        %vm5704 = vcmp.ne.s32.totalorder %v5532, 0
        %vm5705 = vcmp.ne.s32.totalorder %v5533, 0
        %vm5706 = vcmp.ne.s32.totalorder %v5534, 0
        %vm5707 = vcmp.ne.s32.totalorder %v5535, 0
        %vm5708 = vcmp.ne.s32.totalorder %v5536, 0
        %vm5709 = vcmp.ne.s32.totalorder %v5537, 0
        %vm5710 = vcmp.ne.s32.totalorder %v5538, 0
        %vm5711 = vcmp.ne.s32.totalorder %v5539, 0
        %vm5712 = vcmp.ne.s32.totalorder %v5540, 0
        %vm5713 = vcmp.ne.s32.totalorder %v5541, 0
        %vm5714 = vcmp.ne.s32.totalorder %v5542, 0
        %vm5715 = vcmp.ne.s32.totalorder %v5543, 0
        %vm5716 = vcmp.ne.s32.totalorder %v5544, 0
        %vm5717 = vcmp.ne.s32.totalorder %v5545, 0
        %vm5718 = vcmp.ne.s32.totalorder %v5546, 0
        %vm5719 = vcmp.ne.s32.totalorder %v5547, 0
        %vm5720 = vcmp.ne.s32.totalorder %v5548, 0
        %vm5721 = vcmp.ne.s32.totalorder %v5549, 0
        %vm5722 = vcmp.ne.s32.totalorder %v5550, 0
        %vm5723 = vcmp.ne.s32.totalorder %v5551, 0
        %vm5724 = vcmp.ne.s32.totalorder %v5552, 0
        %vm5725 = vcmp.ne.s32.totalorder %v5553, 0
        %vm5726 = vcmp.ne.s32.totalorder %v5554, 0
        %vm5727 = vcmp.ne.s32.totalorder %v5555, 0
        %vm5728 = vcmp.ne.s32.totalorder %v5556, 0
        %vm5729 = vcmp.ne.s32.totalorder %v5557, 0
        %vm5730 = vcmp.ne.s32.totalorder %v5558, 0
        %vm5731 = vcmp.ne.s32.totalorder %v5559, 0
        %vm5732 = vcmp.ne.s32.totalorder %v5560, 0
        %vm5733 = vcmp.ne.s32.totalorder %v5561, 0
        %vm5734 = vcmp.ne.s32.totalorder %v5562, 0
        %vm5735 = vcmp.ne.s32.totalorder %v5563, 0
        %vm5736 = vcmp.ne.s32.totalorder %v5564, 0
        %vm5737 = vcmp.ne.s32.totalorder %v5565, 0
        %vm5738 = vcmp.ne.s32.totalorder %v5566, 0
        %vm5739 = vcmp.ne.s32.totalorder %v5567, 0
        %vm5740 = vcmp.ne.s32.totalorder %v5568, 0
        %vm5741 = vcmp.ne.s32.totalorder %v5569, 0
        %vm5742 = vcmp.ne.s32.totalorder %v5570, 0
        %vm5743 = vcmp.ne.s32.totalorder %v5571, 0
        %vm5744 = vcmp.ne.s32.totalorder %v5572, 0
        %vm5745 = vcmp.ne.s32.totalorder %v5573, 0
        %vm5746 = vcmp.ne.s32.totalorder %v5574, 0
        %vm5747 = vcmp.ne.s32.totalorder %v5575, 0
        %vm5748 = vcmp.ne.s32.totalorder %v5576, 0
        %vm5749 = vcmp.ne.s32.totalorder %v5577, 0
        %vm5750 = vcmp.ne.s32.totalorder %v5578, 0
        %vm5751 = vcmp.ne.s32.totalorder %v5579, 0
        %v5752 = vsel %vm5580, %v4549, 0.0
        %v5753 = vsel %vm5581, %v4551, 0.0
        %v5754 = vsel %vm5582, %v4553, 0.0
        %v5755 = vsel %vm5583, %v4555, 0.0
        %v5756 = vsel %vm5584, %v4557, 0.0
        %v5757 = vsel %vm5585, %v4559, 0.0
        %v5758 = vsel %vm5586, %v4561, 0.0
        %v5759 = vsel %vm5587, %v4563, 0.0
        %v5760 = vsel %vm5588, %v4565, 0.0
        %v5761 = vsel %vm5589, %v4567, 0.0
        %v5762 = vsel %vm5590, %v4569, 0.0
        %v5763 = vsel %vm5591, %v4571, 0.0
        %v5764 = vsel %vm5592, %v4573, 0.0
        %v5765 = vsel %vm5593, %v4575, 0.0
        %v5766 = vsel %vm5594, %v4577, 0.0
        %v5767 = vsel %vm5595, %v4579, 0.0
        %v5768 = vsel %vm5596, %v4581, 0.0
        %v5769 = vsel %vm5597, %v4583, 0.0
        %v5770 = vsel %vm5598, %v4585, 0.0
        %v5771 = vsel %vm5599, %v4587, 0.0
        %v5772 = vsel %vm5600, %v4589, 0.0
        %v5773 = vsel %vm5601, %v4591, 0.0
        %v5774 = vsel %vm5602, %v4593, 0.0
        %v5775 = vsel %vm5603, %v4595, 0.0
        %v5776 = vsel %vm5604, %v4597, 0.0
        %v5777 = vsel %vm5605, %v4599, 0.0
        %v5778 = vsel %vm5606, %v4601, 0.0
        %v5779 = vsel %vm5607, %v4603, 0.0
        %v5780 = vsel %vm5608, %v4605, 0.0
        %v5781 = vsel %vm5609, %v4607, 0.0
        %v5782 = vsel %vm5610, %v4609, 0.0
        %v5783 = vsel %vm5611, %v4611, 0.0
        %v5784 = vsel %vm5612, %v4613, 0.0
        %v5785 = vsel %vm5613, %v4615, 0.0
        %v5786 = vsel %vm5614, %v4617, 0.0
        %v5787 = vsel %vm5615, %v4619, 0.0
        %v5788 = vsel %vm5616, %v4621, 0.0
        %v5789 = vsel %vm5617, %v4623, 0.0
        %v5790 = vsel %vm5618, %v4625, 0.0
        %v5791 = vsel %vm5619, %v4627, 0.0
        %v5792 = vsel %vm5620, %v4629, 0.0
        %v5793 = vsel %vm5621, %v4631, 0.0
        %v5794 = vsel %vm5622, %v4633, 0.0
        %v5795 = vsel %vm5623, %v4635, 0.0
        %v5796 = vsel %vm5624, %v4637, 0.0
        %v5797 = vsel %vm5625, %v4639, 0.0
        %v5798 = vsel %vm5626, %v4641, 0.0
        %v5799 = vsel %vm5627, %v4643, 0.0
        %v5800 = vsel %vm5628, %v4645, 0.0
        %v5801 = vsel %vm5629, %v4647, 0.0
        %v5802 = vsel %vm5630, %v4649, 0.0
        %v5803 = vsel %vm5631, %v4651, 0.0
        %v5804 = vsel %vm5632, %v4653, 0.0
        %v5805 = vsel %vm5633, %v4655, 0.0
        %v5806 = vsel %vm5634, %v4657, 0.0
        %v5807 = vsel %vm5635, %v4659, 0.0
        %v5808 = vsel %vm5636, %v4661, 0.0
        %v5809 = vsel %vm5637, %v4663, 0.0
        %v5810 = vsel %vm5638, %v4665, 0.0
        %v5811 = vsel %vm5639, %v4667, 0.0
        %v5812 = vsel %vm5640, %v4669, 0.0
        %v5813 = vsel %vm5641, %v4671, 0.0
        %v5814 = vsel %vm5642, %v4673, 0.0
        %v5815 = vsel %vm5643, %v4675, 0.0
        %v5816 = vsel %vm5644, %v4677, 0.0
        %v5817 = vsel %vm5645, %v4679, 0.0
        %v5818 = vsel %vm5646, %v4681, 0.0
        %v5819 = vsel %vm5647, %v4683, 0.0
        %v5820 = vsel %vm5648, %v4685, 0.0
        %v5821 = vsel %vm5649, %v4687, 0.0
        %v5822 = vsel %vm5650, %v4689, 0.0
        %v5823 = vsel %vm5651, %v4691, 0.0
        %v5824 = vsel %vm5652, %v4693, 0.0
        %v5825 = vsel %vm5653, %v4695, 0.0
        %v5826 = vsel %vm5654, %v4697, 0.0
        %v5827 = vsel %vm5655, %v4699, 0.0
        %v5828 = vsel %vm5656, %v4701, 0.0
        %v5829 = vsel %vm5657, %v4703, 0.0
        %v5830 = vsel %vm5658, %v4705, 0.0
        %v5831 = vsel %vm5659, %v4707, 0.0
        %v5832 = vsel %vm5660, %v4709, 0.0
        %v5833 = vsel %vm5661, %v4711, 0.0
        %v5834 = vsel %vm5662, %v4713, 0.0
        %v5835 = vsel %vm5663, %v4715, 0.0
        %v5836 = vsel %vm5664, %v4717, 0.0
        %v5837 = vsel %vm5665, %v4719, 0.0
        %v5838 = vsel %vm5666, %v4721, 0.0
        %v5839 = vsel %vm5667, %v4723, 0.0
        %v5840 = vsel %vm5668, %v4725, 0.0
        %v5841 = vsel %vm5669, %v4727, 0.0
        %v5842 = vsel %vm5670, %v4729, 0.0
        %v5843 = vsel %vm5671, %v4731, 0.0
        %v5844 = vsel %vm5672, %v4733, 0.0
        %v5845 = vsel %vm5673, %v4735, 0.0
        %v5846 = vsel %vm5674, %v4737, 0.0
        %v5847 = vsel %vm5675, %v4739, 0.0
        %v5848 = vsel %vm5676, %v4741, 0.0
        %v5849 = vsel %vm5677, %v4743, 0.0
        %v5850 = vsel %vm5678, %v4745, 0.0
        %v5851 = vsel %vm5679, %v4747, 0.0
        %v5852 = vsel %vm5680, %v4749, 0.0
        %v5853 = vsel %vm5681, %v4751, 0.0
        %v5854 = vsel %vm5682, %v4753, 0.0
        %v5855 = vsel %vm5683, %v4755, 0.0
        %v5856 = vsel %vm5684, %v4757, 0.0
        %v5857 = vsel %vm5685, %v4759, 0.0
        %v5858 = vsel %vm5686, %v4761, 0.0
        %v5859 = vsel %vm5687, %v4763, 0.0
        %v5860 = vsel %vm5688, %v4765, 0.0
        %v5861 = vsel %vm5689, %v4767, 0.0
        %v5862 = vsel %vm5690, %v4769, 0.0
        %v5863 = vsel %vm5691, %v4771, 0.0
        %v5864 = vsel %vm5692, %v4773, 0.0
        %v5865 = vsel %vm5693, %v4775, 0.0
        %v5866 = vsel %vm5694, %v4777, 0.0
        %v5867 = vsel %vm5695, %v4779, 0.0
        %v5868 = vsel %vm5696, %v4781, 0.0
        %v5869 = vsel %vm5697, %v4783, 0.0
        %v5870 = vsel %vm5698, %v4785, 0.0
        %v5871 = vsel %vm5699, %v4787, 0.0
        %v5872 = vsel %vm5700, %v4789, 0.0
        %v5873 = vsel %vm5701, %v4791, 0.0
        %v5874 = vsel %vm5702, %v4793, 0.0
        %v5875 = vsel %vm5703, %v4795, 0.0
        %v5876 = vsel %vm5704, %v4797, 0.0
        %v5877 = vsel %vm5705, %v4799, 0.0
        %v5878 = vsel %vm5706, %v4801, 0.0
        %v5879 = vsel %vm5707, %v4803, 0.0
        %v5880 = vsel %vm5708, %v4805, 0.0
        %v5881 = vsel %vm5709, %v4807, 0.0
        %v5882 = vsel %vm5710, %v4809, 0.0
        %v5883 = vsel %vm5711, %v4811, 0.0
        %v5884 = vsel %vm5712, %v4813, 0.0
        %v5885 = vsel %vm5713, %v4815, 0.0
        %v5886 = vsel %vm5714, %v4817, 0.0
        %v5887 = vsel %vm5715, %v4819, 0.0
        %v5888 = vsel %vm5716, %v4821, 0.0
        %v5889 = vsel %vm5717, %v4823, 0.0
        %v5890 = vsel %vm5718, %v4825, 0.0
        %v5891 = vsel %vm5719, %v4827, 0.0
        %v5892 = vsel %vm5720, %v4829, 0.0
        %v5893 = vsel %vm5721, %v4831, 0.0
        %v5894 = vsel %vm5722, %v4833, 0.0
        %v5895 = vsel %vm5723, %v4835, 0.0
        %v5896 = vsel %vm5724, %v4837, 0.0
        %v5897 = vsel %vm5725, %v4839, 0.0
        %v5898 = vsel %vm5726, %v4841, 0.0
        %v5899 = vsel %vm5727, %v4843, 0.0
        %v5900 = vsel %vm5728, %v4845, 0.0
        %v5901 = vsel %vm5729, %v4847, 0.0
        %v5902 = vsel %vm5730, %v4849, 0.0
        %v5903 = vsel %vm5731, %v4851, 0.0
        %v5904 = vsel %vm5732, %v4853, 0.0
        %v5905 = vsel %vm5733, %v4855, 0.0
        %v5906 = vsel %vm5734, %v4857, 0.0
        %v5907 = vsel %vm5735, %v4859, 0.0
        %v5908 = vsel %vm5736, %v4861, 0.0
        %v5909 = vsel %vm5737, %v4863, 0.0
        %v5910 = vsel %vm5738, %v4865, 0.0
        %v5911 = vsel %vm5739, %v4867, 0.0
        %v5912 = vsel %vm5740, %v4869, 0.0
        %v5913 = vsel %vm5741, %v4871, 0.0
        %v5914 = vsel %vm5742, %v4873, 0.0
        %v5915 = vsel %vm5743, %v4875, 0.0
        %v5916 = vsel %vm5744, %v4877, 0.0
        %v5917 = vsel %vm5745, %v4879, 0.0
        %v5918 = vsel %vm5746, %v4881, 0.0
        %v5919 = vsel %vm5747, %v4883, 0.0
        %v5920 = vsel %vm5748, %v4885, 0.0
        %v5921 = vsel %vm5749, %v4887, 0.0
        %v5922 = vsel %vm5750, %v4889, 0.0
        %v5923 = vsel %vm5751, %v4891, 0.0
        %vm5924 = vcmask 48128
        %5925 = vst.msk [vmem:[%s200] sm:$0xff] %vm5924, %v5752
        %5926 = vst.msk [vmem:[%s200 + $0x8] sm:$0xff] %vm5924, %v5753
        %5927 = vst.msk [vmem:[%s200 + $0x10] sm:$0xff] %vm5924, %v5754
        %5928 = vst.msk [vmem:[%s200 + $0x18] sm:$0xff] %vm5924, %v5755
        %5929 = vst.msk [vmem:[%s200 + $0x20] sm:$0xff] %vm5924, %v5756
        %5930 = vst.msk [vmem:[%s200 + $0x28] sm:$0xff] %vm5924, %v5757
        %5931 = vst.msk [vmem:[%s200 + $0x30] sm:$0xff] %vm5924, %v5758
        %5932 = vst.msk [vmem:[%s200 + $0x38] sm:$0xff] %vm5924, %v5759
        %5933 = vst.msk [vmem:[%s200 + $0x40] sm:$0xff] %vm5924, %v5760
        %5934 = vst.msk [vmem:[%s200 + $0x48] sm:$0xff] %vm5924, %v5761
        %5935 = vst.msk [vmem:[%s200 + $0x50] sm:$0xff] %vm5924, %v5762
        %5936 = vst.msk [vmem:[%s200 + $0x58] sm:$0xff] %vm5924, %v5763
        %5937 = vst.msk [vmem:[%s200 + $0x60] sm:$0xff] %vm5924, %v5764
        %5938 = vst.msk [vmem:[%s200 + $0x68] sm:$0xff] %vm5924, %v5765
        %5939 = vst.msk [vmem:[%s200 + $0x70] sm:$0xff] %vm5924, %v5766
        %5940 = vst.msk [vmem:[%s200 + $0x78] sm:$0xff] %vm5924, %v5767
        %5941 = vst.msk [vmem:[%s200 + $0x80] sm:$0xff] %vm5924, %v5768
        %5942 = vst.msk [vmem:[%s200 + $0x88] sm:$0xff] %vm5924, %v5769
        %5943 = vst.msk [vmem:[%s200 + $0x90] sm:$0xff] %vm5924, %v5770
        %5944 = vst.msk [vmem:[%s200 + $0x98] sm:$0xff] %vm5924, %v5771
        %5945 = vst.msk [vmem:[%s200 + $0xa0] sm:$0xff] %vm5924, %v5772
        %5946 = vst.msk [vmem:[%s200 + $0xa8] sm:$0xff] %vm5924, %v5773
        %5947 = vst.msk [vmem:[%s200 + $0xb0] sm:$0xff] %vm5924, %v5774
        %5948 = vst.msk [vmem:[%s200 + $0xb8] sm:$0xff] %vm5924, %v5775
        %5949 = vst.msk [vmem:[%s200 + $0xc0] sm:$0xff] %vm5924, %v5776
        %5950 = vst.msk [vmem:[%s200 + $0xc8] sm:$0xff] %vm5924, %v5777
        %5951 = vst.msk [vmem:[%s200 + $0xd0] sm:$0xff] %vm5924, %v5778
        %5952 = vst.msk [vmem:[%s200 + $0xd8] sm:$0xff] %vm5924, %v5779
        %5953 = vst.msk [vmem:[%s200 + $0xe0] sm:$0xff] %vm5924, %v5780
        %5954 = vst.msk [vmem:[%s200 + $0xe8] sm:$0xff] %vm5924, %v5781
        %5955 = vst.msk [vmem:[%s200 + $0xf0] sm:$0xff] %vm5924, %v5782
        %5956 = vst.msk [vmem:[%s200 + $0xf8] sm:$0xff] %vm5924, %v5783
        %5957 = vst.msk [vmem:[%s200 + $0x100] sm:$0xff] %vm5924, %v5784
        %5958 = vst.msk [vmem:[%s200 + $0x108] sm:$0xff] %vm5924, %v5785
        %5959 = vst.msk [vmem:[%s200 + $0x110] sm:$0xff] %vm5924, %v5786
        %5960 = vst.msk [vmem:[%s200 + $0x118] sm:$0xff] %vm5924, %v5787
        %5961 = vst.msk [vmem:[%s200 + $0x120] sm:$0xff] %vm5924, %v5788
        %5962 = vst.msk [vmem:[%s200 + $0x128] sm:$0xff] %vm5924, %v5789
        %5963 = vst.msk [vmem:[%s200 + $0x130] sm:$0xff] %vm5924, %v5790
        %5964 = vst.msk [vmem:[%s200 + $0x138] sm:$0xff] %vm5924, %v5791
        %5965 = vst.msk [vmem:[%s200 + $0x140] sm:$0xff] %vm5924, %v5792
        %5966 = vst.msk [vmem:[%s200 + $0x148] sm:$0xff] %vm5924, %v5793
        %5967 = vst.msk [vmem:[%s200 + $0x150] sm:$0xff] %vm5924, %v5794
        %5968 = vst.msk [vmem:[%s200 + $0x158] sm:$0xff] %vm5924, %v5795
        %5969 = vst.msk [vmem:[%s200 + $0x160] sm:$0xff] %vm5924, %v5796
        %5970 = vst.msk [vmem:[%s200 + $0x168] sm:$0xff] %vm5924, %v5797
        %5971 = vst.msk [vmem:[%s200 + $0x170] sm:$0xff] %vm5924, %v5798
        %5972 = vst.msk [vmem:[%s200 + $0x178] sm:$0xff] %vm5924, %v5799
        %5973 = vst.msk [vmem:[%s200 + $0x180] sm:$0xff] %vm5924, %v5800
        %5974 = vst.msk [vmem:[%s200 + $0x188] sm:$0xff] %vm5924, %v5801
        %5975 = vst.msk [vmem:[%s200 + $0x190] sm:$0xff] %vm5924, %v5802
        %5976 = vst.msk [vmem:[%s200 + $0x198] sm:$0xff] %vm5924, %v5803
        %5977 = vst.msk [vmem:[%s200 + $0x1a0] sm:$0xff] %vm5924, %v5804
        %5978 = vst.msk [vmem:[%s200 + $0x1a8] sm:$0xff] %vm5924, %v5805
        %5979 = vst.msk [vmem:[%s200 + $0x1b0] sm:$0xff] %vm5924, %v5806
        %5980 = vst.msk [vmem:[%s200 + $0x1b8] sm:$0xff] %vm5924, %v5807
        %5981 = vst.msk [vmem:[%s200 + $0x1c0] sm:$0xff] %vm5924, %v5808
        %5982 = vst.msk [vmem:[%s200 + $0x1c8] sm:$0xff] %vm5924, %v5809
        %5983 = vst.msk [vmem:[%s200 + $0x1d0] sm:$0xff] %vm5924, %v5810
        %5984 = vst.msk [vmem:[%s200 + $0x1d8] sm:$0xff] %vm5924, %v5811
        %5985 = vst.msk [vmem:[%s200 + $0x1e0] sm:$0xff] %vm5924, %v5812
        %5986 = vst.msk [vmem:[%s200 + $0x1e8] sm:$0xff] %vm5924, %v5813
        %5987 = vst.msk [vmem:[%s200 + $0x1f0] sm:$0xff] %vm5924, %v5814
        %5988 = vst.msk [vmem:[%s200 + $0x1f8] sm:$0xff] %vm5924, %v5815
        %5989 = vst.msk [vmem:[%s200 + $0x200] sm:$0xff] %vm5924, %v5816
        %5990 = vst.msk [vmem:[%s200 + $0x208] sm:$0xff] %vm5924, %v5817
        %5991 = vst.msk [vmem:[%s200 + $0x210] sm:$0xff] %vm5924, %v5818
        %5992 = vst.msk [vmem:[%s200 + $0x218] sm:$0xff] %vm5924, %v5819
        %5993 = vst.msk [vmem:[%s200 + $0x220] sm:$0xff] %vm5924, %v5820
        %5994 = vst.msk [vmem:[%s200 + $0x228] sm:$0xff] %vm5924, %v5821
        %5995 = vst.msk [vmem:[%s200 + $0x230] sm:$0xff] %vm5924, %v5822
        %5996 = vst.msk [vmem:[%s200 + $0x238] sm:$0xff] %vm5924, %v5823
        %5997 = vst.msk [vmem:[%s200 + $0x240] sm:$0xff] %vm5924, %v5824
        %5998 = vst.msk [vmem:[%s200 + $0x248] sm:$0xff] %vm5924, %v5825
        %5999 = vst.msk [vmem:[%s200 + $0x250] sm:$0xff] %vm5924, %v5826
        %6000 = vst.msk [vmem:[%s200 + $0x258] sm:$0xff] %vm5924, %v5827
        %6001 = vst.msk [vmem:[%s200 + $0x260] sm:$0xff] %vm5924, %v5828
        %6002 = vst.msk [vmem:[%s200 + $0x268] sm:$0xff] %vm5924, %v5829
        %6003 = vst.msk [vmem:[%s200 + $0x270] sm:$0xff] %vm5924, %v5830
        %6004 = vst.msk [vmem:[%s200 + $0x278] sm:$0xff] %vm5924, %v5831
        %6005 = vst.msk [vmem:[%s200 + $0x280] sm:$0xff] %vm5924, %v5832
        %6006 = vst.msk [vmem:[%s200 + $0x288] sm:$0xff] %vm5924, %v5833
        %6007 = vst.msk [vmem:[%s200 + $0x290] sm:$0xff] %vm5924, %v5834
        %6008 = vst.msk [vmem:[%s200 + $0x298] sm:$0xff] %vm5924, %v5835
        %6009 = vst.msk [vmem:[%s200 + $0x2a0] sm:$0xff] %vm5924, %v5836
        %6010 = vst.msk [vmem:[%s200 + $0x2a8] sm:$0xff] %vm5924, %v5837
        %6011 = vst.msk [vmem:[%s200 + $0x2b0] sm:$0xff] %vm5924, %v5838
        %6012 = vst.msk [vmem:[%s200 + $0x2b8] sm:$0xff] %vm5924, %v5839
        %6013 = vst.msk [vmem:[%s200 + $0x2c0] sm:$0xff] %vm5924, %v5840
        %6014 = vst.msk [vmem:[%s200 + $0x2c8] sm:$0xff] %vm5924, %v5841
        %6015 = vst.msk [vmem:[%s200 + $0x2d0] sm:$0xff] %vm5924, %v5842
        %6016 = vst.msk [vmem:[%s200 + $0x2d8] sm:$0xff] %vm5924, %v5843
        %6017 = vst.msk [vmem:[%s200 + $0x2e0] sm:$0xff] %vm5924, %v5844
        %6018 = vst.msk [vmem:[%s200 + $0x2e8] sm:$0xff] %vm5924, %v5845
        %6019 = vst.msk [vmem:[%s200 + $0x2f0] sm:$0xff] %vm5924, %v5846
        %6020 = vst.msk [vmem:[%s200 + $0x2f8] sm:$0xff] %vm5924, %v5847
        %6021 = vst.msk [vmem:[%s200 + $0x300] sm:$0xff] %vm5924, %v5848
        %6022 = vst.msk [vmem:[%s200 + $0x308] sm:$0xff] %vm5924, %v5849
        %6023 = vst.msk [vmem:[%s200 + $0x310] sm:$0xff] %vm5924, %v5850
        %6024 = vst.msk [vmem:[%s200 + $0x318] sm:$0xff] %vm5924, %v5851
        %6025 = vst.msk [vmem:[%s200 + $0x320] sm:$0xff] %vm5924, %v5852
        %6026 = vst.msk [vmem:[%s200 + $0x328] sm:$0xff] %vm5924, %v5853
        %6027 = vst.msk [vmem:[%s200 + $0x330] sm:$0xff] %vm5924, %v5854
        %6028 = vst.msk [vmem:[%s200 + $0x338] sm:$0xff] %vm5924, %v5855
        %6029 = vst.msk [vmem:[%s200 + $0x340] sm:$0xff] %vm5924, %v5856
        %6030 = vst.msk [vmem:[%s200 + $0x348] sm:$0xff] %vm5924, %v5857
        %6031 = vst.msk [vmem:[%s200 + $0x350] sm:$0xff] %vm5924, %v5858
        %6032 = vst.msk [vmem:[%s200 + $0x358] sm:$0xff] %vm5924, %v5859
        %6033 = vst.msk [vmem:[%s200 + $0x360] sm:$0xff] %vm5924, %v5860
        %6034 = vst.msk [vmem:[%s200 + $0x368] sm:$0xff] %vm5924, %v5861
        %6035 = vst.msk [vmem:[%s200 + $0x370] sm:$0xff] %vm5924, %v5862
        %6036 = vst.msk [vmem:[%s200 + $0x378] sm:$0xff] %vm5924, %v5863
        %6037 = vst.msk [vmem:[%s200 + $0x380] sm:$0xff] %vm5924, %v5864
        %6038 = vst.msk [vmem:[%s200 + $0x388] sm:$0xff] %vm5924, %v5865
        %6039 = vst.msk [vmem:[%s200 + $0x390] sm:$0xff] %vm5924, %v5866
        %6040 = vst.msk [vmem:[%s200 + $0x398] sm:$0xff] %vm5924, %v5867
        %6041 = vst.msk [vmem:[%s200 + $0x3a0] sm:$0xff] %vm5924, %v5868
        %6042 = vst.msk [vmem:[%s200 + $0x3a8] sm:$0xff] %vm5924, %v5869
        %6043 = vst.msk [vmem:[%s200 + $0x3b0] sm:$0xff] %vm5924, %v5870
        %6044 = vst.msk [vmem:[%s200 + $0x3b8] sm:$0xff] %vm5924, %v5871
        %6045 = vst.msk [vmem:[%s200 + $0x3c0] sm:$0xff] %vm5924, %v5872
        %6046 = vst.msk [vmem:[%s200 + $0x3c8] sm:$0xff] %vm5924, %v5873
        %6047 = vst.msk [vmem:[%s200 + $0x3d0] sm:$0xff] %vm5924, %v5874
        %6048 = vst.msk [vmem:[%s200 + $0x3d8] sm:$0xff] %vm5924, %v5875
        %6049 = vst.msk [vmem:[%s200 + $0x3e0] sm:$0xff] %vm5924, %v5876
        %6050 = vst.msk [vmem:[%s200 + $0x3e8] sm:$0xff] %vm5924, %v5877
        %6051 = vst.msk [vmem:[%s200 + $0x3f0] sm:$0xff] %vm5924, %v5878
        %6052 = vst.msk [vmem:[%s200 + $0x3f8] sm:$0xff] %vm5924, %v5879
        %6053 = vst.msk [vmem:[%s200 + $0x400] sm:$0xff] %vm5924, %v5880
        %6054 = vst.msk [vmem:[%s200 + $0x408] sm:$0xff] %vm5924, %v5881
        %6055 = vst.msk [vmem:[%s200 + $0x410] sm:$0xff] %vm5924, %v5882
        %6056 = vst.msk [vmem:[%s200 + $0x418] sm:$0xff] %vm5924, %v5883
        %6057 = vst.msk [vmem:[%s200 + $0x420] sm:$0xff] %vm5924, %v5884
        %6058 = vst.msk [vmem:[%s200 + $0x428] sm:$0xff] %vm5924, %v5885
        %6059 = vst.msk [vmem:[%s200 + $0x430] sm:$0xff] %vm5924, %v5886
        %6060 = vst.msk [vmem:[%s200 + $0x438] sm:$0xff] %vm5924, %v5887
        %6061 = vst.msk [vmem:[%s200 + $0x440] sm:$0xff] %vm5924, %v5888
        %6062 = vst.msk [vmem:[%s200 + $0x448] sm:$0xff] %vm5924, %v5889
        %6063 = vst.msk [vmem:[%s200 + $0x450] sm:$0xff] %vm5924, %v5890
        %6064 = vst.msk [vmem:[%s200 + $0x458] sm:$0xff] %vm5924, %v5891
        %6065 = vst.msk [vmem:[%s200 + $0x460] sm:$0xff] %vm5924, %v5892
        %6066 = vst.msk [vmem:[%s200 + $0x468] sm:$0xff] %vm5924, %v5893
        %6067 = vst.msk [vmem:[%s200 + $0x470] sm:$0xff] %vm5924, %v5894
        %6068 = vst.msk [vmem:[%s200 + $0x478] sm:$0xff] %vm5924, %v5895
        %6069 = vst.msk [vmem:[%s200 + $0x480] sm:$0xff] %vm5924, %v5896
        %6070 = vst.msk [vmem:[%s200 + $0x488] sm:$0xff] %vm5924, %v5897
        %6071 = vst.msk [vmem:[%s200 + $0x490] sm:$0xff] %vm5924, %v5898
        %6072 = vst.msk [vmem:[%s200 + $0x498] sm:$0xff] %vm5924, %v5899
        %6073 = vst.msk [vmem:[%s200 + $0x4a0] sm:$0xff] %vm5924, %v5900
        %6074 = vst.msk [vmem:[%s200 + $0x4a8] sm:$0xff] %vm5924, %v5901
        %6075 = vst.msk [vmem:[%s200 + $0x4b0] sm:$0xff] %vm5924, %v5902
        %6076 = vst.msk [vmem:[%s200 + $0x4b8] sm:$0xff] %vm5924, %v5903
        %6077 = vst.msk [vmem:[%s200 + $0x4c0] sm:$0xff] %vm5924, %v5904
        %6078 = vst.msk [vmem:[%s200 + $0x4c8] sm:$0xff] %vm5924, %v5905
        %6079 = vst.msk [vmem:[%s200 + $0x4d0] sm:$0xff] %vm5924, %v5906
        %6080 = vst.msk [vmem:[%s200 + $0x4d8] sm:$0xff] %vm5924, %v5907
        %6081 = vst.msk [vmem:[%s200 + $0x4e0] sm:$0xff] %vm5924, %v5908
        %6082 = vst.msk [vmem:[%s200 + $0x4e8] sm:$0xff] %vm5924, %v5909
        %6083 = vst.msk [vmem:[%s200 + $0x4f0] sm:$0xff] %vm5924, %v5910
        %6084 = vst.msk [vmem:[%s200 + $0x4f8] sm:$0xff] %vm5924, %v5911
        %6085 = vst.msk [vmem:[%s200 + $0x500] sm:$0xff] %vm5924, %v5912
        %6086 = vst.msk [vmem:[%s200 + $0x508] sm:$0xff] %vm5924, %v5913
        %6087 = vst.msk [vmem:[%s200 + $0x510] sm:$0xff] %vm5924, %v5914
        %6088 = vst.msk [vmem:[%s200 + $0x518] sm:$0xff] %vm5924, %v5915
        %6089 = vst.msk [vmem:[%s200 + $0x520] sm:$0xff] %vm5924, %v5916
        %6090 = vst.msk [vmem:[%s200 + $0x528] sm:$0xff] %vm5924, %v5917
        %6091 = vst.msk [vmem:[%s200 + $0x530] sm:$0xff] %vm5924, %v5918
        %6092 = vst.msk [vmem:[%s200 + $0x538] sm:$0xff] %vm5924, %v5919
        %6093 = vst.msk [vmem:[%s200 + $0x540] sm:$0xff] %vm5924, %v5920
        %6094 = vst.msk [vmem:[%s200 + $0x548] sm:$0xff] %vm5924, %v5921
        %6095 = vst.msk [vmem:[%s200 + $0x550] sm:$0xff] %vm5924, %v5922
        %6096 = vst.msk [vmem:[%s200 + $0x558] sm:$0xff] %vm5924, %v5923
        %s6097 = sand.u32 %s95, 1
        %s6098 = sand.u32 %s95, 1
        %s6099 = smul.addr %s6098, 1376
        %s6100 = scalar_lea.vmem [#allocation2], %s6099
        // Predicated region
        $region33: #{tpu_custom_call.1} parent=31 // pred_check
          %p6101 = pneg %p105
        $region34: #{tpu_custom_call.1} parent=31 // pred_check_branch
          %6103 = sbr.rel (%p6101) target = $region36
        $region35: #{tpu_custom_call.1} parent=31 // pred_region
          %s6104 = smul.u32 172, %s14
          %s6105 = ssub.s32 341, %s6104
          %p6106 = scmp.lt.s32.totalorder %s6105, 172
          %s6107 = scalar_select %p6106, %s6105, 172
          %s6108 = smul.u32 8, %s6107
          %p6109 = scmp.ne.s32.totalorder 0, %s6108
          %s6110 = smul.addr %s6104, 8
          %s6111 = scalar_lea.vmem %s3, %s6110
          // Predicated region
          $region37: #{tpu_custom_call.1} parent=35 // pred_check
            %p6112 = pneg %p6109
          $region38: #{tpu_custom_call.1} parent=35 // pred_check_branch
            %6114 = sbr.rel (%p6112) target = $region40
          $region39: #{tpu_custom_call.1} parent=35 // pred_region
            // Predicated region
            $region41: #{tpu_custom_call.1} parent=39 // pred_check
              _
            $region42: #{tpu_custom_call.1} parent=39 // pred_check_branch
              %6116 = sbr.rel (0) target = $region44
            $region43: #{tpu_custom_call.1} parent=39 // pred_region
              // Predicated region
              $region63: #{tpu_custom_call.1} parent=43 // pred_check
                _
              $region64: #{tpu_custom_call.1} parent=43 // pred_check_branch
                %6228 = sbr.rel (0) target = $region66
              $region65: #{tpu_custom_call.1} parent=43 // pred_region
                %s6229 = sshrl.u32 %s6107, 5
                // While loop
                $region67: #{tpu_custom_call.1} parent=65 // loop_pre_header
                  _
                $region68: #{tpu_custom_call.1} parent=65 // loop_header
                  %s6231 = sphi 0, %s6233
                  %p6232 = scmp.ge.s32.totalorder %s6231, %s6229
                  %s6236 = sphi 0, %s6305
                  %s6237 = sphi %s6100, %s6308
                  %s6238 = sphi %s6111, %s6309
                $region69: #{tpu_custom_call.1} parent=65 // loop_header_branch
                  %6235 = sbr.rel (%p6232) target = $region73
                $region70: #{tpu_custom_call.1} parent=65 // loop_body
                  %v6239 = vld [vmem:[%s6237] sm:$0xff]
                  %6240 = vst [vmem:[%s6238] sm:$0xff] %v6239
                  %v6241 = vld [vmem:[%s6237 + $0x8] sm:$0xff]
                  %6242 = vst [vmem:[%s6238 + $0x8] sm:$0xff] %v6241
                  %v6243 = vld [vmem:[%s6237 + $0x10] sm:$0xff]
                  %6244 = vst [vmem:[%s6238 + $0x10] sm:$0xff] %v6243
                  %v6245 = vld [vmem:[%s6237 + $0x18] sm:$0xff]
                  %6246 = vst [vmem:[%s6238 + $0x18] sm:$0xff] %v6245
                  %v6247 = vld [vmem:[%s6237 + $0x20] sm:$0xff]
                  %6248 = vst [vmem:[%s6238 + $0x20] sm:$0xff] %v6247
                  %v6249 = vld [vmem:[%s6237 + $0x28] sm:$0xff]
                  %6250 = vst [vmem:[%s6238 + $0x28] sm:$0xff] %v6249
                  %v6251 = vld [vmem:[%s6237 + $0x30] sm:$0xff]
                  %6252 = vst [vmem:[%s6238 + $0x30] sm:$0xff] %v6251
                  %v6253 = vld [vmem:[%s6237 + $0x38] sm:$0xff]
                  %6254 = vst [vmem:[%s6238 + $0x38] sm:$0xff] %v6253
                  %v6255 = vld [vmem:[%s6237 + $0x40] sm:$0xff]
                  %6256 = vst [vmem:[%s6238 + $0x40] sm:$0xff] %v6255
                  %v6257 = vld [vmem:[%s6237 + $0x48] sm:$0xff]
                  %6258 = vst [vmem:[%s6238 + $0x48] sm:$0xff] %v6257
                  %v6259 = vld [vmem:[%s6237 + $0x50] sm:$0xff]
                  %6260 = vst [vmem:[%s6238 + $0x50] sm:$0xff] %v6259
                  %v6261 = vld [vmem:[%s6237 + $0x58] sm:$0xff]
                  %6262 = vst [vmem:[%s6238 + $0x58] sm:$0xff] %v6261
                  %v6263 = vld [vmem:[%s6237 + $0x60] sm:$0xff]
                  %6264 = vst [vmem:[%s6238 + $0x60] sm:$0xff] %v6263
                  %v6265 = vld [vmem:[%s6237 + $0x68] sm:$0xff]
                  %6266 = vst [vmem:[%s6238 + $0x68] sm:$0xff] %v6265
                  %v6267 = vld [vmem:[%s6237 + $0x70] sm:$0xff]
                  %6268 = vst [vmem:[%s6238 + $0x70] sm:$0xff] %v6267
                  %v6269 = vld [vmem:[%s6237 + $0x78] sm:$0xff]
                  %6270 = vst [vmem:[%s6238 + $0x78] sm:$0xff] %v6269
                  %v6271 = vld [vmem:[%s6237 + $0x80] sm:$0xff]
                  %6272 = vst [vmem:[%s6238 + $0x80] sm:$0xff] %v6271
                  %v6273 = vld [vmem:[%s6237 + $0x88] sm:$0xff]
                  %6274 = vst [vmem:[%s6238 + $0x88] sm:$0xff] %v6273
                  %v6275 = vld [vmem:[%s6237 + $0x90] sm:$0xff]
                  %6276 = vst [vmem:[%s6238 + $0x90] sm:$0xff] %v6275
                  %v6277 = vld [vmem:[%s6237 + $0x98] sm:$0xff]
                  %6278 = vst [vmem:[%s6238 + $0x98] sm:$0xff] %v6277
                  %v6279 = vld [vmem:[%s6237 + $0xa0] sm:$0xff]
                  %6280 = vst [vmem:[%s6238 + $0xa0] sm:$0xff] %v6279
                  %v6281 = vld [vmem:[%s6237 + $0xa8] sm:$0xff]
                  %6282 = vst [vmem:[%s6238 + $0xa8] sm:$0xff] %v6281
                  %v6283 = vld [vmem:[%s6237 + $0xb0] sm:$0xff]
                  %6284 = vst [vmem:[%s6238 + $0xb0] sm:$0xff] %v6283
                  %v6285 = vld [vmem:[%s6237 + $0xb8] sm:$0xff]
                  %6286 = vst [vmem:[%s6238 + $0xb8] sm:$0xff] %v6285
                  %v6287 = vld [vmem:[%s6237 + $0xc0] sm:$0xff]
                  %6288 = vst [vmem:[%s6238 + $0xc0] sm:$0xff] %v6287
                  %v6289 = vld [vmem:[%s6237 + $0xc8] sm:$0xff]
                  %6290 = vst [vmem:[%s6238 + $0xc8] sm:$0xff] %v6289
                  %v6291 = vld [vmem:[%s6237 + $0xd0] sm:$0xff]
                  %6292 = vst [vmem:[%s6238 + $0xd0] sm:$0xff] %v6291
                  %v6293 = vld [vmem:[%s6237 + $0xd8] sm:$0xff]
                  %6294 = vst [vmem:[%s6238 + $0xd8] sm:$0xff] %v6293
                  %v6295 = vld [vmem:[%s6237 + $0xe0] sm:$0xff]
                  %6296 = vst [vmem:[%s6238 + $0xe0] sm:$0xff] %v6295
                  %v6297 = vld [vmem:[%s6237 + $0xe8] sm:$0xff]
                  %6298 = vst [vmem:[%s6238 + $0xe8] sm:$0xff] %v6297
                  %v6299 = vld [vmem:[%s6237 + $0xf0] sm:$0xff]
                  %6300 = vst [vmem:[%s6238 + $0xf0] sm:$0xff] %v6299
                  %v6301 = vld [vmem:[%s6237 + $0xf8] sm:$0xff]
                  %6302 = vst [vmem:[%s6238 + $0xf8] sm:$0xff] %v6301
                  %s6303 = sadd.s32 1, %s6236
                  %p6304 = scmp.ge.s32.totalorder %s6303, %s6229
                  %s6305 = scalar_select %p6304, 0, %s6303
                  %s6306 = smul.u32 %s6305, 256
                  %s6307 = smul.u32 %s6305, 256
                  %s6308 = scalar_lea.vmem %s6100, %s6306 [#allocation2]
                  %s6309 = scalar_lea.vmem %s6111, %s6307
                $region71: #{tpu_custom_call.1} parent=65 // loop_footer
                  %s6233 = sadd.s32 %s6231, 1
                $region72: #{tpu_custom_call.1} parent=65 // loop_footer_branch
                  %6230 = sbr.rel target = $region68
                $region73: #{tpu_custom_call.1} parent=65 // loop_exit
                  _
                %s6310 = sshrl.u32 %s6107, 5
                %s6311 = sand.u32 %s6107, 31
                %s6312 = smul.u32 %s6310, 32
                %s6313 = smul.u32 8, %s6312
                %s6314 = scalar_lea.vmem %s6100, %s6313 [#allocation2]
                %s6315 = smul.u32 8, %s6312
                %s6316 = scalar_lea.vmem %s6111, %s6315
                // While loop
                $region74: #{tpu_custom_call.1} parent=65 // loop_pre_header
                  _
                $region75: #{tpu_custom_call.1} parent=65 // loop_header
                  %s6318 = sphi 0, %s6320
                  %p6319 = scmp.ge.s32.totalorder %s6318, %s6311
                  %s6323 = sphi 0, %s6330
                  %s6324 = sphi %s6314, %s6333
                  %s6325 = sphi %s6316, %s6334
                $region76: #{tpu_custom_call.1} parent=65 // loop_header_branch
                  %6322 = sbr.rel (%p6319) target = $region80
                $region77: #{tpu_custom_call.1} parent=65 // loop_body
                  %v6326 = vld [vmem:[%s6324] sm:$0xff]
                  %6327 = vst [vmem:[%s6325] sm:$0xff] %v6326
                  %s6328 = sadd.s32 1, %s6323
                  %p6329 = scmp.ge.s32.totalorder %s6328, %s6311
                  %s6330 = scalar_select %p6329, 0, %s6328
                  %s6331 = smul.u32 %s6330, 8
                  %s6332 = smul.u32 %s6330, 8
                  %s6333 = scalar_lea.vmem %s6314, %s6331 [#allocation2]
                  %s6334 = scalar_lea.vmem %s6316, %s6332
                $region78: #{tpu_custom_call.1} parent=65 // loop_footer
                  %s6320 = sadd.s32 %s6318, 1
                $region79: #{tpu_custom_call.1} parent=65 // loop_footer_branch
                  %6317 = sbr.rel target = $region75
                $region80: #{tpu_custom_call.1} parent=65 // loop_exit
                  _
              $region66: #{tpu_custom_call.1} parent=43 // pred_fallthru
                _
              // Predicated region
              $region81: #{tpu_custom_call.1} parent=43 // pred_check
                _
              $region82: #{tpu_custom_call.1} parent=43 // pred_check_branch
                %6336 = sbr.rel target = $region84
              $region83: #{tpu_custom_call.1} parent=43 // pred_region
                _
              $region84: #{tpu_custom_call.1} parent=43 // pred_fallthru
                _
            $region44: #{tpu_custom_call.1} parent=39 // pred_fallthru
              _
            // Predicated region
            $region45: #{tpu_custom_call.1} parent=39 // pred_check
              _
            $region46: #{tpu_custom_call.1} parent=39 // pred_check_branch
              %6118 = sbr.rel target = $region48
            $region47: #{tpu_custom_call.1} parent=39 // pred_region
              %s6120 = ssub.s32 256, 1
              %s6121 = sshrl.u32 %s6107, 5
              // While loop
              $region49: #{tpu_custom_call.1} parent=47 // loop_pre_header
                _
              $region50: #{tpu_custom_call.1} parent=47 // loop_header
                %s6123 = sphi 0, %s6125
                %p6124 = scmp.ge.s32.totalorder %s6123, %s6121
                %s6128 = sphi 0, %s6197
                %s6129 = sphi %s6100, %s6200
                %s6130 = sphi %s6111, %s6201
              $region51: #{tpu_custom_call.1} parent=47 // loop_header_branch
                %6127 = sbr.rel (%p6124) target = $region55
              $region52: #{tpu_custom_call.1} parent=47 // loop_body
                %v6131 = vld [vmem:[%s6129] sm:%s6120]
                %6132 = vst [vmem:[%s6130] sm:%s6120] %v6131
                %v6133 = vld [vmem:[%s6129 + $0x8] sm:%s6120]
                %6134 = vst [vmem:[%s6130 + $0x8] sm:%s6120] %v6133
                %v6135 = vld [vmem:[%s6129 + $0x10] sm:%s6120]
                %6136 = vst [vmem:[%s6130 + $0x10] sm:%s6120] %v6135
                %v6137 = vld [vmem:[%s6129 + $0x18] sm:%s6120]
                %6138 = vst [vmem:[%s6130 + $0x18] sm:%s6120] %v6137
                %v6139 = vld [vmem:[%s6129 + $0x20] sm:%s6120]
                %6140 = vst [vmem:[%s6130 + $0x20] sm:%s6120] %v6139
                %v6141 = vld [vmem:[%s6129 + $0x28] sm:%s6120]
                %6142 = vst [vmem:[%s6130 + $0x28] sm:%s6120] %v6141
                %v6143 = vld [vmem:[%s6129 + $0x30] sm:%s6120]
                %6144 = vst [vmem:[%s6130 + $0x30] sm:%s6120] %v6143
                %v6145 = vld [vmem:[%s6129 + $0x38] sm:%s6120]
                %6146 = vst [vmem:[%s6130 + $0x38] sm:%s6120] %v6145
                %v6147 = vld [vmem:[%s6129 + $0x40] sm:%s6120]
                %6148 = vst [vmem:[%s6130 + $0x40] sm:%s6120] %v6147
                %v6149 = vld [vmem:[%s6129 + $0x48] sm:%s6120]
                %6150 = vst [vmem:[%s6130 + $0x48] sm:%s6120] %v6149
                %v6151 = vld [vmem:[%s6129 + $0x50] sm:%s6120]
                %6152 = vst [vmem:[%s6130 + $0x50] sm:%s6120] %v6151
                %v6153 = vld [vmem:[%s6129 + $0x58] sm:%s6120]
                %6154 = vst [vmem:[%s6130 + $0x58] sm:%s6120] %v6153
                %v6155 = vld [vmem:[%s6129 + $0x60] sm:%s6120]
                %6156 = vst [vmem:[%s6130 + $0x60] sm:%s6120] %v6155
                %v6157 = vld [vmem:[%s6129 + $0x68] sm:%s6120]
                %6158 = vst [vmem:[%s6130 + $0x68] sm:%s6120] %v6157
                %v6159 = vld [vmem:[%s6129 + $0x70] sm:%s6120]
                %6160 = vst [vmem:[%s6130 + $0x70] sm:%s6120] %v6159
                %v6161 = vld [vmem:[%s6129 + $0x78] sm:%s6120]
                %6162 = vst [vmem:[%s6130 + $0x78] sm:%s6120] %v6161
                %v6163 = vld [vmem:[%s6129 + $0x80] sm:%s6120]
                %6164 = vst [vmem:[%s6130 + $0x80] sm:%s6120] %v6163
                %v6165 = vld [vmem:[%s6129 + $0x88] sm:%s6120]
                %6166 = vst [vmem:[%s6130 + $0x88] sm:%s6120] %v6165
                %v6167 = vld [vmem:[%s6129 + $0x90] sm:%s6120]
                %6168 = vst [vmem:[%s6130 + $0x90] sm:%s6120] %v6167
                %v6169 = vld [vmem:[%s6129 + $0x98] sm:%s6120]
                %6170 = vst [vmem:[%s6130 + $0x98] sm:%s6120] %v6169
                %v6171 = vld [vmem:[%s6129 + $0xa0] sm:%s6120]
                %6172 = vst [vmem:[%s6130 + $0xa0] sm:%s6120] %v6171
                %v6173 = vld [vmem:[%s6129 + $0xa8] sm:%s6120]
                %6174 = vst [vmem:[%s6130 + $0xa8] sm:%s6120] %v6173
                %v6175 = vld [vmem:[%s6129 + $0xb0] sm:%s6120]
                %6176 = vst [vmem:[%s6130 + $0xb0] sm:%s6120] %v6175
                %v6177 = vld [vmem:[%s6129 + $0xb8] sm:%s6120]
                %6178 = vst [vmem:[%s6130 + $0xb8] sm:%s6120] %v6177
                %v6179 = vld [vmem:[%s6129 + $0xc0] sm:%s6120]
                %6180 = vst [vmem:[%s6130 + $0xc0] sm:%s6120] %v6179
                %v6181 = vld [vmem:[%s6129 + $0xc8] sm:%s6120]
                %6182 = vst [vmem:[%s6130 + $0xc8] sm:%s6120] %v6181
                %v6183 = vld [vmem:[%s6129 + $0xd0] sm:%s6120]
                %6184 = vst [vmem:[%s6130 + $0xd0] sm:%s6120] %v6183
                %v6185 = vld [vmem:[%s6129 + $0xd8] sm:%s6120]
                %6186 = vst [vmem:[%s6130 + $0xd8] sm:%s6120] %v6185
                %v6187 = vld [vmem:[%s6129 + $0xe0] sm:%s6120]
                %6188 = vst [vmem:[%s6130 + $0xe0] sm:%s6120] %v6187
                %v6189 = vld [vmem:[%s6129 + $0xe8] sm:%s6120]
                %6190 = vst [vmem:[%s6130 + $0xe8] sm:%s6120] %v6189
                %v6191 = vld [vmem:[%s6129 + $0xf0] sm:%s6120]
                %6192 = vst [vmem:[%s6130 + $0xf0] sm:%s6120] %v6191
                %v6193 = vld [vmem:[%s6129 + $0xf8] sm:%s6120]
                %6194 = vst [vmem:[%s6130 + $0xf8] sm:%s6120] %v6193
                %s6195 = sadd.s32 1, %s6128
                %p6196 = scmp.ge.s32.totalorder %s6195, %s6121
                %s6197 = scalar_select %p6196, 0, %s6195
                %s6198 = smul.u32 %s6197, 256
                %s6199 = smul.u32 %s6197, 256
                %s6200 = scalar_lea.vmem %s6100, %s6198 [#allocation2]
                %s6201 = scalar_lea.vmem %s6111, %s6199
              $region53: #{tpu_custom_call.1} parent=47 // loop_footer
                %s6125 = sadd.s32 %s6123, 1
              $region54: #{tpu_custom_call.1} parent=47 // loop_footer_branch
                %6122 = sbr.rel target = $region50
              $region55: #{tpu_custom_call.1} parent=47 // loop_exit
                _
              %s6202 = sshrl.u32 %s6107, 5
              %s6203 = sand.u32 %s6107, 31
              %s6204 = smul.u32 %s6202, 32
              %s6205 = smul.u32 8, %s6204
              %s6206 = scalar_lea.vmem %s6100, %s6205 [#allocation2]
              %s6207 = smul.u32 8, %s6204
              %s6208 = scalar_lea.vmem %s6111, %s6207
              // While loop
              $region56: #{tpu_custom_call.1} parent=47 // loop_pre_header
                _
              $region57: #{tpu_custom_call.1} parent=47 // loop_header
                %s6210 = sphi 0, %s6212
                %p6211 = scmp.ge.s32.totalorder %s6210, %s6203
                %s6215 = sphi 0, %s6222
                %s6216 = sphi %s6206, %s6225
                %s6217 = sphi %s6208, %s6226
              $region58: #{tpu_custom_call.1} parent=47 // loop_header_branch
                %6214 = sbr.rel (%p6211) target = $region62
              $region59: #{tpu_custom_call.1} parent=47 // loop_body
                %v6218 = vld [vmem:[%s6216] sm:%s6120]
                %6219 = vst [vmem:[%s6217] sm:%s6120] %v6218
                %s6220 = sadd.s32 1, %s6215
                %p6221 = scmp.ge.s32.totalorder %s6220, %s6203
                %s6222 = scalar_select %p6221, 0, %s6220
                %s6223 = smul.u32 %s6222, 8
                %s6224 = smul.u32 %s6222, 8
                %s6225 = scalar_lea.vmem %s6206, %s6223 [#allocation2]
                %s6226 = scalar_lea.vmem %s6208, %s6224
              $region60: #{tpu_custom_call.1} parent=47 // loop_footer
                %s6212 = sadd.s32 %s6210, 1
              $region61: #{tpu_custom_call.1} parent=47 // loop_footer_branch
                %6209 = sbr.rel target = $region57
              $region62: #{tpu_custom_call.1} parent=47 // loop_exit
                _
            $region48: #{tpu_custom_call.1} parent=39 // pred_fallthru
              _
          $region40: #{tpu_custom_call.1} parent=35 // pred_fallthru
            _
          %6337 = vnop
        $region36: #{tpu_custom_call.1} parent=31 // pred_fallthru
          _
      $region32: #{tpu_custom_call.1} parent=5 // pred_fallthru
        _
      %p6338 = scmp.le.s32.totalorder 2, %s9
      // Predicated region
      $region85: #{tpu_custom_call.1} parent=5 // pred_check
        %p6339 = pneg %p6338
      $region86: #{tpu_custom_call.1} parent=5 // pred_check_branch
        %6341 = sbr.rel (%p6339) target = $region88
      $region87: #{tpu_custom_call.1} parent=5 // pred_region
        %s6342 = ssub.s32 %s9, 2
        // Predicated region
        $region89: #{tpu_custom_call.1} parent=87 // pred_check
          %p6343 = pneg %p111
        $region90: #{tpu_custom_call.1} parent=87 // pred_check_branch
          %6345 = sbr.rel (%p6343) target = $region92
        $region91: #{tpu_custom_call.1} parent=87 // pred_region
          %s6346 = sand.u32 %s96, 1
          %s6347 = sand.u32 %s96, 1
          %s6348 = smul.addr %s6347, 1376
          %s6349 = scalar_lea.vmem [#allocation2], %s6348
        $region92: #{tpu_custom_call.1} parent=87 // pred_fallthru
          _
      $region88: #{tpu_custom_call.1} parent=5 // pred_fallthru
        _
    $region6: #{tpu_custom_call.1} parent=1 // loop_footer
      %s13 = sadd.s32 1, %s9
    $region7: #{tpu_custom_call.1} parent=1 // loop_footer_branch
      %8 = sbr.rel target = $region3
    $region8: #{tpu_custom_call.1} parent=1 // loop_exit
      _

</llo_original>
